<compile_context>
chip_gen: v5e
topology: v5e:2x2
jax: 0.10.0
libtpu: 0.0.40
codegen_flags: <defaults>
</compile_context>

<pallas_src>
import jax
import jax.numpy as jnp
from jax.experimental import pallas as pl
from jax.experimental.pallas import tpu as pltpu

N_LAYERS = 12      # 6 encoder + 6 decoder linear layers
LANE = 128         # hidden widths are zero-padded up to a multiple of this


def _round_up(n, m):
    return ((n + m - 1) // m) * m


# ----------------------------------------------------------------------------
# Kernel: the full 12-layer chain on one (TILE_B, *) activation tile, split
# into independent row sub-chains so consecutive matmuls are not serially
# dependent.  refs = (w0..w11, b0..b11, out_ref); everything lives in VMEM.
# ----------------------------------------------------------------------------
def _mlp_kernel(x_ref, *refs):
    w_refs = refs[:N_LAYERS]
    b_refs = refs[N_LAYERS:2 * N_LAYERS]
    out_ref = refs[2 * N_LAYERS]

    tile_b = x_ref.shape[0]
    n_chains = 2 if (tile_b >= 16 and tile_b % 16 == 0) else 1
    rows = tile_b // n_chains

    # Independent row halves -> LLO scheduler can overlap chain 1's vmatmul
    # issue with chain 0's MXU result drain (hides the 12-deep latency chain).
    hs = [x_ref[c * rows:(c + 1) * rows, :].astype(jnp.float32)
          for c in range(n_chains)]

    for i in range(N_LAYERS):                            # statically unrolled
        w = w_refs[i][...]                               # bf16, MXU-native
        b = b_refs[i][...].astype(jnp.float32)           # (1, out) bias, f32 add
        nxt = []
        for h in hs:
            acc = jnp.dot(h.astype(jnp.bfloat16), w,
                          preferred_element_type=jnp.float32)
            acc = acc + b
            if i != N_LAYERS - 1:                        # no ReLU after last layer
                acc = jnp.maximum(acc, 0.0)
            nxt.append(acc)
        hs = nxt

    for c in range(n_chains):
        out_ref[c * rows:(c + 1) * rows, :] = hs[c].astype(out_ref.dtype)


# ----------------------------------------------------------------------------
# Parameter construction (matches nn.Linear default init shape-wise; f32
# "master" params, bf16 padded copies fed to the kernel).
# ----------------------------------------------------------------------------
def make_params(key, input_size, hidden_dim, dtype=jnp.float32):
    assert hidden_dim % 32 == 0, "hidden_dim must be divisible by 32"
    enc_dims = [input_size, hidden_dim, hidden_dim // 2, hidden_dim // 4,
                hidden_dim // 8, hidden_dim // 16, hidden_dim // 32]
    dims = enc_dims + enc_dims[-2::-1]                   # 13 entries -> 12 layers

    ws, bs = [], []
    for i in range(N_LAYERS):
        fan_in, fan_out = dims[i], dims[i + 1]
        key, kw, kb = jax.random.split(key, 3)
        bound = 1.0 / jnp.sqrt(jnp.float32(fan_in))
        ws.append(jax.random.uniform(kw, (fan_in, fan_out), dtype, -bound, bound))
        bs.append(jax.random.uniform(kb, (1, fan_out), dtype, -bound, bound))
    return ws, bs


def pad_params(ws, bs, lane=LANE, dtype=jnp.bfloat16):
    """Zero-pad hidden widths to a multiple of `lane`; store bf16 for the MXU.

    Layer 0 keeps its raw fan_in (= input_size) so the input x never needs
    lane-padding; all other in/out widths are padded to 128 so the activation
    chain and the output block stay lane-dense.
    """
    ws_p, bs_p = [], []
    for i, (w, b) in enumerate(zip(ws, bs)):
        fi, fo = w.shape
        fi_p = fi if i == 0 else _round_up(fi, lane)
        fo_p = _round_up(fo, lane)
        ws_p.append(jnp.zeros((fi_p, fo_p), dtype).at[:fi, :fo].set(w.astype(dtype)))
        bs_p.append(jnp.zeros((1, fo_p), dtype).at[:, :fo].set(b.astype(dtype)))
    return ws_p, bs_p


# ----------------------------------------------------------------------------
# Batch-tile selection: 8-granular divisor of the rounded batch, capped so the
# "parallel" grid has >=2 steps when possible (feeds both v7x TensorCores).
# ----------------------------------------------------------------------------
def _pick_tile_b(b_pad, requested):
    t = max(8, min(_round_up(requested, 8), b_pad))
    t = (t // 8) * 8
    while t > 8 and b_pad % t != 0:
        t -= 8
    if b_pad % t != 0:
        t = 8
    if b_pad // t < 2 and b_pad % 16 == 0:
        t = b_pad // 2
    return t


# ----------------------------------------------------------------------------
# Wrapper: 1-D batch grid; weights/biases use constant index maps so they stay
# VMEM-resident across the grid (never re-DMA'd per step).
# ----------------------------------------------------------------------------
def vanilla_model_forward(x, ws_pad, bs_pad, *, input_size, tile_b=256):
    batch, feat = x.shape
    assert feat == ws_pad[0].shape[0], "x width must match layer-0 fan_in"
    f_out_pad = ws_pad[-1].shape[1]

    b_pad = _round_up(batch, 8)
    tile_b = _pick_tile_b(b_pad, tile_b)

    if b_pad != batch:                                   # rows only, no lane padding
        x = jnp.zeros((b_pad, feat), x.dtype).at[:batch].set(x)

    # x block: last dim == full array dim (satisfies the (8,128) rule).
    in_specs = [pl.BlockSpec((tile_b, feat), lambda i: (i, 0))]
    in_specs += [pl.BlockSpec(w.shape, lambda i: (0, 0)) for w in ws_pad]
    in_specs += [pl.BlockSpec(b.shape, lambda i: (0, 0)) for b in bs_pad]
    out_spec = pl.BlockSpec((tile_b, f_out_pad), lambda i: (i, 0))

    out_p = pl.pallas_call(
        _mlp_kernel,
        out_shape=jax.ShapeDtypeStruct((b_pad, f_out_pad), x.dtype),
        grid=(b_pad // tile_b,),
        in_specs=in_specs,
        out_specs=out_spec,
        compiler_params=pltpu.CompilerParams(
            dimension_semantics=("parallel",)),          # 2 TCs on v7x megacore
    )(x, *ws_pad, *bs_pad)

    return out_p[:batch, :input_size]


# ----------------------------------------------------------------------------
# Pure-JAX reference.  Mirrors the kernel's bf16-MXU numerics: operands are
# rounded to bf16, products accumulated in f32 (so tolerances stay tight).
# ----------------------------------------------------------------------------
def _reference_forward(x, ws, bs):
    h = x
    for i in range(N_LAYERS):
        hq = h.astype(jnp.bfloat16).astype(jnp.float32)
        wq = ws[i].astype(jnp.bfloat16).astype(jnp.float32)
        bq = bs[i].astype(jnp.bfloat16).astype(jnp.float32)
        h = hq @ wq + bq
        if i != N_LAYERS - 1:
            h = jnp.maximum(h, 0.0)
    return h


if __name__ == "__main__":
    input_size = 32
    hidden_dim = 64        # hidden_dim // 32 == 2 (bottleneck width)
    batch = 512            # 2 grid steps at tile_b=256

    key = jax.random.PRNGKey(0)
    key, kx = jax.random.split(key)
    x = jax.random.normal(kx, (batch, input_size), jnp.float32)

    ws, bs = make_params(key, input_size, hidden_dim)
    ws_p, bs_p = pad_params(ws, bs)

    fwd = jax.jit(lambda xx: vanilla_model_forward(
        xx, ws_p, bs_p, input_size=input_size, tile_b=256))
    out = jax.block_until_ready(fwd(x))

    ref = _reference_forward(x, ws, bs)
    assert out.shape == (batch, input_size)
    # bf16 weights/activations move results at the ~1e-2 level vs pure f32;
    # the reference uses the same bf16 rounding, so this tolerance is generous.
    assert jnp.allclose(out, ref, atol=1e-2, rtol=1e-2), "mismatch vs JAX reference"

    print("KERNEL_OK")
</pallas_src>

<mosaic_0001>
module attributes {stable_mosaic.version = 11 : i64} {
  func.func @_mlp_kernel(%arg0: i32, %arg1: memref<256x32xf32, #tpu.memory_space<vmem>>, %arg2: memref<32x128xbf16, #tpu.memory_space<vmem>>, %arg3: memref<128x128xbf16, #tpu.memory_space<vmem>>, %arg4: memref<128x128xbf16, #tpu.memory_space<vmem>>, %arg5: memref<128x128xbf16, #tpu.memory_space<vmem>>, %arg6: memref<128x128xbf16, #tpu.memory_space<vmem>>, %arg7: memref<128x128xbf16, #tpu.memory_space<vmem>>, %arg8: memref<128x128xbf16, #tpu.memory_space<vmem>>, %arg9: memref<128x128xbf16, #tpu.memory_space<vmem>>, %arg10: memref<128x128xbf16, #tpu.memory_space<vmem>>, %arg11: memref<128x128xbf16, #tpu.memory_space<vmem>>, %arg12: memref<128x128xbf16, #tpu.memory_space<vmem>>, %arg13: memref<128x128xbf16, #tpu.memory_space<vmem>>, %arg14: memref<1x128xbf16, #tpu.memory_space<vmem>>, %arg15: memref<1x128xbf16, #tpu.memory_space<vmem>>, %arg16: memref<1x128xbf16, #tpu.memory_space<vmem>>, %arg17: memref<1x128xbf16, #tpu.memory_space<vmem>>, %arg18: memref<1x128xbf16, #tpu.memory_space<vmem>>, %arg19: memref<1x128xbf16, #tpu.memory_space<vmem>>, %arg20: memref<1x128xbf16, #tpu.memory_space<vmem>>, %arg21: memref<1x128xbf16, #tpu.memory_space<vmem>>, %arg22: memref<1x128xbf16, #tpu.memory_space<vmem>>, %arg23: memref<1x128xbf16, #tpu.memory_space<vmem>>, %arg24: memref<1x128xbf16, #tpu.memory_space<vmem>>, %arg25: memref<1x128xbf16, #tpu.memory_space<vmem>>, %arg26: memref<256x128xf32, #tpu.memory_space<vmem>>) attributes {dimension_semantics = [#tpu.dimension_semantics<parallel>], iteration_bounds = array<i64: 2>, scalar_prefetch = 0 : i64, scratch_operands = 0 : i64, tpu.core_type = #tpu.core_type<tc>, window_params = [{transform_indices = @transform_0, window_bounds = array<i64: 256, 32>}, {pipeline_mode = #tpu.pipeline_mode<synchronous>, transform_indices = @transform_1, window_bounds = array<i64: 32, 128>}, {pipeline_mode = #tpu.pipeline_mode<synchronous>, transform_indices = @transform_2, window_bounds = array<i64: 128, 128>}, {pipeline_mode = #tpu.pipeline_mode<synchronous>, transform_indices = @transform_3, window_bounds = array<i64: 128, 128>}, {pipeline_mode = #tpu.pipeline_mode<synchronous>, transform_indices = @transform_4, window_bounds = array<i64: 128, 128>}, {pipeline_mode = #tpu.pipeline_mode<synchronous>, transform_indices = @transform_5, window_bounds = array<i64: 128, 128>}, {pipeline_mode = #tpu.pipeline_mode<synchronous>, transform_indices = @transform_6, window_bounds = array<i64: 128, 128>}, {pipeline_mode = #tpu.pipeline_mode<synchronous>, transform_indices = @transform_7, window_bounds = array<i64: 128, 128>}, {pipeline_mode = #tpu.pipeline_mode<synchronous>, transform_indices = @transform_8, window_bounds = array<i64: 128, 128>}, {pipeline_mode = #tpu.pipeline_mode<synchronous>, transform_indices = @transform_9, window_bounds = array<i64: 128, 128>}, {pipeline_mode = #tpu.pipeline_mode<synchronous>, transform_indices = @transform_10, window_bounds = array<i64: 128, 128>}, {pipeline_mode = #tpu.pipeline_mode<synchronous>, transform_indices = @transform_11, window_bounds = array<i64: 128, 128>}, {pipeline_mode = #tpu.pipeline_mode<synchronous>, transform_indices = @transform_12, window_bounds = array<i64: 128, 128>}, {pipeline_mode = #tpu.pipeline_mode<synchronous>, transform_indices = @transform_13, window_bounds = array<i64: 1, 128>}, {pipeline_mode = #tpu.pipeline_mode<synchronous>, transform_indices = @transform_14, window_bounds = array<i64: 1, 128>}, {pipeline_mode = #tpu.pipeline_mode<synchronous>, transform_indices = @transform_15, window_bounds = array<i64: 1, 128>}, {pipeline_mode = #tpu.pipeline_mode<synchronous>, transform_indices = @transform_16, window_bounds = array<i64: 1, 128>}, {pipeline_mode = #tpu.pipeline_mode<synchronous>, transform_indices = @transform_17, window_bounds = array<i64: 1, 128>}, {pipeline_mode = #tpu.pipeline_mode<synchronous>, transform_indices = @transform_18, window_bounds = array<i64: 1, 128>}, {pipeline_mode = #tpu.pipeline_mode<synchronous>, transform_indices = @transform_19, window_bounds = array<i64: 1, 128>}, {pipeline_mode = #tpu.pipeline_mode<synchronous>, transform_indices = @transform_20, window_bounds = array<i64: 1, 128>}, {pipeline_mode = #tpu.pipeline_mode<synchronous>, transform_indices = @transform_21, window_bounds = array<i64: 1, 128>}, {pipeline_mode = #tpu.pipeline_mode<synchronous>, transform_indices = @transform_22, window_bounds = array<i64: 1, 128>}, {pipeline_mode = #tpu.pipeline_mode<synchronous>, transform_indices = @transform_23, window_bounds = array<i64: 1, 128>}, {pipeline_mode = #tpu.pipeline_mode<synchronous>, transform_indices = @transform_24, window_bounds = array<i64: 1, 128>}, {transform_indices = @transform_25, window_bounds = array<i64: 256, 128>}]} {
    %c0 = arith.constant 0 : index
    %c0_0 = arith.constant 0 : index
    %0 = vector.load %arg1[%c0, %c0_0] : memref<256x32xf32, #tpu.memory_space<vmem>>, vector<128x32xf32>
    %c128 = arith.constant 128 : index
    %c0_1 = arith.constant 0 : index
    %1 = vector.load %arg1[%c128, %c0_1] : memref<256x32xf32, #tpu.memory_space<vmem>>, vector<128x32xf32>
    %c0_2 = arith.constant 0 : index
    %c0_3 = arith.constant 0 : index
    %2 = vector.load %arg2[%c0_2, %c0_3] : memref<32x128xbf16, #tpu.memory_space<vmem>>, vector<32x128xbf16>
    %c0_4 = arith.constant 0 : index
    %c0_5 = arith.constant 0 : index
    %3 = vector.load %arg14[%c0_4, %c0_5] : memref<1x128xbf16, #tpu.memory_space<vmem>>, vector<1x128xbf16>
    %4 = arith.extf %3 : vector<1x128xbf16> to vector<1x128xf32>
    %5 = arith.truncf %0 : vector<128x32xf32> to vector<128x32xbf16>
    %cst = arith.constant dense<0.000000e+00> : vector<128x128xf32>
    %6 = tpu.matmul %5, %2, %cst {dimension_numbers = #tpu.dot_dimension_numbers<[1], [0], [0], [1], [0, 0, 1, 1], [], []>} : vector<128x32xbf16>, vector<32x128xbf16>, vector<128x128xf32> -> vector<128x128xf32>
    %7 = vector.broadcast %4 : vector<1x128xf32> to vector<128x128xf32>
    %8 = arith.addf %6, %7 : vector<128x128xf32>
    %cst_6 = arith.constant 0.000000e+00 : f32
    %9 = vector.broadcast %cst_6 : f32 to vector<128x128xf32>
    %10 = arith.maximumf %8, %9 : vector<128x128xf32>
    %11 = arith.truncf %1 : vector<128x32xf32> to vector<128x32xbf16>
    %cst_7 = arith.constant dense<0.000000e+00> : vector<128x128xf32>
    %12 = tpu.matmul %11, %2, %cst_7 {dimension_numbers = #tpu.dot_dimension_numbers<[1], [0], [0], [1], [0, 0, 1, 1], [], []>} : vector<128x32xbf16>, vector<32x128xbf16>, vector<128x128xf32> -> vector<128x128xf32>
    %13 = vector.broadcast %4 : vector<1x128xf32> to vector<128x128xf32>
    %14 = arith.addf %12, %13 : vector<128x128xf32>
    %cst_8 = arith.constant 0.000000e+00 : f32
    %15 = vector.broadcast %cst_8 : f32 to vector<128x128xf32>
    %16 = arith.maximumf %14, %15 : vector<128x128xf32>
    %c0_9 = arith.constant 0 : index
    %c0_10 = arith.constant 0 : index
    %17 = vector.load %arg3[%c0_9, %c0_10] : memref<128x128xbf16, #tpu.memory_space<vmem>>, vector<128x128xbf16>
    %c0_11 = arith.constant 0 : index
    %c0_12 = arith.constant 0 : index
    %18 = vector.load %arg15[%c0_11, %c0_12] : memref<1x128xbf16, #tpu.memory_space<vmem>>, vector<1x128xbf16>
    %19 = arith.extf %18 : vector<1x128xbf16> to vector<1x128xf32>
    %20 = arith.truncf %10 : vector<128x128xf32> to vector<128x128xbf16>
    %cst_13 = arith.constant dense<0.000000e+00> : vector<128x128xf32>
    %21 = tpu.matmul %20, %17, %cst_13 {dimension_numbers = #tpu.dot_dimension_numbers<[1], [0], [0], [1], [0, 0, 1, 1], [], []>} : vector<128x128xbf16>, vector<128x128xbf16>, vector<128x128xf32> -> vector<128x128xf32>
    %22 = vector.broadcast %19 : vector<1x128xf32> to vector<128x128xf32>
    %23 = arith.addf %21, %22 : vector<128x128xf32>
    %cst_14 = arith.constant 0.000000e+00 : f32
    %24 = vector.broadcast %cst_14 : f32 to vector<128x128xf32>
    %25 = arith.maximumf %23, %24 : vector<128x128xf32>
    %26 = arith.truncf %16 : vector<128x128xf32> to vector<128x128xbf16>
    %cst_15 = arith.constant dense<0.000000e+00> : vector<128x128xf32>
    %27 = tpu.matmul %26, %17, %cst_15 {dimension_numbers = #tpu.dot_dimension_numbers<[1], [0], [0], [1], [0, 0, 1, 1], [], []>} : vector<128x128xbf16>, vector<128x128xbf16>, vector<128x128xf32> -> vector<128x128xf32>
    %28 = vector.broadcast %19 : vector<1x128xf32> to vector<128x128xf32>
    %29 = arith.addf %27, %28 : vector<128x128xf32>
    %cst_16 = arith.constant 0.000000e+00 : f32
    %30 = vector.broadcast %cst_16 : f32 to vector<128x128xf32>
    %31 = arith.maximumf %29, %30 : vector<128x128xf32>
    %c0_17 = arith.constant 0 : index
    %c0_18 = arith.constant 0 : index
    %32 = vector.load %arg4[%c0_17, %c0_18] : memref<128x128xbf16, #tpu.memory_space<vmem>>, vector<128x128xbf16>
    %c0_19 = arith.constant 0 : index
    %c0_20 = arith.constant 0 : index
    %33 = vector.load %arg16[%c0_19, %c0_20] : memref<1x128xbf16, #tpu.memory_space<vmem>>, vector<1x128xbf16>
    %34 = arith.extf %33 : vector<1x128xbf16> to vector<1x128xf32>
    %35 = arith.truncf %25 : vector<128x128xf32> to vector<128x128xbf16>
    %cst_21 = arith.constant dense<0.000000e+00> : vector<128x128xf32>
    %36 = tpu.matmul %35, %32, %cst_21 {dimension_numbers = #tpu.dot_dimension_numbers<[1], [0], [0], [1], [0, 0, 1, 1], [], []>} : vector<128x128xbf16>, vector<128x128xbf16>, vector<128x128xf32> -> vector<128x128xf32>
    %37 = vector.broadcast %34 : vector<1x128xf32> to vector<128x128xf32>
    %38 = arith.addf %36, %37 : vector<128x128xf32>
    %cst_22 = arith.constant 0.000000e+00 : f32
    %39 = vector.broadcast %cst_22 : f32 to vector<128x128xf32>
    %40 = arith.maximumf %38, %39 : vector<128x128xf32>
    %41 = arith.truncf %31 : vector<128x128xf32> to vector<128x128xbf16>
    %cst_23 = arith.constant dense<0.000000e+00> : vector<128x128xf32>
    %42 = tpu.matmul %41, %32, %cst_23 {dimension_numbers = #tpu.dot_dimension_numbers<[1], [0], [0], [1], [0, 0, 1, 1], [], []>} : vector<128x128xbf16>, vector<128x128xbf16>, vector<128x128xf32> -> vector<128x128xf32>
    %43 = vector.broadcast %34 : vector<1x128xf32> to vector<128x128xf32>
    %44 = arith.addf %42, %43 : vector<128x128xf32>
    %cst_24 = arith.constant 0.000000e+00 : f32
    %45 = vector.broadcast %cst_24 : f32 to vector<128x128xf32>
    %46 = arith.maximumf %44, %45 : vector<128x128xf32>
    %c0_25 = arith.constant 0 : index
    %c0_26 = arith.constant 0 : index
    %47 = vector.load %arg5[%c0_25, %c0_26] : memref<128x128xbf16, #tpu.memory_space<vmem>>, vector<128x128xbf16>
    %c0_27 = arith.constant 0 : index
    %c0_28 = arith.constant 0 : index
    %48 = vector.load %arg17[%c0_27, %c0_28] : memref<1x128xbf16, #tpu.memory_space<vmem>>, vector<1x128xbf16>
    %49 = arith.extf %48 : vector<1x128xbf16> to vector<1x128xf32>
    %50 = arith.truncf %40 : vector<128x128xf32> to vector<128x128xbf16>
    %cst_29 = arith.constant dense<0.000000e+00> : vector<128x128xf32>
    %51 = tpu.matmul %50, %47, %cst_29 {dimension_numbers = #tpu.dot_dimension_numbers<[1], [0], [0], [1], [0, 0, 1, 1], [], []>} : vector<128x128xbf16>, vector<128x128xbf16>, vector<128x128xf32> -> vector<128x128xf32>
    %52 = vector.broadcast %49 : vector<1x128xf32> to vector<128x128xf32>
    %53 = arith.addf %51, %52 : vector<128x128xf32>
    %cst_30 = arith.constant 0.000000e+00 : f32
    %54 = vector.broadcast %cst_30 : f32 to vector<128x128xf32>
    %55 = arith.maximumf %53, %54 : vector<128x128xf32>
    %56 = arith.truncf %46 : vector<128x128xf32> to vector<128x128xbf16>
    %cst_31 = arith.constant dense<0.000000e+00> : vector<128x128xf32>
    %57 = tpu.matmul %56, %47, %cst_31 {dimension_numbers = #tpu.dot_dimension_numbers<[1], [0], [0], [1], [0, 0, 1, 1], [], []>} : vector<128x128xbf16>, vector<128x128xbf16>, vector<128x128xf32> -> vector<128x128xf32>
    %58 = vector.broadcast %49 : vector<1x128xf32> to vector<128x128xf32>
    %59 = arith.addf %57, %58 : vector<128x128xf32>
    %cst_32 = arith.constant 0.000000e+00 : f32
    %60 = vector.broadcast %cst_32 : f32 to vector<128x128xf32>
    %61 = arith.maximumf %59, %60 : vector<128x128xf32>
    %c0_33 = arith.constant 0 : index
    %c0_34 = arith.constant 0 : index
    %62 = vector.load %arg6[%c0_33, %c0_34] : memref<128x128xbf16, #tpu.memory_space<vmem>>, vector<128x128xbf16>
    %c0_35 = arith.constant 0 : index
    %c0_36 = arith.constant 0 : index
    %63 = vector.load %arg18[%c0_35, %c0_36] : memref<1x128xbf16, #tpu.memory_space<vmem>>, vector<1x128xbf16>
    %64 = arith.extf %63 : vector<1x128xbf16> to vector<1x128xf32>
    %65 = arith.truncf %55 : vector<128x128xf32> to vector<128x128xbf16>
    %cst_37 = arith.constant dense<0.000000e+00> : vector<128x128xf32>
    %66 = tpu.matmul %65, %62, %cst_37 {dimension_numbers = #tpu.dot_dimension_numbers<[1], [0], [0], [1], [0, 0, 1, 1], [], []>} : vector<128x128xbf16>, vector<128x128xbf16>, vector<128x128xf32> -> vector<128x128xf32>
    %67 = vector.broadcast %64 : vector<1x128xf32> to vector<128x128xf32>
    %68 = arith.addf %66, %67 : vector<128x128xf32>
    %cst_38 = arith.constant 0.000000e+00 : f32
    %69 = vector.broadcast %cst_38 : f32 to vector<128x128xf32>
    %70 = arith.maximumf %68, %69 : vector<128x128xf32>
    %71 = arith.truncf %61 : vector<128x128xf32> to vector<128x128xbf16>
    %cst_39 = arith.constant dense<0.000000e+00> : vector<128x128xf32>
    %72 = tpu.matmul %71, %62, %cst_39 {dimension_numbers = #tpu.dot_dimension_numbers<[1], [0], [0], [1], [0, 0, 1, 1], [], []>} : vector<128x128xbf16>, vector<128x128xbf16>, vector<128x128xf32> -> vector<128x128xf32>
    %73 = vector.broadcast %64 : vector<1x128xf32> to vector<128x128xf32>
    %74 = arith.addf %72, %73 : vector<128x128xf32>
    %cst_40 = arith.constant 0.000000e+00 : f32
    %75 = vector.broadcast %cst_40 : f32 to vector<128x128xf32>
    %76 = arith.maximumf %74, %75 : vector<128x128xf32>
    %c0_41 = arith.constant 0 : index
    %c0_42 = arith.constant 0 : index
    %77 = vector.load %arg7[%c0_41, %c0_42] : memref<128x128xbf16, #tpu.memory_space<vmem>>, vector<128x128xbf16>
    %c0_43 = arith.constant 0 : index
    %c0_44 = arith.constant 0 : index
    %78 = vector.load %arg19[%c0_43, %c0_44] : memref<1x128xbf16, #tpu.memory_space<vmem>>, vector<1x128xbf16>
    %79 = arith.extf %78 : vector<1x128xbf16> to vector<1x128xf32>
    %80 = arith.truncf %70 : vector<128x128xf32> to vector<128x128xbf16>
    %cst_45 = arith.constant dense<0.000000e+00> : vector<128x128xf32>
    %81 = tpu.matmul %80, %77, %cst_45 {dimension_numbers = #tpu.dot_dimension_numbers<[1], [0], [0], [1], [0, 0, 1, 1], [], []>} : vector<128x128xbf16>, vector<128x128xbf16>, vector<128x128xf32> -> vector<128x128xf32>
    %82 = vector.broadcast %79 : vector<1x128xf32> to vector<128x128xf32>
    %83 = arith.addf %81, %82 : vector<128x128xf32>
    %cst_46 = arith.constant 0.000000e+00 : f32
    %84 = vector.broadcast %cst_46 : f32 to vector<128x128xf32>
    %85 = arith.maximumf %83, %84 : vector<128x128xf32>
    %86 = arith.truncf %76 : vector<128x128xf32> to vector<128x128xbf16>
    %cst_47 = arith.constant dense<0.000000e+00> : vector<128x128xf32>
    %87 = tpu.matmul %86, %77, %cst_47 {dimension_numbers = #tpu.dot_dimension_numbers<[1], [0], [0], [1], [0, 0, 1, 1], [], []>} : vector<128x128xbf16>, vector<128x128xbf16>, vector<128x128xf32> -> vector<128x128xf32>
    %88 = vector.broadcast %79 : vector<1x128xf32> to vector<128x128xf32>
    %89 = arith.addf %87, %88 : vector<128x128xf32>
    %cst_48 = arith.constant 0.000000e+00 : f32
    %90 = vector.broadcast %cst_48 : f32 to vector<128x128xf32>
    %91 = arith.maximumf %89, %90 : vector<128x128xf32>
    %c0_49 = arith.constant 0 : index
    %c0_50 = arith.constant 0 : index
    %92 = vector.load %arg8[%c0_49, %c0_50] : memref<128x128xbf16, #tpu.memory_space<vmem>>, vector<128x128xbf16>
    %c0_51 = arith.constant 0 : index
    %c0_52 = arith.constant 0 : index
    %93 = vector.load %arg20[%c0_51, %c0_52] : memref<1x128xbf16, #tpu.memory_space<vmem>>, vector<1x128xbf16>
    %94 = arith.extf %93 : vector<1x128xbf16> to vector<1x128xf32>
    %95 = arith.truncf %85 : vector<128x128xf32> to vector<128x128xbf16>
    %cst_53 = arith.constant dense<0.000000e+00> : vector<128x128xf32>
    %96 = tpu.matmul %95, %92, %cst_53 {dimension_numbers = #tpu.dot_dimension_numbers<[1], [0], [0], [1], [0, 0, 1, 1], [], []>} : vector<128x128xbf16>, vector<128x128xbf16>, vector<128x128xf32> -> vector<128x128xf32>
    %97 = vector.broadcast %94 : vector<1x128xf32> to vector<128x128xf32>
    %98 = arith.addf %96, %97 : vector<128x128xf32>
    %cst_54 = arith.constant 0.000000e+00 : f32
    %99 = vector.broadcast %cst_54 : f32 to vector<128x128xf32>
    %100 = arith.maximumf %98, %99 : vector<128x128xf32>
    %101 = arith.truncf %91 : vector<128x128xf32> to vector<128x128xbf16>
    %cst_55 = arith.constant dense<0.000000e+00> : vector<128x128xf32>
    %102 = tpu.matmul %101, %92, %cst_55 {dimension_numbers = #tpu.dot_dimension_numbers<[1], [0], [0], [1], [0, 0, 1, 1], [], []>} : vector<128x128xbf16>, vector<128x128xbf16>, vector<128x128xf32> -> vector<128x128xf32>
    %103 = vector.broadcast %94 : vector<1x128xf32> to vector<128x128xf32>
    %104 = arith.addf %102, %103 : vector<128x128xf32>
    %cst_56 = arith.constant 0.000000e+00 : f32
    %105 = vector.broadcast %cst_56 : f32 to vector<128x128xf32>
    %106 = arith.maximumf %104, %105 : vector<128x128xf32>
    %c0_57 = arith.constant 0 : index
    %c0_58 = arith.constant 0 : index
    %107 = vector.load %arg9[%c0_57, %c0_58] : memref<128x128xbf16, #tpu.memory_space<vmem>>, vector<128x128xbf16>
    %c0_59 = arith.constant 0 : index
    %c0_60 = arith.constant 0 : index
    %108 = vector.load %arg21[%c0_59, %c0_60] : memref<1x128xbf16, #tpu.memory_space<vmem>>, vector<1x128xbf16>
    %109 = arith.extf %108 : vector<1x128xbf16> to vector<1x128xf32>
    %110 = arith.truncf %100 : vector<128x128xf32> to vector<128x128xbf16>
    %cst_61 = arith.constant dense<0.000000e+00> : vector<128x128xf32>
    %111 = tpu.matmul %110, %107, %cst_61 {dimension_numbers = #tpu.dot_dimension_numbers<[1], [0], [0], [1], [0, 0, 1, 1], [], []>} : vector<128x128xbf16>, vector<128x128xbf16>, vector<128x128xf32> -> vector<128x128xf32>
    %112 = vector.broadcast %109 : vector<1x128xf32> to vector<128x128xf32>
    %113 = arith.addf %111, %112 : vector<128x128xf32>
    %cst_62 = arith.constant 0.000000e+00 : f32
    %114 = vector.broadcast %cst_62 : f32 to vector<128x128xf32>
    %115 = arith.maximumf %113, %114 : vector<128x128xf32>
    %116 = arith.truncf %106 : vector<128x128xf32> to vector<128x128xbf16>
    %cst_63 = arith.constant dense<0.000000e+00> : vector<128x128xf32>
    %117 = tpu.matmul %116, %107, %cst_63 {dimension_numbers = #tpu.dot_dimension_numbers<[1], [0], [0], [1], [0, 0, 1, 1], [], []>} : vector<128x128xbf16>, vector<128x128xbf16>, vector<128x128xf32> -> vector<128x128xf32>
    %118 = vector.broadcast %109 : vector<1x128xf32> to vector<128x128xf32>
    %119 = arith.addf %117, %118 : vector<128x128xf32>
    %cst_64 = arith.constant 0.000000e+00 : f32
    %120 = vector.broadcast %cst_64 : f32 to vector<128x128xf32>
    %121 = arith.maximumf %119, %120 : vector<128x128xf32>
    %c0_65 = arith.constant 0 : index
    %c0_66 = arith.constant 0 : index
    %122 = vector.load %arg10[%c0_65, %c0_66] : memref<128x128xbf16, #tpu.memory_space<vmem>>, vector<128x128xbf16>
    %c0_67 = arith.constant 0 : index
    %c0_68 = arith.constant 0 : index
    %123 = vector.load %arg22[%c0_67, %c0_68] : memref<1x128xbf16, #tpu.memory_space<vmem>>, vector<1x128xbf16>
    %124 = arith.extf %123 : vector<1x128xbf16> to vector<1x128xf32>
    %125 = arith.truncf %115 : vector<128x128xf32> to vector<128x128xbf16>
    %cst_69 = arith.constant dense<0.000000e+00> : vector<128x128xf32>
    %126 = tpu.matmul %125, %122, %cst_69 {dimension_numbers = #tpu.dot_dimension_numbers<[1], [0], [0], [1], [0, 0, 1, 1], [], []>} : vector<128x128xbf16>, vector<128x128xbf16>, vector<128x128xf32> -> vector<128x128xf32>
    %127 = vector.broadcast %124 : vector<1x128xf32> to vector<128x128xf32>
    %128 = arith.addf %126, %127 : vector<128x128xf32>
    %cst_70 = arith.constant 0.000000e+00 : f32
    %129 = vector.broadcast %cst_70 : f32 to vector<128x128xf32>
    %130 = arith.maximumf %128, %129 : vector<128x128xf32>
    %131 = arith.truncf %121 : vector<128x128xf32> to vector<128x128xbf16>
    %cst_71 = arith.constant dense<0.000000e+00> : vector<128x128xf32>
    %132 = tpu.matmul %131, %122, %cst_71 {dimension_numbers = #tpu.dot_dimension_numbers<[1], [0], [0], [1], [0, 0, 1, 1], [], []>} : vector<128x128xbf16>, vector<128x128xbf16>, vector<128x128xf32> -> vector<128x128xf32>
    %133 = vector.broadcast %124 : vector<1x128xf32> to vector<128x128xf32>
    %134 = arith.addf %132, %133 : vector<128x128xf32>
    %cst_72 = arith.constant 0.000000e+00 : f32
    %135 = vector.broadcast %cst_72 : f32 to vector<128x128xf32>
    %136 = arith.maximumf %134, %135 : vector<128x128xf32>
    %c0_73 = arith.constant 0 : index
    %c0_74 = arith.constant 0 : index
    %137 = vector.load %arg11[%c0_73, %c0_74] : memref<128x128xbf16, #tpu.memory_space<vmem>>, vector<128x128xbf16>
    %c0_75 = arith.constant 0 : index
    %c0_76 = arith.constant 0 : index
    %138 = vector.load %arg23[%c0_75, %c0_76] : memref<1x128xbf16, #tpu.memory_space<vmem>>, vector<1x128xbf16>
    %139 = arith.extf %138 : vector<1x128xbf16> to vector<1x128xf32>
    %140 = arith.truncf %130 : vector<128x128xf32> to vector<128x128xbf16>
    %cst_77 = arith.constant dense<0.000000e+00> : vector<128x128xf32>
    %141 = tpu.matmul %140, %137, %cst_77 {dimension_numbers = #tpu.dot_dimension_numbers<[1], [0], [0], [1], [0, 0, 1, 1], [], []>} : vector<128x128xbf16>, vector<128x128xbf16>, vector<128x128xf32> -> vector<128x128xf32>
    %142 = vector.broadcast %139 : vector<1x128xf32> to vector<128x128xf32>
    %143 = arith.addf %141, %142 : vector<128x128xf32>
    %cst_78 = arith.constant 0.000000e+00 : f32
    %144 = vector.broadcast %cst_78 : f32 to vector<128x128xf32>
    %145 = arith.maximumf %143, %144 : vector<128x128xf32>
    %146 = arith.truncf %136 : vector<128x128xf32> to vector<128x128xbf16>
    %cst_79 = arith.constant dense<0.000000e+00> : vector<128x128xf32>
    %147 = tpu.matmul %146, %137, %cst_79 {dimension_numbers = #tpu.dot_dimension_numbers<[1], [0], [0], [1], [0, 0, 1, 1], [], []>} : vector<128x128xbf16>, vector<128x128xbf16>, vector<128x128xf32> -> vector<128x128xf32>
    %148 = vector.broadcast %139 : vector<1x128xf32> to vector<128x128xf32>
    %149 = arith.addf %147, %148 : vector<128x128xf32>
    %cst_80 = arith.constant 0.000000e+00 : f32
    %150 = vector.broadcast %cst_80 : f32 to vector<128x128xf32>
    %151 = arith.maximumf %149, %150 : vector<128x128xf32>
    %c0_81 = arith.constant 0 : index
    %c0_82 = arith.constant 0 : index
    %152 = vector.load %arg12[%c0_81, %c0_82] : memref<128x128xbf16, #tpu.memory_space<vmem>>, vector<128x128xbf16>
    %c0_83 = arith.constant 0 : index
    %c0_84 = arith.constant 0 : index
    %153 = vector.load %arg24[%c0_83, %c0_84] : memref<1x128xbf16, #tpu.memory_space<vmem>>, vector<1x128xbf16>
    %154 = arith.extf %153 : vector<1x128xbf16> to vector<1x128xf32>
    %155 = arith.truncf %145 : vector<128x128xf32> to vector<128x128xbf16>
    %cst_85 = arith.constant dense<0.000000e+00> : vector<128x128xf32>
    %156 = tpu.matmul %155, %152, %cst_85 {dimension_numbers = #tpu.dot_dimension_numbers<[1], [0], [0], [1], [0, 0, 1, 1], [], []>} : vector<128x128xbf16>, vector<128x128xbf16>, vector<128x128xf32> -> vector<128x128xf32>
    %157 = vector.broadcast %154 : vector<1x128xf32> to vector<128x128xf32>
    %158 = arith.addf %156, %157 : vector<128x128xf32>
    %cst_86 = arith.constant 0.000000e+00 : f32
    %159 = vector.broadcast %cst_86 : f32 to vector<128x128xf32>
    %160 = arith.maximumf %158, %159 : vector<128x128xf32>
    %161 = arith.truncf %151 : vector<128x128xf32> to vector<128x128xbf16>
    %cst_87 = arith.constant dense<0.000000e+00> : vector<128x128xf32>
    %162 = tpu.matmul %161, %152, %cst_87 {dimension_numbers = #tpu.dot_dimension_numbers<[1], [0], [0], [1], [0, 0, 1, 1], [], []>} : vector<128x128xbf16>, vector<128x128xbf16>, vector<128x128xf32> -> vector<128x128xf32>
    %163 = vector.broadcast %154 : vector<1x128xf32> to vector<128x128xf32>
    %164 = arith.addf %162, %163 : vector<128x128xf32>
    %cst_88 = arith.constant 0.000000e+00 : f32
    %165 = vector.broadcast %cst_88 : f32 to vector<128x128xf32>
    %166 = arith.maximumf %164, %165 : vector<128x128xf32>
    %c0_89 = arith.constant 0 : index
    %c0_90 = arith.constant 0 : index
    %167 = vector.load %arg13[%c0_89, %c0_90] : memref<128x128xbf16, #tpu.memory_space<vmem>>, vector<128x128xbf16>
    %c0_91 = arith.constant 0 : index
    %c0_92 = arith.constant 0 : index
    %168 = vector.load %arg25[%c0_91, %c0_92] : memref<1x128xbf16, #tpu.memory_space<vmem>>, vector<1x128xbf16>
    %169 = arith.extf %168 : vector<1x128xbf16> to vector<1x128xf32>
    %170 = arith.truncf %160 : vector<128x128xf32> to vector<128x128xbf16>
    %cst_93 = arith.constant dense<0.000000e+00> : vector<128x128xf32>
    %171 = tpu.matmul %170, %167, %cst_93 {dimension_numbers = #tpu.dot_dimension_numbers<[1], [0], [0], [1], [0, 0, 1, 1], [], []>} : vector<128x128xbf16>, vector<128x128xbf16>, vector<128x128xf32> -> vector<128x128xf32>
    %172 = vector.broadcast %169 : vector<1x128xf32> to vector<128x128xf32>
    %173 = arith.addf %171, %172 : vector<128x128xf32>
    %174 = arith.truncf %166 : vector<128x128xf32> to vector<128x128xbf16>
    %cst_94 = arith.constant dense<0.000000e+00> : vector<128x128xf32>
    %175 = tpu.matmul %174, %167, %cst_94 {dimension_numbers = #tpu.dot_dimension_numbers<[1], [0], [0], [1], [0, 0, 1, 1], [], []>} : vector<128x128xbf16>, vector<128x128xbf16>, vector<128x128xf32> -> vector<128x128xf32>
    %176 = vector.broadcast %169 : vector<1x128xf32> to vector<128x128xf32>
    %177 = arith.addf %175, %176 : vector<128x128xf32>
    %c0_95 = arith.constant 0 : index
    %c0_96 = arith.constant 0 : index
    %178 = vector.load %arg26[%c0_95, %c0_96] : memref<256x128xf32, #tpu.memory_space<vmem>>, vector<128x128xf32>
    tpu.vector_store %arg26[%c0_95, %c0_96], %173 {strides = array<i32>} : memref<256x128xf32, #tpu.memory_space<vmem>>, vector<128x128xf32>,
    %c128_97 = arith.constant 128 : index
    %c0_98 = arith.constant 0 : index
    %179 = vector.load %arg26[%c128_97, %c0_98] : memref<256x128xf32, #tpu.memory_space<vmem>>, vector<128x128xf32>
    tpu.vector_store %arg26[%c128_97, %c0_98], %177 {strides = array<i32>} : memref<256x128xf32, #tpu.memory_space<vmem>>, vector<128x128xf32>,
    return
  }
  func.func @transform_0(%arg0: i32) -> (i32, i32) {
    %c0_i32 = arith.constant 0 : i32
    %c0_i32_0 = arith.constant 0 : i32
    return %arg0, %c0_i32 : i32, i32
  }
  func.func @transform_1(%arg0: i32) -> (i32, i32) {
    %c0_i32 = arith.constant 0 : i32
    %c0_i32_0 = arith.constant 0 : i32
    %c0_i32_1 = arith.constant 0 : i32
    return %c0_i32, %c0_i32_0 : i32, i32
  }
  func.func @transform_2(%arg0: i32) -> (i32, i32) {
    %c0_i32 = arith.constant 0 : i32
    %c0_i32_0 = arith.constant 0 : i32
    %c0_i32_1 = arith.constant 0 : i32
    return %c0_i32, %c0_i32_0 : i32, i32
  }
  func.func @transform_3(%arg0: i32) -> (i32, i32) {
    %c0_i32 = arith.constant 0 : i32
    %c0_i32_0 = arith.constant 0 : i32
    %c0_i32_1 = arith.constant 0 : i32
    return %c0_i32, %c0_i32_0 : i32, i32
  }
  func.func @transform_4(%arg0: i32) -> (i32, i32) {
    %c0_i32 = arith.constant 0 : i32
    %c0_i32_0 = arith.constant 0 : i32
    %c0_i32_1 = arith.constant 0 : i32
    return %c0_i32, %c0_i32_0 : i32, i32
  }
  func.func @transform_5(%arg0: i32) -> (i32, i32) {
    %c0_i32 = arith.constant 0 : i32
    %c0_i32_0 = arith.constant 0 : i32
    %c0_i32_1 = arith.constant 0 : i32
    return %c0_i32, %c0_i32_0 : i32, i32
  }
  func.func @transform_6(%arg0: i32) -> (i32, i32) {
    %c0_i32 = arith.constant 0 : i32
    %c0_i32_0 = arith.constant 0 : i32
    %c0_i32_1 = arith.constant 0 : i32
    return %c0_i32, %c0_i32_0 : i32, i32
  }
  func.func @transform_7(%arg0: i32) -> (i32, i32) {
    %c0_i32 = arith.constant 0 : i32
    %c0_i32_0 = arith.constant 0 : i32
    %c0_i32_1 = arith.constant 0 : i32
    return %c0_i32, %c0_i32_0 : i32, i32
  }
  func.func @transform_8(%arg0: i32) -> (i32, i32) {
    %c0_i32 = arith.constant 0 : i32
    %c0_i32_0 = arith.constant 0 : i32
    %c0_i32_1 = arith.constant 0 : i32
    return %c0_i32, %c0_i32_0 : i32, i32
  }
  func.func @transform_9(%arg0: i32) -> (i32, i32) {
    %c0_i32 = arith.constant 0 : i32
    %c0_i32_0 = arith.constant 0 : i32
    %c0_i32_1 = arith.constant 0 : i32
    return %c0_i32, %c0_i32_0 : i32, i32
  }
  func.func @transform_10(%arg0: i32) -> (i32, i32) {
    %c0_i32 = arith.constant 0 : i32
    %c0_i32_0 = arith.constant 0 : i32
    %c0_i32_1 = arith.constant 0 : i32
    return %c0_i32, %c0_i32_0 : i32, i32
  }
  func.func @transform_11(%arg0: i32) -> (i32, i32) {
    %c0_i32 = arith.constant 0 : i32
    %c0_i32_0 = arith.constant 0 : i32
    %c0_i32_1 = arith.constant 0 : i32
    return %c0_i32, %c0_i32_0 : i32, i32
  }
  func.func @transform_12(%arg0: i32) -> (i32, i32) {
    %c0_i32 = arith.constant 0 : i32
    %c0_i32_0 = arith.constant 0 : i32
    %c0_i32_1 = arith.constant 0 : i32
    return %c0_i32, %c0_i32_0 : i32, i32
  }
  func.func @transform_13(%arg0: i32) -> (i32, i32) {
    %c0_i32 = arith.constant 0 : i32
    %c0_i32_0 = arith.constant 0 : i32
    %c0_i32_1 = arith.constant 0 : i32
    return %c0_i32, %c0_i32_0 : i32, i32
  }
  func.func @transform_14(%arg0: i32) -> (i32, i32) {
    %c0_i32 = arith.constant 0 : i32
    %c0_i32_0 = arith.constant 0 : i32
    %c0_i32_1 = arith.constant 0 : i32
    return %c0_i32, %c0_i32_0 : i32, i32
  }
  func.func @transform_15(%arg0: i32) -> (i32, i32) {
    %c0_i32 = arith.constant 0 : i32
    %c0_i32_0 = arith.constant 0 : i32
    %c0_i32_1 = arith.constant 0 : i32
    return %c0_i32, %c0_i32_0 : i32, i32
  }
  func.func @transform_16(%arg0: i32) -> (i32, i32) {
    %c0_i32 = arith.constant 0 : i32
    %c0_i32_0 = arith.constant 0 : i32
    %c0_i32_1 = arith.constant 0 : i32
    return %c0_i32, %c0_i32_0 : i32, i32
  }
  func.func @transform_17(%arg0: i32) -> (i32, i32) {
    %c0_i32 = arith.constant 0 : i32
    %c0_i32_0 = arith.constant 0 : i32
    %c0_i32_1 = arith.constant 0 : i32
    return %c0_i32, %c0_i32_0 : i32, i32
  }
  func.func @transform_18(%arg0: i32) -> (i32, i32) {
    %c0_i32 = arith.constant 0 : i32
    %c0_i32_0 = arith.constant 0 : i32
    %c0_i32_1 = arith.constant 0 : i32
    return %c0_i32, %c0_i32_0 : i32, i32
  }
  func.func @transform_19(%arg0: i32) -> (i32, i32) {
    %c0_i32 = arith.constant 0 : i32
    %c0_i32_0 = arith.constant 0 : i32
    %c0_i32_1 = arith.constant 0 : i32
    return %c0_i32, %c0_i32_0 : i32, i32
  }
  func.func @transform_20(%arg0: i32) -> (i32, i32) {
    %c0_i32 = arith.constant 0 : i32
    %c0_i32_0 = arith.constant 0 : i32
    %c0_i32_1 = arith.constant 0 : i32
    return %c0_i32, %c0_i32_0 : i32, i32
  }
  func.func @transform_21(%arg0: i32) -> (i32, i32) {
    %c0_i32 = arith.constant 0 : i32
    %c0_i32_0 = arith.constant 0 : i32
    %c0_i32_1 = arith.constant 0 : i32
    return %c0_i32, %c0_i32_0 : i32, i32
  }
  func.func @transform_22(%arg0: i32) -> (i32, i32) {
    %c0_i32 = arith.constant 0 : i32
    %c0_i32_0 = arith.constant 0 : i32
    %c0_i32_1 = arith.constant 0 : i32
    return %c0_i32, %c0_i32_0 : i32, i32
  }
  func.func @transform_23(%arg0: i32) -> (i32, i32) {
    %c0_i32 = arith.constant 0 : i32
    %c0_i32_0 = arith.constant 0 : i32
    %c0_i32_1 = arith.constant 0 : i32
    return %c0_i32, %c0_i32_0 : i32, i32
  }
  func.func @transform_24(%arg0: i32) -> (i32, i32) {
    %c0_i32 = arith.constant 0 : i32
    %c0_i32_0 = arith.constant 0 : i32
    %c0_i32_1 = arith.constant 0 : i32
    return %c0_i32, %c0_i32_0 : i32, i32
  }
  func.func @transform_25(%arg0: i32) -> (i32, i32) {
    %c0_i32 = arith.constant 0 : i32
    %c0_i32_0 = arith.constant 0 : i32
    return %arg0, %c0_i32 : i32, i32
  }
}

</mosaic_0001>

<llo_original>
// kernel: _lambda_.1
$region0: #{_lambda_.1}
  #allocation0 [shape = 'u32[]', space=smem, size = 0x4, offset = 0x4, fixed_abs, tag = 'smem constant byte address 0x4 - core index']
  #allocation1 [shape = 'u32[72,128]{1,0:T(1,128)}', space=vmem, size = 0x9000, scoped, tag = 'internal scratch']
  %s0 = inlined_call_operand.vmem [shape: f32[512,32], index: 0, kind: input, shape index: {}]
  %s1 = inlined_call_operand.hbm [shape: bf16[32,128], index: 1, kind: input, shape index: {}]
  %s2 = inlined_call_operand.hbm [shape: bf16[128,128], index: 2, kind: input, shape index: {}]
  %s3 = inlined_call_operand.vmem [shape: bf16[128,128], index: 3, kind: input, shape index: {}]
  %s4 = inlined_call_operand.vmem [shape: bf16[128,128], index: 4, kind: input, shape index: {}]
  %s5 = inlined_call_operand.vmem [shape: bf16[128,128], index: 5, kind: input, shape index: {}]
  %s6 = inlined_call_operand.vmem [shape: bf16[128,128], index: 6, kind: input, shape index: {}]
  %s7 = inlined_call_operand.vmem [shape: bf16[128,128], index: 7, kind: input, shape index: {}]
  %s8 = inlined_call_operand.vmem [shape: bf16[128,128], index: 8, kind: input, shape index: {}]
  %s9 = inlined_call_operand.vmem [shape: bf16[128,128], index: 9, kind: input, shape index: {}]
  %s10 = inlined_call_operand.vmem [shape: bf16[128,128], index: 10, kind: input, shape index: {}]
  %s11 = inlined_call_operand.vmem [shape: bf16[128,128], index: 11, kind: input, shape index: {}]
  %s12 = inlined_call_operand.vmem [shape: bf16[128,128], index: 12, kind: input, shape index: {}]
  %s13 = inlined_call_operand.hbm [shape: bf16[1,128], index: 13, kind: input, shape index: {}]
  %s14 = inlined_call_operand.vmem [shape: bf16[1,128], index: 14, kind: input, shape index: {}]
  %s15 = inlined_call_operand.vmem [shape: bf16[1,128], index: 15, kind: input, shape index: {}]
  %s16 = inlined_call_operand.vmem [shape: bf16[1,128], index: 16, kind: input, shape index: {}]
  %s17 = inlined_call_operand.vmem [shape: bf16[1,128], index: 17, kind: input, shape index: {}]
  %s18 = inlined_call_operand.vmem [shape: bf16[1,128], index: 18, kind: input, shape index: {}]
  %s19 = inlined_call_operand.vmem [shape: bf16[1,128], index: 19, kind: input, shape index: {}]
  %s20 = inlined_call_operand.vmem [shape: bf16[1,128], index: 20, kind: input, shape index: {}]
  %s21 = inlined_call_operand.vmem [shape: bf16[1,128], index: 21, kind: input, shape index: {}]
  %s22 = inlined_call_operand.vmem [shape: bf16[1,128], index: 22, kind: input, shape index: {}]
  %s23 = inlined_call_operand.vmem [shape: bf16[1,128], index: 23, kind: input, shape index: {}]
  %s24 = inlined_call_operand.vmem [shape: bf16[1,128], index: 24, kind: input, shape index: {}]
  %s25 = inlined_call_operand.vmem [shape: f32[512,128], index: 25, kind: output, shape index: {}]
  %s26 = sld [smem:[#allocation0]]
  $region145: #{_lambda_.1} parent=0
    _
  %s28 = ssub.s32 1, %s26
  %s29 = scalar_select 0, %s28, %s26
  $region1: #{_lambda_.1} parent=0
    #allocation2 [shape = 'u8[8192]{0}', space=vmem, size = 0x2000, scoped, tag = 'input window, operand 1, single buffered']
    #allocation3 [shape = 's32[2]{0}', space=sflag, size = 0x8, scoped, tag = 'scoped memory for _lambda_.1']
    #allocation4 [shape = 'u8[32768]{0}', space=vmem, size = 0x8000, scoped, tag = 'input window, operand 2, single buffered']
    #allocation5 [shape = 's32[1]{0}', space=sflag, size = 0x4, scoped, tag = 'scoped memory for _lambda_.1']
    #allocation6 [shape = 'u8[512]{0}', space=vmem, size = 0x400, scoped, tag = 'input window, operand 13, single buffered']
    %30 = vsyncpa [#allocation3], 0
    %31 = vsyncpa [#allocation5], 0
    loop: start=0, step=1, limit=4
    $region2: #{_lambda_.1} parent=1 // loop_pre_header
      _
    $region3: #{_lambda_.1} parent=1 // loop_header
      %s33 = sphi 0, %s37
      %p34 = scmp.ge.s32.totalorder %s33, 4
      %s43 = sphi 0, %s45
      %s46 = sphi 0, %s43
      %s47 = sphi 0, %s46
      %s63 = sphi 0, %s47
      %s67 = sphi 0, %s67
      %s69 = sphi 0, %s67
      %s70 = sphi 0, %s69
      %s84 = sphi 0, %s70
      %s88 = sphi 0, %s88
      %s90 = sphi 0, %s88
      %s91 = sphi 0, %s90
      %s105 = sphi 0, %s91
      %s109 = sphi 0, %s109
      %s111 = sphi 0, %s109
      %s112 = sphi 0, %s111
      %s126 = sphi 0, %s112
      %s130 = sphi 0, %s130
      %s132 = sphi 0, %s130
      %s133 = sphi 0, %s132
      %s147 = sphi 0, %s133
      %s151 = sphi 0, %s151
      %s153 = sphi 0, %s151
      %s154 = sphi 0, %s153
      %s168 = sphi 0, %s154
      %s172 = sphi 0, %s172
      %s174 = sphi 0, %s172
      %s175 = sphi 0, %s174
      %s189 = sphi 0, %s175
      %s193 = sphi 0, %s193
      %s195 = sphi 0, %s193
      %s196 = sphi 0, %s195
      %s210 = sphi 0, %s196
      %s214 = sphi 0, %s214
      %s216 = sphi 0, %s214
      %s217 = sphi 0, %s216
      %s231 = sphi 0, %s217
      %s235 = sphi 0, %s235
      %s237 = sphi 0, %s235
      %s238 = sphi 0, %s237
      %s252 = sphi 0, %s238
      %s256 = sphi 0, %s256
      %s258 = sphi 0, %s256
      %s259 = sphi 0, %s258
      %s273 = sphi 0, %s259
      %s277 = sphi 0, %s277
      %s279 = sphi 0, %s277
      %s280 = sphi 0, %s279
      %s294 = sphi 0, %s280
      %s298 = sphi 0, %s298
      %s300 = sphi 0, %s298
      %s301 = sphi 0, %s300
      %s315 = sphi 0, %s301
      %s319 = sphi 0, %s319
      %s321 = sphi 0, %s319
      %s322 = sphi 0, %s321
      %s336 = sphi 0, %s322
      %s340 = sphi 0, %s340
      %s342 = sphi 0, %s340
      %s343 = sphi 0, %s342
      %s357 = sphi 0, %s343
      %s361 = sphi 0, %s361
      %s363 = sphi 0, %s361
      %s364 = sphi 0, %s363
      %s378 = sphi 0, %s364
      %s382 = sphi 0, %s382
      %s384 = sphi 0, %s382
      %s385 = sphi 0, %s384
      %s399 = sphi 0, %s385
      %s403 = sphi 0, %s403
      %s405 = sphi 0, %s403
      %s406 = sphi 0, %s405
      %s420 = sphi 0, %s406
      %s424 = sphi 0, %s424
      %s426 = sphi 0, %s424
      %s427 = sphi 0, %s426
      %s441 = sphi 0, %s427
      %s445 = sphi 0, %s445
      %s447 = sphi 0, %s445
      %s448 = sphi 0, %s447
      %s462 = sphi 0, %s448
      %s466 = sphi 0, %s466
      %s468 = sphi 0, %s466
      %s469 = sphi 0, %s468
      %s483 = sphi 0, %s469
      %s487 = sphi 0, %s487
      %s489 = sphi 0, %s487
      %s490 = sphi 0, %s489
      %s504 = sphi 0, %s490
      %s508 = sphi 0, %s508
      %s510 = sphi 0, %s508
      %s511 = sphi 0, %s510
      %s525 = sphi 0, %s511
      %s529 = sphi 0, %s529
      %s531 = sphi 0, %s529
      %s532 = sphi 0, %s531
      %s546 = sphi 0, %s532
      %s550 = sphi 0, %s550
      %s552 = sphi 0, %s550
      %s553 = sphi 0, %s552
      %s567 = sphi 0, %s553
      %s573 = sphi 0, %s575
      %s576 = sphi 0, %s573
      %s577 = sphi 0, %s576
      %s593 = sphi 0, %s577
    $region4: #{_lambda_.1} parent=1 // loop_header_branch
      %36 = sbr.rel (%p34) target = $region8
    $region5: #{_lambda_.1} parent=1 // loop_body
      %s38 = ssub.s32 %s33, 1
      %s39 = ssub.s32 %s33, 2
      %s40 = sadd.s32 %s33, 1
      %s41 = ssub.s32 %s33, %s40
      %p42 = scmp.eq.s32.totalorder %s41, 0
      %s44 = sadd.s32 %s43, 1
      %s45 = scalar_select %p42, %s43, %s44
      %p48 = pneg %p42
      %p49 = scmp.eq.s32.totalorder %s33, 1
      %p50 = por %p48, %p49
      %p51 = scmp.ne.s32.totalorder %s43, %s46
      %p52 = scmp.eq.s32.totalorder %s33, 0
      %p53 = por %p51, %p52
      %p54 = scmp.ne.s32.totalorder %s43, %s46
      %p55 = scmp.eq.s32.totalorder %s38, 1
      %p56 = por %p54, %p55
      %p57 = scmp.ne.s32.totalorder %s46, %s47
      %p58 = scmp.eq.s32.totalorder %s38, 0
      %p59 = por %p57, %p58
      %p60 = scmp.ne.s32.totalorder %s46, %s47
      %p61 = scmp.eq.s32.totalorder %s39, 1
      %p62 = por %p60, %p61
      %p64 = scmp.ne.s32.totalorder %s47, %s63
      %p65 = scmp.eq.s32.totalorder %s39, 0
      %p66 = por %p64, %p65
      %s68 = sadd.s32 %s67, 1
      %p71 = scmp.eq.s32.totalorder %s33, 1
      %p72 = scmp.ne.s32.totalorder %s67, %s69
      %p73 = scmp.eq.s32.totalorder %s33, 0
      %p74 = por %p72, %p73
      %p75 = scmp.ne.s32.totalorder %s67, %s69
      %p76 = scmp.eq.s32.totalorder %s38, 1
      %p77 = por %p75, %p76
      %p78 = scmp.ne.s32.totalorder %s69, %s70
      %p79 = scmp.eq.s32.totalorder %s38, 0
      %p80 = por %p78, %p79
      %p81 = scmp.ne.s32.totalorder %s69, %s70
      %p82 = scmp.eq.s32.totalorder %s39, 1
      %p83 = por %p81, %p82
      %p85 = scmp.ne.s32.totalorder %s70, %s84
      %p86 = scmp.eq.s32.totalorder %s39, 0
      %p87 = por %p85, %p86
      %s89 = sadd.s32 %s88, 1
      %p92 = scmp.eq.s32.totalorder %s33, 1
      %p93 = scmp.ne.s32.totalorder %s88, %s90
      %p94 = scmp.eq.s32.totalorder %s33, 0
      %p95 = por %p93, %p94
      %p96 = scmp.ne.s32.totalorder %s88, %s90
      %p97 = scmp.eq.s32.totalorder %s38, 1
      %p98 = por %p96, %p97
      %p99 = scmp.ne.s32.totalorder %s90, %s91
      %p100 = scmp.eq.s32.totalorder %s38, 0
      %p101 = por %p99, %p100
      %p102 = scmp.ne.s32.totalorder %s90, %s91
      %p103 = scmp.eq.s32.totalorder %s39, 1
      %p104 = por %p102, %p103
      %p106 = scmp.ne.s32.totalorder %s91, %s105
      %p107 = scmp.eq.s32.totalorder %s39, 0
      %p108 = por %p106, %p107
      %s110 = sadd.s32 %s109, 1
      %p113 = scmp.eq.s32.totalorder %s33, 1
      %p114 = scmp.ne.s32.totalorder %s109, %s111
      %p115 = scmp.eq.s32.totalorder %s33, 0
      %p116 = por %p114, %p115
      %p117 = scmp.ne.s32.totalorder %s109, %s111
      %p118 = scmp.eq.s32.totalorder %s38, 1
      %p119 = por %p117, %p118
      %p120 = scmp.ne.s32.totalorder %s111, %s112
      %p121 = scmp.eq.s32.totalorder %s38, 0
      %p122 = por %p120, %p121
      %p123 = scmp.ne.s32.totalorder %s111, %s112
      %p124 = scmp.eq.s32.totalorder %s39, 1
      %p125 = por %p123, %p124
      %p127 = scmp.ne.s32.totalorder %s112, %s126
      %p128 = scmp.eq.s32.totalorder %s39, 0
      %p129 = por %p127, %p128
      %s131 = sadd.s32 %s130, 1
      %p134 = scmp.eq.s32.totalorder %s33, 1
      %p135 = scmp.ne.s32.totalorder %s130, %s132
      %p136 = scmp.eq.s32.totalorder %s33, 0
      %p137 = por %p135, %p136
      %p138 = scmp.ne.s32.totalorder %s130, %s132
      %p139 = scmp.eq.s32.totalorder %s38, 1
      %p140 = por %p138, %p139
      %p141 = scmp.ne.s32.totalorder %s132, %s133
      %p142 = scmp.eq.s32.totalorder %s38, 0
      %p143 = por %p141, %p142
      %p144 = scmp.ne.s32.totalorder %s132, %s133
      %p145 = scmp.eq.s32.totalorder %s39, 1
      %p146 = por %p144, %p145
      %p148 = scmp.ne.s32.totalorder %s133, %s147
      %p149 = scmp.eq.s32.totalorder %s39, 0
      %p150 = por %p148, %p149
      %s152 = sadd.s32 %s151, 1
      %p155 = scmp.eq.s32.totalorder %s33, 1
      %p156 = scmp.ne.s32.totalorder %s151, %s153
      %p157 = scmp.eq.s32.totalorder %s33, 0
      %p158 = por %p156, %p157
      %p159 = scmp.ne.s32.totalorder %s151, %s153
      %p160 = scmp.eq.s32.totalorder %s38, 1
      %p161 = por %p159, %p160
      %p162 = scmp.ne.s32.totalorder %s153, %s154
      %p163 = scmp.eq.s32.totalorder %s38, 0
      %p164 = por %p162, %p163
      %p165 = scmp.ne.s32.totalorder %s153, %s154
      %p166 = scmp.eq.s32.totalorder %s39, 1
      %p167 = por %p165, %p166
      %p169 = scmp.ne.s32.totalorder %s154, %s168
      %p170 = scmp.eq.s32.totalorder %s39, 0
      %p171 = por %p169, %p170
      %s173 = sadd.s32 %s172, 1
      %p176 = scmp.eq.s32.totalorder %s33, 1
      %p177 = scmp.ne.s32.totalorder %s172, %s174
      %p178 = scmp.eq.s32.totalorder %s33, 0
      %p179 = por %p177, %p178
      %p180 = scmp.ne.s32.totalorder %s172, %s174
      %p181 = scmp.eq.s32.totalorder %s38, 1
      %p182 = por %p180, %p181
      %p183 = scmp.ne.s32.totalorder %s174, %s175
      %p184 = scmp.eq.s32.totalorder %s38, 0
      %p185 = por %p183, %p184
      %p186 = scmp.ne.s32.totalorder %s174, %s175
      %p187 = scmp.eq.s32.totalorder %s39, 1
      %p188 = por %p186, %p187
      %p190 = scmp.ne.s32.totalorder %s175, %s189
      %p191 = scmp.eq.s32.totalorder %s39, 0
      %p192 = por %p190, %p191
      %s194 = sadd.s32 %s193, 1
      %p197 = scmp.eq.s32.totalorder %s33, 1
      %p198 = scmp.ne.s32.totalorder %s193, %s195
      %p199 = scmp.eq.s32.totalorder %s33, 0
      %p200 = por %p198, %p199
      %p201 = scmp.ne.s32.totalorder %s193, %s195
      %p202 = scmp.eq.s32.totalorder %s38, 1
      %p203 = por %p201, %p202
      %p204 = scmp.ne.s32.totalorder %s195, %s196
      %p205 = scmp.eq.s32.totalorder %s38, 0
      %p206 = por %p204, %p205
      %p207 = scmp.ne.s32.totalorder %s195, %s196
      %p208 = scmp.eq.s32.totalorder %s39, 1
      %p209 = por %p207, %p208
      %p211 = scmp.ne.s32.totalorder %s196, %s210
      %p212 = scmp.eq.s32.totalorder %s39, 0
      %p213 = por %p211, %p212
      %s215 = sadd.s32 %s214, 1
      %p218 = scmp.eq.s32.totalorder %s33, 1
      %p219 = scmp.ne.s32.totalorder %s214, %s216
      %p220 = scmp.eq.s32.totalorder %s33, 0
      %p221 = por %p219, %p220
      %p222 = scmp.ne.s32.totalorder %s214, %s216
      %p223 = scmp.eq.s32.totalorder %s38, 1
      %p224 = por %p222, %p223
      %p225 = scmp.ne.s32.totalorder %s216, %s217
      %p226 = scmp.eq.s32.totalorder %s38, 0
      %p227 = por %p225, %p226
      %p228 = scmp.ne.s32.totalorder %s216, %s217
      %p229 = scmp.eq.s32.totalorder %s39, 1
      %p230 = por %p228, %p229
      %p232 = scmp.ne.s32.totalorder %s217, %s231
      %p233 = scmp.eq.s32.totalorder %s39, 0
      %p234 = por %p232, %p233
      %s236 = sadd.s32 %s235, 1
      %p239 = scmp.eq.s32.totalorder %s33, 1
      %p240 = scmp.ne.s32.totalorder %s235, %s237
      %p241 = scmp.eq.s32.totalorder %s33, 0
      %p242 = por %p240, %p241
      %p243 = scmp.ne.s32.totalorder %s235, %s237
      %p244 = scmp.eq.s32.totalorder %s38, 1
      %p245 = por %p243, %p244
      %p246 = scmp.ne.s32.totalorder %s237, %s238
      %p247 = scmp.eq.s32.totalorder %s38, 0
      %p248 = por %p246, %p247
      %p249 = scmp.ne.s32.totalorder %s237, %s238
      %p250 = scmp.eq.s32.totalorder %s39, 1
      %p251 = por %p249, %p250
      %p253 = scmp.ne.s32.totalorder %s238, %s252
      %p254 = scmp.eq.s32.totalorder %s39, 0
      %p255 = por %p253, %p254
      %s257 = sadd.s32 %s256, 1
      %p260 = scmp.eq.s32.totalorder %s33, 1
      %p261 = scmp.ne.s32.totalorder %s256, %s258
      %p262 = scmp.eq.s32.totalorder %s33, 0
      %p263 = por %p261, %p262
      %p264 = scmp.ne.s32.totalorder %s256, %s258
      %p265 = scmp.eq.s32.totalorder %s38, 1
      %p266 = por %p264, %p265
      %p267 = scmp.ne.s32.totalorder %s258, %s259
      %p268 = scmp.eq.s32.totalorder %s38, 0
      %p269 = por %p267, %p268
      %p270 = scmp.ne.s32.totalorder %s258, %s259
      %p271 = scmp.eq.s32.totalorder %s39, 1
      %p272 = por %p270, %p271
      %p274 = scmp.ne.s32.totalorder %s259, %s273
      %p275 = scmp.eq.s32.totalorder %s39, 0
      %p276 = por %p274, %p275
      %s278 = sadd.s32 %s277, 1
      %p281 = scmp.eq.s32.totalorder %s33, 1
      %p282 = scmp.ne.s32.totalorder %s277, %s279
      %p283 = scmp.eq.s32.totalorder %s33, 0
      %p284 = por %p282, %p283
      %p285 = scmp.ne.s32.totalorder %s277, %s279
      %p286 = scmp.eq.s32.totalorder %s38, 1
      %p287 = por %p285, %p286
      %p288 = scmp.ne.s32.totalorder %s279, %s280
      %p289 = scmp.eq.s32.totalorder %s38, 0
      %p290 = por %p288, %p289
      %p291 = scmp.ne.s32.totalorder %s279, %s280
      %p292 = scmp.eq.s32.totalorder %s39, 1
      %p293 = por %p291, %p292
      %p295 = scmp.ne.s32.totalorder %s280, %s294
      %p296 = scmp.eq.s32.totalorder %s39, 0
      %p297 = por %p295, %p296
      %s299 = sadd.s32 %s298, 1
      %p302 = scmp.eq.s32.totalorder %s33, 1
      %p303 = scmp.ne.s32.totalorder %s298, %s300
      %p304 = scmp.eq.s32.totalorder %s33, 0
      %p305 = por %p303, %p304
      %p306 = scmp.ne.s32.totalorder %s298, %s300
      %p307 = scmp.eq.s32.totalorder %s38, 1
      %p308 = por %p306, %p307
      %p309 = scmp.ne.s32.totalorder %s300, %s301
      %p310 = scmp.eq.s32.totalorder %s38, 0
      %p311 = por %p309, %p310
      %p312 = scmp.ne.s32.totalorder %s300, %s301
      %p313 = scmp.eq.s32.totalorder %s39, 1
      %p314 = por %p312, %p313
      %p316 = scmp.ne.s32.totalorder %s301, %s315
      %p317 = scmp.eq.s32.totalorder %s39, 0
      %p318 = por %p316, %p317
      %s320 = sadd.s32 %s319, 1
      %p323 = scmp.eq.s32.totalorder %s33, 1
      %p324 = scmp.ne.s32.totalorder %s319, %s321
      %p325 = scmp.eq.s32.totalorder %s33, 0
      %p326 = por %p324, %p325
      %p327 = scmp.ne.s32.totalorder %s319, %s321
      %p328 = scmp.eq.s32.totalorder %s38, 1
      %p329 = por %p327, %p328
      %p330 = scmp.ne.s32.totalorder %s321, %s322
      %p331 = scmp.eq.s32.totalorder %s38, 0
      %p332 = por %p330, %p331
      %p333 = scmp.ne.s32.totalorder %s321, %s322
      %p334 = scmp.eq.s32.totalorder %s39, 1
      %p335 = por %p333, %p334
      %p337 = scmp.ne.s32.totalorder %s322, %s336
      %p338 = scmp.eq.s32.totalorder %s39, 0
      %p339 = por %p337, %p338
      %s341 = sadd.s32 %s340, 1
      %p344 = scmp.eq.s32.totalorder %s33, 1
      %p345 = scmp.ne.s32.totalorder %s340, %s342
      %p346 = scmp.eq.s32.totalorder %s33, 0
      %p347 = por %p345, %p346
      %p348 = scmp.ne.s32.totalorder %s340, %s342
      %p349 = scmp.eq.s32.totalorder %s38, 1
      %p350 = por %p348, %p349
      %p351 = scmp.ne.s32.totalorder %s342, %s343
      %p352 = scmp.eq.s32.totalorder %s38, 0
      %p353 = por %p351, %p352
      %p354 = scmp.ne.s32.totalorder %s342, %s343
      %p355 = scmp.eq.s32.totalorder %s39, 1
      %p356 = por %p354, %p355
      %p358 = scmp.ne.s32.totalorder %s343, %s357
      %p359 = scmp.eq.s32.totalorder %s39, 0
      %p360 = por %p358, %p359
      %s362 = sadd.s32 %s361, 1
      %p365 = scmp.eq.s32.totalorder %s33, 1
      %p366 = scmp.ne.s32.totalorder %s361, %s363
      %p367 = scmp.eq.s32.totalorder %s33, 0
      %p368 = por %p366, %p367
      %p369 = scmp.ne.s32.totalorder %s361, %s363
      %p370 = scmp.eq.s32.totalorder %s38, 1
      %p371 = por %p369, %p370
      %p372 = scmp.ne.s32.totalorder %s363, %s364
      %p373 = scmp.eq.s32.totalorder %s38, 0
      %p374 = por %p372, %p373
      %p375 = scmp.ne.s32.totalorder %s363, %s364
      %p376 = scmp.eq.s32.totalorder %s39, 1
      %p377 = por %p375, %p376
      %p379 = scmp.ne.s32.totalorder %s364, %s378
      %p380 = scmp.eq.s32.totalorder %s39, 0
      %p381 = por %p379, %p380
      %s383 = sadd.s32 %s382, 1
      %p386 = scmp.eq.s32.totalorder %s33, 1
      %p387 = scmp.ne.s32.totalorder %s382, %s384
      %p388 = scmp.eq.s32.totalorder %s33, 0
      %p389 = por %p387, %p388
      %p390 = scmp.ne.s32.totalorder %s382, %s384
      %p391 = scmp.eq.s32.totalorder %s38, 1
      %p392 = por %p390, %p391
      %p393 = scmp.ne.s32.totalorder %s384, %s385
      %p394 = scmp.eq.s32.totalorder %s38, 0
      %p395 = por %p393, %p394
      %p396 = scmp.ne.s32.totalorder %s384, %s385
      %p397 = scmp.eq.s32.totalorder %s39, 1
      %p398 = por %p396, %p397
      %p400 = scmp.ne.s32.totalorder %s385, %s399
      %p401 = scmp.eq.s32.totalorder %s39, 0
      %p402 = por %p400, %p401
      %s404 = sadd.s32 %s403, 1
      %p407 = scmp.eq.s32.totalorder %s33, 1
      %p408 = scmp.ne.s32.totalorder %s403, %s405
      %p409 = scmp.eq.s32.totalorder %s33, 0
      %p410 = por %p408, %p409
      %p411 = scmp.ne.s32.totalorder %s403, %s405
      %p412 = scmp.eq.s32.totalorder %s38, 1
      %p413 = por %p411, %p412
      %p414 = scmp.ne.s32.totalorder %s405, %s406
      %p415 = scmp.eq.s32.totalorder %s38, 0
      %p416 = por %p414, %p415
      %p417 = scmp.ne.s32.totalorder %s405, %s406
      %p418 = scmp.eq.s32.totalorder %s39, 1
      %p419 = por %p417, %p418
      %p421 = scmp.ne.s32.totalorder %s406, %s420
      %p422 = scmp.eq.s32.totalorder %s39, 0
      %p423 = por %p421, %p422
      %s425 = sadd.s32 %s424, 1
      %p428 = scmp.eq.s32.totalorder %s33, 1
      %p429 = scmp.ne.s32.totalorder %s424, %s426
      %p430 = scmp.eq.s32.totalorder %s33, 0
      %p431 = por %p429, %p430
      %p432 = scmp.ne.s32.totalorder %s424, %s426
      %p433 = scmp.eq.s32.totalorder %s38, 1
      %p434 = por %p432, %p433
      %p435 = scmp.ne.s32.totalorder %s426, %s427
      %p436 = scmp.eq.s32.totalorder %s38, 0
      %p437 = por %p435, %p436
      %p438 = scmp.ne.s32.totalorder %s426, %s427
      %p439 = scmp.eq.s32.totalorder %s39, 1
      %p440 = por %p438, %p439
      %p442 = scmp.ne.s32.totalorder %s427, %s441
      %p443 = scmp.eq.s32.totalorder %s39, 0
      %p444 = por %p442, %p443
      %s446 = sadd.s32 %s445, 1
      %p449 = scmp.eq.s32.totalorder %s33, 1
      %p450 = scmp.ne.s32.totalorder %s445, %s447
      %p451 = scmp.eq.s32.totalorder %s33, 0
      %p452 = por %p450, %p451
      %p453 = scmp.ne.s32.totalorder %s445, %s447
      %p454 = scmp.eq.s32.totalorder %s38, 1
      %p455 = por %p453, %p454
      %p456 = scmp.ne.s32.totalorder %s447, %s448
      %p457 = scmp.eq.s32.totalorder %s38, 0
      %p458 = por %p456, %p457
      %p459 = scmp.ne.s32.totalorder %s447, %s448
      %p460 = scmp.eq.s32.totalorder %s39, 1
      %p461 = por %p459, %p460
      %p463 = scmp.ne.s32.totalorder %s448, %s462
      %p464 = scmp.eq.s32.totalorder %s39, 0
      %p465 = por %p463, %p464
      %s467 = sadd.s32 %s466, 1
      %p470 = scmp.eq.s32.totalorder %s33, 1
      %p471 = scmp.ne.s32.totalorder %s466, %s468
      %p472 = scmp.eq.s32.totalorder %s33, 0
      %p473 = por %p471, %p472
      %p474 = scmp.ne.s32.totalorder %s466, %s468
      %p475 = scmp.eq.s32.totalorder %s38, 1
      %p476 = por %p474, %p475
      %p477 = scmp.ne.s32.totalorder %s468, %s469
      %p478 = scmp.eq.s32.totalorder %s38, 0
      %p479 = por %p477, %p478
      %p480 = scmp.ne.s32.totalorder %s468, %s469
      %p481 = scmp.eq.s32.totalorder %s39, 1
      %p482 = por %p480, %p481
      %p484 = scmp.ne.s32.totalorder %s469, %s483
      %p485 = scmp.eq.s32.totalorder %s39, 0
      %p486 = por %p484, %p485
      %s488 = sadd.s32 %s487, 1
      %p491 = scmp.eq.s32.totalorder %s33, 1
      %p492 = scmp.ne.s32.totalorder %s487, %s489
      %p493 = scmp.eq.s32.totalorder %s33, 0
      %p494 = por %p492, %p493
      %p495 = scmp.ne.s32.totalorder %s487, %s489
      %p496 = scmp.eq.s32.totalorder %s38, 1
      %p497 = por %p495, %p496
      %p498 = scmp.ne.s32.totalorder %s489, %s490
      %p499 = scmp.eq.s32.totalorder %s38, 0
      %p500 = por %p498, %p499
      %p501 = scmp.ne.s32.totalorder %s489, %s490
      %p502 = scmp.eq.s32.totalorder %s39, 1
      %p503 = por %p501, %p502
      %p505 = scmp.ne.s32.totalorder %s490, %s504
      %p506 = scmp.eq.s32.totalorder %s39, 0
      %p507 = por %p505, %p506
      %s509 = sadd.s32 %s508, 1
      %p512 = scmp.eq.s32.totalorder %s33, 1
      %p513 = scmp.ne.s32.totalorder %s508, %s510
      %p514 = scmp.eq.s32.totalorder %s33, 0
      %p515 = por %p513, %p514
      %p516 = scmp.ne.s32.totalorder %s508, %s510
      %p517 = scmp.eq.s32.totalorder %s38, 1
      %p518 = por %p516, %p517
      %p519 = scmp.ne.s32.totalorder %s510, %s511
      %p520 = scmp.eq.s32.totalorder %s38, 0
      %p521 = por %p519, %p520
      %p522 = scmp.ne.s32.totalorder %s510, %s511
      %p523 = scmp.eq.s32.totalorder %s39, 1
      %p524 = por %p522, %p523
      %p526 = scmp.ne.s32.totalorder %s511, %s525
      %p527 = scmp.eq.s32.totalorder %s39, 0
      %p528 = por %p526, %p527
      %s530 = sadd.s32 %s529, 1
      %p533 = scmp.eq.s32.totalorder %s33, 1
      %p534 = scmp.ne.s32.totalorder %s529, %s531
      %p535 = scmp.eq.s32.totalorder %s33, 0
      %p536 = por %p534, %p535
      %p537 = scmp.ne.s32.totalorder %s529, %s531
      %p538 = scmp.eq.s32.totalorder %s38, 1
      %p539 = por %p537, %p538
      %p540 = scmp.ne.s32.totalorder %s531, %s532
      %p541 = scmp.eq.s32.totalorder %s38, 0
      %p542 = por %p540, %p541
      %p543 = scmp.ne.s32.totalorder %s531, %s532
      %p544 = scmp.eq.s32.totalorder %s39, 1
      %p545 = por %p543, %p544
      %p547 = scmp.ne.s32.totalorder %s532, %s546
      %p548 = scmp.eq.s32.totalorder %s39, 0
      %p549 = por %p547, %p548
      %s551 = sadd.s32 %s550, 1
      %p554 = scmp.eq.s32.totalorder %s33, 1
      %p555 = scmp.ne.s32.totalorder %s550, %s552
      %p556 = scmp.eq.s32.totalorder %s33, 0
      %p557 = por %p555, %p556
      %p558 = scmp.ne.s32.totalorder %s550, %s552
      %p559 = scmp.eq.s32.totalorder %s38, 1
      %p560 = por %p558, %p559
      %p561 = scmp.ne.s32.totalorder %s552, %s553
      %p562 = scmp.eq.s32.totalorder %s38, 0
      %p563 = por %p561, %p562
      %p564 = scmp.ne.s32.totalorder %s552, %s553
      %p565 = scmp.eq.s32.totalorder %s39, 1
      %p566 = por %p564, %p565
      %p568 = scmp.ne.s32.totalorder %s553, %s567
      %p569 = scmp.eq.s32.totalorder %s39, 0
      %p570 = por %p568, %p569
      %s571 = ssub.s32 %s33, %s40
      %p572 = scmp.eq.s32.totalorder %s571, 0
      %s574 = sadd.s32 %s573, 1
      %s575 = scalar_select %p572, %s573, %s574
      %p578 = pneg %p572
      %p579 = scmp.eq.s32.totalorder %s33, 1
      %p580 = por %p578, %p579
      %p581 = scmp.ne.s32.totalorder %s573, %s576
      %p582 = scmp.eq.s32.totalorder %s33, 0
      %p583 = por %p581, %p582
      %p584 = scmp.ne.s32.totalorder %s573, %s576
      %p585 = scmp.eq.s32.totalorder %s38, 1
      %p586 = por %p584, %p585
      %p587 = scmp.ne.s32.totalorder %s576, %s577
      %p588 = scmp.eq.s32.totalorder %s38, 0
      %p589 = por %p587, %p588
      %p590 = scmp.ne.s32.totalorder %s576, %s577
      %p591 = scmp.eq.s32.totalorder %s39, 1
      %p592 = por %p590, %p591
      %p594 = scmp.ne.s32.totalorder %s577, %s593
      %p595 = scmp.eq.s32.totalorder %s39, 0
      %p596 = por %p594, %p595
      %p597 = scmp.le.s32.totalorder 1, %s33
      %p598 = scmp.lt.s32.totalorder %s33, 3
      %p599 = pnand %p597, %p598
      %p600 = pneg %p599
      // Predicated region
      $region9: #{_lambda_.1} parent=5 // pred_check
        _
      $region10: #{_lambda_.1} parent=5 // pred_check_branch
        %602 = sbr.rel (%p599) target = $region12
      $region11: #{_lambda_.1} parent=5 // pred_region
        %s603 = ssub.s32 %s33, 1
        // Predicated region
        $region13: #{_lambda_.1} parent=11 // pred_check
          %p604 = pneg %p80
        $region14: #{_lambda_.1} parent=11 // pred_check_branch
          %606 = sbr.rel (%p604) target = $region16
        $region15: #{_lambda_.1} parent=11 // pred_region
          %608 = vsyncadd [#allocation3], 0
          %s609 = sshll.u32 %s1, 4
          %s610 = int_to_ptr.hbm [resolvable:$true] %s609
          %s611 = sshll.u32 [#allocation2], 4
          %s612 = int_to_ptr.vmem [resolvable:$true] %s611
          %617 = dma.hbm_to_vmem [thread:$0]  %s610, 256, %s612, [#allocation3], 64, 64, 4
        $region16: #{_lambda_.1} parent=11 // pred_fallthru
          _
        // Predicated region
        $region17: #{_lambda_.1} parent=11 // pred_check
          %p618 = pneg %p101
        $region18: #{_lambda_.1} parent=11 // pred_check_branch
          %620 = sbr.rel (%p618) target = $region20
        $region19: #{_lambda_.1} parent=11 // pred_region
          %622 = vsyncadd [#allocation5], 0
          %s623 = sshll.u32 %s2, 4
          %s624 = int_to_ptr.hbm [resolvable:$true] %s623
          %s625 = sshll.u32 [#allocation4], 4
          %s626 = int_to_ptr.vmem [resolvable:$true] %s625
          %631 = dma.hbm_to_vmem [thread:$0]  %s624, 1024, %s626, [#allocation5], 64, 64, 4
        $region20: #{_lambda_.1} parent=11 // pred_fallthru
          _
        // Predicated region
        $region21: #{_lambda_.1} parent=11 // pred_check
          %p632 = pneg %p122
        $region22: #{_lambda_.1} parent=11 // pred_check_branch
          %634 = sbr.rel (%p632) target = $region24
        $region23: #{_lambda_.1} parent=11 // pred_region
          _
        $region24: #{_lambda_.1} parent=11 // pred_fallthru
          _
        // Predicated region
        $region25: #{_lambda_.1} parent=11 // pred_check
          %p635 = pneg %p143
        $region26: #{_lambda_.1} parent=11 // pred_check_branch
          %637 = sbr.rel (%p635) target = $region28
        $region27: #{_lambda_.1} parent=11 // pred_region
          _
        $region28: #{_lambda_.1} parent=11 // pred_fallthru
          _
        // Predicated region
        $region29: #{_lambda_.1} parent=11 // pred_check
          %p638 = pneg %p164
        $region30: #{_lambda_.1} parent=11 // pred_check_branch
          %640 = sbr.rel (%p638) target = $region32
        $region31: #{_lambda_.1} parent=11 // pred_region
          _
        $region32: #{_lambda_.1} parent=11 // pred_fallthru
          _
        // Predicated region
        $region33: #{_lambda_.1} parent=11 // pred_check
          %p641 = pneg %p185
        $region34: #{_lambda_.1} parent=11 // pred_check_branch
          %643 = sbr.rel (%p641) target = $region36
        $region35: #{_lambda_.1} parent=11 // pred_region
          _
        $region36: #{_lambda_.1} parent=11 // pred_fallthru
          _
        // Predicated region
        $region37: #{_lambda_.1} parent=11 // pred_check
          %p644 = pneg %p206
        $region38: #{_lambda_.1} parent=11 // pred_check_branch
          %646 = sbr.rel (%p644) target = $region40
        $region39: #{_lambda_.1} parent=11 // pred_region
          _
        $region40: #{_lambda_.1} parent=11 // pred_fallthru
          _
        // Predicated region
        $region41: #{_lambda_.1} parent=11 // pred_check
          %p647 = pneg %p227
        $region42: #{_lambda_.1} parent=11 // pred_check_branch
          %649 = sbr.rel (%p647) target = $region44
        $region43: #{_lambda_.1} parent=11 // pred_region
          _
        $region44: #{_lambda_.1} parent=11 // pred_fallthru
          _
        // Predicated region
        $region45: #{_lambda_.1} parent=11 // pred_check
          %p650 = pneg %p248
        $region46: #{_lambda_.1} parent=11 // pred_check_branch
          %652 = sbr.rel (%p650) target = $region48
        $region47: #{_lambda_.1} parent=11 // pred_region
          _
        $region48: #{_lambda_.1} parent=11 // pred_fallthru
          _
        // Predicated region
        $region49: #{_lambda_.1} parent=11 // pred_check
          %p653 = pneg %p269
        $region50: #{_lambda_.1} parent=11 // pred_check_branch
          %655 = sbr.rel (%p653) target = $region52
        $region51: #{_lambda_.1} parent=11 // pred_region
          _
        $region52: #{_lambda_.1} parent=11 // pred_fallthru
          _
        // Predicated region
        $region53: #{_lambda_.1} parent=11 // pred_check
          %p656 = pneg %p290
        $region54: #{_lambda_.1} parent=11 // pred_check_branch
          %658 = sbr.rel (%p656) target = $region56
        $region55: #{_lambda_.1} parent=11 // pred_region
          _
        $region56: #{_lambda_.1} parent=11 // pred_fallthru
          _
        // Predicated region
        $region57: #{_lambda_.1} parent=11 // pred_check
          %p659 = pneg %p311
        $region58: #{_lambda_.1} parent=11 // pred_check_branch
          %661 = sbr.rel (%p659) target = $region60
        $region59: #{_lambda_.1} parent=11 // pred_region
          _
        $region60: #{_lambda_.1} parent=11 // pred_fallthru
          _
        // Predicated region
        $region61: #{_lambda_.1} parent=11 // pred_check
          %p662 = pneg %p332
        $region62: #{_lambda_.1} parent=11 // pred_check_branch
          %664 = sbr.rel (%p662) target = $region64
        $region63: #{_lambda_.1} parent=11 // pred_region
          %666 = vsyncadd [#allocation5], 0
          %s668 = sshll.u32 %s13, 4
          %s669 = int_to_ptr.hbm [resolvable:$true] %s668
          %s670 = sshll.u32 [#allocation6], 4
          %s671 = int_to_ptr.vmem [resolvable:$true] %s670
          %673 = dma.hbm_to_vmem [thread:$0]  %s669, 16, %s671, [#allocation5]
        $region64: #{_lambda_.1} parent=11 // pred_fallthru
          _
        // Predicated region
        $region65: #{_lambda_.1} parent=11 // pred_check
          %p674 = pneg %p353
        $region66: #{_lambda_.1} parent=11 // pred_check_branch
          %676 = sbr.rel (%p674) target = $region68
        $region67: #{_lambda_.1} parent=11 // pred_region
          _
        $region68: #{_lambda_.1} parent=11 // pred_fallthru
          _
        // Predicated region
        $region69: #{_lambda_.1} parent=11 // pred_check
          %p677 = pneg %p374
        $region70: #{_lambda_.1} parent=11 // pred_check_branch
          %679 = sbr.rel (%p677) target = $region72
        $region71: #{_lambda_.1} parent=11 // pred_region
          _
        $region72: #{_lambda_.1} parent=11 // pred_fallthru
          _
        // Predicated region
        $region73: #{_lambda_.1} parent=11 // pred_check
          %p680 = pneg %p395
        $region74: #{_lambda_.1} parent=11 // pred_check_branch
          %682 = sbr.rel (%p680) target = $region76
        $region75: #{_lambda_.1} parent=11 // pred_region
          _
        $region76: #{_lambda_.1} parent=11 // pred_fallthru
          _
        // Predicated region
        $region77: #{_lambda_.1} parent=11 // pred_check
          %p683 = pneg %p416
        $region78: #{_lambda_.1} parent=11 // pred_check_branch
          %685 = sbr.rel (%p683) target = $region80
        $region79: #{_lambda_.1} parent=11 // pred_region
          _
        $region80: #{_lambda_.1} parent=11 // pred_fallthru
          _
        // Predicated region
        $region81: #{_lambda_.1} parent=11 // pred_check
          %p686 = pneg %p437
        $region82: #{_lambda_.1} parent=11 // pred_check_branch
          %688 = sbr.rel (%p686) target = $region84
        $region83: #{_lambda_.1} parent=11 // pred_region
          _
        $region84: #{_lambda_.1} parent=11 // pred_fallthru
          _
        // Predicated region
        $region85: #{_lambda_.1} parent=11 // pred_check
          %p689 = pneg %p458
        $region86: #{_lambda_.1} parent=11 // pred_check_branch
          %691 = sbr.rel (%p689) target = $region88
        $region87: #{_lambda_.1} parent=11 // pred_region
          _
        $region88: #{_lambda_.1} parent=11 // pred_fallthru
          _
        // Predicated region
        $region89: #{_lambda_.1} parent=11 // pred_check
          %p692 = pneg %p479
        $region90: #{_lambda_.1} parent=11 // pred_check_branch
          %694 = sbr.rel (%p692) target = $region92
        $region91: #{_lambda_.1} parent=11 // pred_region
          _
        $region92: #{_lambda_.1} parent=11 // pred_fallthru
          _
        // Predicated region
        $region93: #{_lambda_.1} parent=11 // pred_check
          %p695 = pneg %p500
        $region94: #{_lambda_.1} parent=11 // pred_check_branch
          %697 = sbr.rel (%p695) target = $region96
        $region95: #{_lambda_.1} parent=11 // pred_region
          _
        $region96: #{_lambda_.1} parent=11 // pred_fallthru
          _
        // Predicated region
        $region97: #{_lambda_.1} parent=11 // pred_check
          %p698 = pneg %p521
        $region98: #{_lambda_.1} parent=11 // pred_check_branch
          %700 = sbr.rel (%p698) target = $region100
        $region99: #{_lambda_.1} parent=11 // pred_region
          _
        $region100: #{_lambda_.1} parent=11 // pred_fallthru
          _
        // Predicated region
        $region101: #{_lambda_.1} parent=11 // pred_check
          %p701 = pneg %p542
        $region102: #{_lambda_.1} parent=11 // pred_check_branch
          %703 = sbr.rel (%p701) target = $region104
        $region103: #{_lambda_.1} parent=11 // pred_region
          _
        $region104: #{_lambda_.1} parent=11 // pred_fallthru
          _
        // Predicated region
        $region105: #{_lambda_.1} parent=11 // pred_check
          %p704 = pneg %p563
        $region106: #{_lambda_.1} parent=11 // pred_check_branch
          %706 = sbr.rel (%p704) target = $region108
        $region107: #{_lambda_.1} parent=11 // pred_region
          _
        $region108: #{_lambda_.1} parent=11 // pred_fallthru
          _
      $region12: #{_lambda_.1} parent=5 // pred_fallthru
        _
      %p707 = scmp.lt.s32.totalorder %s33, 2
      // Predicated region
      $region109: #{_lambda_.1} parent=5 // pred_check
        %p708 = pneg %p707
      $region110: #{_lambda_.1} parent=5 // pred_check_branch
        %710 = sbr.rel (%p708) target = $region112
      $region111: #{_lambda_.1} parent=5 // pred_region
        // Predicated region
        $region113: #{_lambda_.1} parent=111 // pred_check
          %p711 = pneg %p53
        $region114: #{_lambda_.1} parent=111 // pred_check_branch
          %713 = sbr.rel (%p711) target = $region116
        $region115: #{_lambda_.1} parent=111 // pred_region
          %s714 = smul.u32 32, %s33
          %p715 = scmp.lt.s32.totalorder %s714, 63
          %s716 = scalar_select %p715, %s714, 63
          %s717 = smul.addr %s716, 8
          %s718 = scalar_lea.vmem %s0, %s717
          %s719 = smul.u32 32, %s33
        $region116: #{_lambda_.1} parent=111 // pred_fallthru
          _
      $region112: #{_lambda_.1} parent=5 // pred_fallthru
        _
      %p720 = scmp.le.s32.totalorder 1, %s33
      %p721 = scmp.lt.s32.totalorder %s33, 3
      %p722 = pnand %p720, %p721
      %p723 = pneg %p722
      // Predicated region
      $region117: #{_lambda_.1} parent=5 // pred_check
        _
      $region118: #{_lambda_.1} parent=5 // pred_check_branch
        %725 = sbr.rel (%p722) target = $region120
      $region119: #{_lambda_.1} parent=5 // pred_region
        %s726 = ssub.s32 %s33, 1
        // Predicated region
        $region121: #{_lambda_.1} parent=119 // pred_check
          %p727 = pneg %p80
        $region122: #{_lambda_.1} parent=119 // pred_check_branch
          %729 = sbr.rel (%p727) target = $region124
        $region123: #{_lambda_.1} parent=119 // pred_region
          %731 = dma.done [#allocation3], 256
        $region124: #{_lambda_.1} parent=119 // pred_fallthru
          _
        // Predicated region
        $region125: #{_lambda_.1} parent=119 // pred_check
          %p732 = pneg %p101
        $region126: #{_lambda_.1} parent=119 // pred_check_branch
          %734 = sbr.rel (%p732) target = $region128
        $region127: #{_lambda_.1} parent=119 // pred_region
          %736 = dma.done [#allocation5], 1024
        $region128: #{_lambda_.1} parent=119 // pred_fallthru
          _
        // Predicated region
        $region129: #{_lambda_.1} parent=119 // pred_check
          %p737 = pneg %p332
        $region130: #{_lambda_.1} parent=119 // pred_check_branch
          %739 = sbr.rel (%p737) target = $region132
        $region131: #{_lambda_.1} parent=119 // pred_region
          %741 = dma.done [#allocation5], 16
        $region132: #{_lambda_.1} parent=119 // pred_fallthru
          _
        %s742 = smul.u32 32, %s38
        %p743 = scmp.lt.s32.totalorder %s742, 63
        %s744 = scalar_select %p743, %s742, 63
        %s745 = smul.addr %s744, 8
        %s746 = scalar_lea.vmem %s0, %s745
        %p747 = pneg %p59
        %p748 = pneg %p56
        %p749 = pneg %p80
        %p750 = pneg %p77
        %p751 = pneg %p101
        %p752 = pneg %p98
        %p753 = pneg %p122
        %p754 = pneg %p119
        %p755 = pneg %p143
        %p756 = pneg %p140
        %p757 = pneg %p164
        %p758 = pneg %p161
        %p759 = pneg %p185
        %p760 = pneg %p182
        %p761 = pneg %p206
        %p762 = pneg %p203
        %p763 = pneg %p227
        %p764 = pneg %p224
        %p765 = pneg %p248
        %p766 = pneg %p245
        %p767 = pneg %p269
        %p768 = pneg %p266
        %p769 = pneg %p290
        %p770 = pneg %p287
        %p771 = pneg %p311
        %p772 = pneg %p308
        %p773 = pneg %p332
        %p774 = pneg %p329
        %p775 = pneg %p353
        %p776 = pneg %p350
        %p777 = pneg %p374
        %p778 = pneg %p371
        %p779 = pneg %p395
        %p780 = pneg %p392
        %p781 = pneg %p416
        %p782 = pneg %p413
        %p783 = pneg %p437
        %p784 = pneg %p434
        %p785 = pneg %p458
        %p786 = pneg %p455
        %p787 = pneg %p479
        %p788 = pneg %p476
        %p789 = pneg %p500
        %p790 = pneg %p497
        %p791 = pneg %p521
        %p792 = pneg %p518
        %p793 = pneg %p542
        %p794 = pneg %p539
        %p795 = pneg %p563
        %p796 = pneg %p560
        %p797 = pneg %p589
        %p798 = pneg %p586
        %s799 = smul.u32 32, %s38
        %p800 = scmp.lt.s32.totalorder %s799, 63
        %s801 = scalar_select %p800, %s799, 63
        %s802 = smul.addr %s801, 8
        %s803 = scalar_lea.vmem %s25, %s802
        %s804 = smul.u32 32, %s38
        %p805 = scmp.lt.s32.totalorder %s804, 63
        %s806 = scalar_select %p805, %s804, 63
        %s807 = smul.addr %s806, 8
        %s808 = scalar_lea.vmem %s0, %s807
        %s809 = smul.u32 32, %s38
        %s810 = smul.u32 32, %s38
        %p811 = scmp.lt.s32.totalorder %s810, 63
        %s812 = scalar_select %p811, %s810, 63
        %s813 = smul.addr %s812, 8
        %s814 = scalar_lea.vmem %s25, %s813
        %s815 = smul.u32 32, %s38
        %v817 = vld [vmem:[%s808] sm:$0xff]
        %v818 = vld [vmem:[%s808 + $0x8] sm:$0xff]
        %v819 = vld [vmem:[%s808 + $0x10] sm:$0xff]
        %v820 = vld [vmem:[%s808 + $0x18] sm:$0xff]
        %v821 = vld [vmem:[%s808 + $0x20] sm:$0xff]
        %v822 = vld [vmem:[%s808 + $0x28] sm:$0xff]
        %v823 = vld [vmem:[%s808 + $0x30] sm:$0xff]
        %v824 = vld [vmem:[%s808 + $0x38] sm:$0xff]
        %v825 = vld [vmem:[%s808 + $0x40] sm:$0xff]
        %v826 = vld [vmem:[%s808 + $0x48] sm:$0xff]
        %v827 = vld [vmem:[%s808 + $0x50] sm:$0xff]
        %v828 = vld [vmem:[%s808 + $0x58] sm:$0xff]
        %v829 = vld [vmem:[%s808 + $0x60] sm:$0xff]
        %v830 = vld [vmem:[%s808 + $0x68] sm:$0xff]
        %v831 = vld [vmem:[%s808 + $0x70] sm:$0xff]
        %v832 = vld [vmem:[%s808 + $0x78] sm:$0xff]
        %v833 = vld [vmem:[%s808 + $0x80] sm:$0xff]
        %v834 = vld [vmem:[%s808 + $0x88] sm:$0xff]
        %v835 = vld [vmem:[%s808 + $0x90] sm:$0xff]
        %v836 = vld [vmem:[%s808 + $0x98] sm:$0xff]
        %v837 = vld [vmem:[%s808 + $0xa0] sm:$0xff]
        %v838 = vld [vmem:[%s808 + $0xa8] sm:$0xff]
        %v839 = vld [vmem:[%s808 + $0xb0] sm:$0xff]
        %v840 = vld [vmem:[%s808 + $0xb8] sm:$0xff]
        %v841 = vld [vmem:[%s808 + $0xc0] sm:$0xff]
        %v842 = vld [vmem:[%s808 + $0xc8] sm:$0xff]
        %v843 = vld [vmem:[%s808 + $0xd0] sm:$0xff]
        %v844 = vld [vmem:[%s808 + $0xd8] sm:$0xff]
        %v845 = vld [vmem:[%s808 + $0xe0] sm:$0xff]
        %v846 = vld [vmem:[%s808 + $0xe8] sm:$0xff]
        %v847 = vld [vmem:[%s808 + $0xf0] sm:$0xff]
        %v848 = vld [vmem:[%s808 + $0xf8] sm:$0xff]
        %v849 = vld [vmem:[#allocation2] sm:$0xf]
        %v850 = vld [vmem:[#allocation2 + $0x4] sm:$0xf]
        %v851 = vld [vmem:[#allocation2 + $0x8] sm:$0xf]
        %v852 = vld [vmem:[#allocation2 + $0xc] sm:$0xf]
        %v853 = vld [vmem:[#allocation6] sm:$0x1]
        %v854 = vunpack.c.l.bf16 %v853
        %v855 = vpack.c.bf16 %v818, %v817
        %v856 = vpack.c.bf16 %v820, %v819
        %v857 = vpack.c.bf16 %v822, %v821
        %v858 = vpack.c.bf16 %v824, %v823
        %v859 = vpack.c.bf16 %v826, %v825
        %v860 = vpack.c.bf16 %v828, %v827
        %v861 = vpack.c.bf16 %v830, %v829
        %v862 = vpack.c.bf16 %v832, %v831
        %v863 = vperm.slane %v854, 0
        %v868 = vunpack.c.l.b16 %v849
        %v869 = vunpack.c.l.b16 %v850
        %v870 = vunpack.c.l.b16 %v851
        %v871 = vunpack.c.l.b16 %v852
        %v872 = vpack.c.b16 %v869, %v868
        %v873 = vpack.c.b16 %v871, %v870
        %vm876 = vcmask 261120
        %v878 = vsel %vm876, %v855, 0
        %v881 = vsel %vm876, %v856, 0
        %v884 = vsel %vm876, %v857, 0
        %v887 = vsel %vm876, %v858, 0
        %v890 = vsel %vm876, %v859, 0
        %v893 = vsel %vm876, %v860, 0
        %v896 = vsel %vm876, %v861, 0
        %v899 = vsel %vm876, %v862, 0
        %901 = vmatpush.bf16.msra.mxu0 0
        %902 = vmatpush.bf16.msra.mxu0 0
        %903 = vmatpush.bf16.msra.mxu0 0
        %904 = vmatpush.bf16.msra.mxu0 0
        %905 = vmatpush.bf16.msra.mxu0 0
        %906 = vmatpush.bf16.msra.mxu0 0
        %907 = vmatpush.bf16.msra.mxu0 %v873
        %908 = vmatpush.bf16.msra.mxu0 %v872
        %909 = vmatmul.bf16.gmra.mxu0 %v878
        %v910 = vpop.f32.mrf.mxu0
        %v911 = vadd.f32 %v863, %v910
        %v912 = vpop.f32.mrf.mxu0
        %v913 = vadd.f32 %v863, %v912
        %914 = vmatmul.bf16.gmra.mxu0 %v881
        %v915 = vpop.f32.mrf.mxu0
        %v916 = vadd.f32 %v863, %v915
        %v917 = vpop.f32.mrf.mxu0
        %v918 = vadd.f32 %v863, %v917
        %919 = vmatmul.bf16.gmra.mxu0 %v884
        %v920 = vpop.f32.mrf.mxu0
        %v921 = vadd.f32 %v863, %v920
        %v922 = vpop.f32.mrf.mxu0
        %v923 = vadd.f32 %v863, %v922
        %924 = vmatmul.bf16.gmra.mxu0 %v887
        %v925 = vpop.f32.mrf.mxu0
        %v926 = vadd.f32 %v863, %v925
        %v927 = vpop.f32.mrf.mxu0
        %v928 = vadd.f32 %v863, %v927
        %929 = vmatmul.bf16.gmra.mxu0 %v890
        %v930 = vpop.f32.mrf.mxu0
        %v931 = vadd.f32 %v863, %v930
        %v932 = vpop.f32.mrf.mxu0
        %v933 = vadd.f32 %v863, %v932
        %934 = vmatmul.bf16.gmra.mxu0 %v893
        %v935 = vpop.f32.mrf.mxu0
        %v936 = vadd.f32 %v863, %v935
        %v937 = vpop.f32.mrf.mxu0
        %v938 = vadd.f32 %v863, %v937
        %939 = vmatmul.bf16.gmra.mxu0 %v896
        %v940 = vpop.f32.mrf.mxu0
        %v941 = vadd.f32 %v863, %v940
        %v942 = vpop.f32.mrf.mxu0
        %v943 = vadd.f32 %v863, %v942
        %944 = vmatmul.bf16.gmra.mxu0 %v899
        %v945 = vpop.f32.mrf.mxu0
        %v946 = vadd.f32 %v863, %v945
        %v947 = vpop.f32.mrf.mxu0
        %v948 = vadd.f32 %v863, %v947
        %949 = vdwg.mxu0
        %v950 = vmax.f32 %v911, 0.0
        %v951 = vmax.f32 %v913, 0.0
        %v952 = vmax.f32 %v916, 0.0
        %v953 = vmax.f32 %v918, 0.0
        %v954 = vmax.f32 %v921, 0.0
        %v955 = vmax.f32 %v923, 0.0
        %v956 = vmax.f32 %v926, 0.0
        %v957 = vmax.f32 %v928, 0.0
        %v958 = vmax.f32 %v931, 0.0
        %v959 = vmax.f32 %v933, 0.0
        %v960 = vmax.f32 %v936, 0.0
        %v961 = vmax.f32 %v938, 0.0
        %v962 = vmax.f32 %v941, 0.0
        %v963 = vmax.f32 %v943, 0.0
        %v964 = vmax.f32 %v946, 0.0
        %v965 = vmax.f32 %v948, 0.0
        %v966 = vpack.c.bf16 %v834, %v833
        %v967 = vpack.c.bf16 %v836, %v835
        %v968 = vpack.c.bf16 %v838, %v837
        %v969 = vpack.c.bf16 %v840, %v839
        %v970 = vpack.c.bf16 %v842, %v841
        %v971 = vpack.c.bf16 %v844, %v843
        %v972 = vpack.c.bf16 %v846, %v845
        %v973 = vpack.c.bf16 %v848, %v847
        %v975 = vsel %vm876, %v966, 0
        %v978 = vsel %vm876, %v967, 0
        %v981 = vsel %vm876, %v968, 0
        %v984 = vsel %vm876, %v969, 0
        %v987 = vsel %vm876, %v970, 0
        %v990 = vsel %vm876, %v971, 0
        %v993 = vsel %vm876, %v972, 0
        %v996 = vsel %vm876, %v973, 0
        %998 = vmatpush.bf16.msra.mxu0 0
        %999 = vmatpush.bf16.msra.mxu0 0
        %1000 = vmatpush.bf16.msra.mxu0 0
        %1001 = vmatpush.bf16.msra.mxu0 0
        %1002 = vmatpush.bf16.msra.mxu0 0
        %1003 = vmatpush.bf16.msra.mxu0 0
        %1004 = vmatpush.bf16.msra.mxu0 %v873
        %1005 = vmatpush.bf16.msra.mxu0 %v872
        %1006 = vmatmul.bf16.gmra.mxu0 %v975
        %v1007 = vpop.f32.mrf.mxu0
        %v1008 = vadd.f32 %v863, %v1007
        %v1009 = vpop.f32.mrf.mxu0
        %v1010 = vadd.f32 %v863, %v1009
        %1011 = vmatmul.bf16.gmra.mxu0 %v978
        %v1012 = vpop.f32.mrf.mxu0
        %v1013 = vadd.f32 %v863, %v1012
        %v1014 = vpop.f32.mrf.mxu0
        %v1015 = vadd.f32 %v863, %v1014
        %1016 = vmatmul.bf16.gmra.mxu0 %v981
        %v1017 = vpop.f32.mrf.mxu0
        %v1018 = vadd.f32 %v863, %v1017
        %v1019 = vpop.f32.mrf.mxu0
        %v1020 = vadd.f32 %v863, %v1019
        %1021 = vmatmul.bf16.gmra.mxu0 %v984
        %v1022 = vpop.f32.mrf.mxu0
        %v1023 = vadd.f32 %v863, %v1022
        %v1024 = vpop.f32.mrf.mxu0
        %v1025 = vadd.f32 %v863, %v1024
        %1026 = vmatmul.bf16.gmra.mxu0 %v987
        %v1027 = vpop.f32.mrf.mxu0
        %v1028 = vadd.f32 %v863, %v1027
        %v1029 = vpop.f32.mrf.mxu0
        %v1030 = vadd.f32 %v863, %v1029
        %1031 = vmatmul.bf16.gmra.mxu0 %v990
        %v1032 = vpop.f32.mrf.mxu0
        %v1033 = vadd.f32 %v863, %v1032
        %v1034 = vpop.f32.mrf.mxu0
        %v1035 = vadd.f32 %v863, %v1034
        %1036 = vmatmul.bf16.gmra.mxu0 %v993
        %v1037 = vpop.f32.mrf.mxu0
        %v1038 = vadd.f32 %v863, %v1037
        %v1039 = vpop.f32.mrf.mxu0
        %v1040 = vadd.f32 %v863, %v1039
        %1041 = vmatmul.bf16.gmra.mxu0 %v996
        %v1042 = vpop.f32.mrf.mxu0
        %v1043 = vadd.f32 %v863, %v1042
        %v1044 = vpop.f32.mrf.mxu0
        %v1045 = vadd.f32 %v863, %v1044
        %1046 = vdwg.mxu0
        %v1047 = vmax.f32 %v1008, 0.0
        %v1048 = vmax.f32 %v1010, 0.0
        %v1049 = vmax.f32 %v1013, 0.0
        %v1050 = vmax.f32 %v1015, 0.0
        %v1051 = vmax.f32 %v1018, 0.0
        %v1052 = vmax.f32 %v1020, 0.0
        %v1053 = vmax.f32 %v1023, 0.0
        %v1054 = vmax.f32 %v1025, 0.0
        %v1055 = vmax.f32 %v1028, 0.0
        %v1056 = vmax.f32 %v1030, 0.0
        %v1057 = vmax.f32 %v1033, 0.0
        %v1058 = vmax.f32 %v1035, 0.0
        %v1059 = vmax.f32 %v1038, 0.0
        %v1060 = vmax.f32 %v1040, 0.0
        %v1061 = vmax.f32 %v1043, 0.0
        %v1062 = vmax.f32 %v1045, 0.0
        %v1063 = vld [vmem:[#allocation4] sm:$0xf]
        %v1064 = vld [vmem:[#allocation4 + $0x4] sm:$0xf]
        %v1065 = vld [vmem:[#allocation4 + $0x8] sm:$0xf]
        %v1066 = vld [vmem:[#allocation4 + $0xc] sm:$0xf]
        %v1067 = vld [vmem:[#allocation4 + $0x10] sm:$0xf]
        %v1068 = vld [vmem:[#allocation4 + $0x14] sm:$0xf]
        %v1069 = vld [vmem:[#allocation4 + $0x18] sm:$0xf]
        %v1070 = vld [vmem:[#allocation4 + $0x1c] sm:$0xf]
        %v1071 = vld [vmem:[#allocation4 + $0x20] sm:$0xf]
        %v1072 = vld [vmem:[#allocation4 + $0x24] sm:$0xf]
        %v1073 = vld [vmem:[#allocation4 + $0x28] sm:$0xf]
        %v1074 = vld [vmem:[#allocation4 + $0x2c] sm:$0xf]
        %v1075 = vld [vmem:[#allocation4 + $0x30] sm:$0xf]
        %v1076 = vld [vmem:[#allocation4 + $0x34] sm:$0xf]
        %v1077 = vld [vmem:[#allocation4 + $0x38] sm:$0xf]
        %v1078 = vld [vmem:[#allocation4 + $0x3c] sm:$0xf]
        %v1079 = vld [vmem:[%s14] sm:$0x1]
        %v1080 = vunpack.c.l.bf16 %v1079
        %v1081 = vpack.c.bf16 %v951, %v950
        %v1082 = vpack.c.bf16 %v953, %v952
        %v1083 = vpack.c.bf16 %v955, %v954
        %v1084 = vpack.c.bf16 %v957, %v956
        %v1085 = vpack.c.bf16 %v959, %v958
        %v1086 = vpack.c.bf16 %v961, %v960
        %v1087 = vpack.c.bf16 %v963, %v962
        %v1088 = vpack.c.bf16 %v965, %v964
        %v1089 = vperm.slane %v1080, 0
        %v1106 = vunpack.c.l.b16 %v1063
        %v1107 = vunpack.c.l.b16 %v1064
        %v1108 = vunpack.c.l.b16 %v1065
        %v1109 = vunpack.c.l.b16 %v1066
        %v1110 = vunpack.c.l.b16 %v1067
        %v1111 = vunpack.c.l.b16 %v1068
        %v1112 = vunpack.c.l.b16 %v1069
        %v1113 = vunpack.c.l.b16 %v1070
        %v1114 = vunpack.c.l.b16 %v1071
        %v1115 = vunpack.c.l.b16 %v1072
        %v1116 = vunpack.c.l.b16 %v1073
        %v1117 = vunpack.c.l.b16 %v1074
        %v1118 = vunpack.c.l.b16 %v1075
        %v1119 = vunpack.c.l.b16 %v1076
        %v1120 = vunpack.c.l.b16 %v1077
        %v1121 = vunpack.c.l.b16 %v1078
        %v1122 = vpack.c.b16 %v1107, %v1106
        %v1123 = vpack.c.b16 %v1109, %v1108
        %v1124 = vpack.c.b16 %v1111, %v1110
        %v1125 = vpack.c.b16 %v1113, %v1112
        %v1126 = vpack.c.b16 %v1115, %v1114
        %v1127 = vpack.c.b16 %v1117, %v1116
        %v1128 = vpack.c.b16 %v1119, %v1118
        %v1129 = vpack.c.b16 %v1121, %v1120
        %1138 = vmatpush.bf16.msra.mxu0 %v1129
        %1139 = vmatpush.bf16.msra.mxu0 %v1128
        %1140 = vmatpush.bf16.msra.mxu0 %v1127
        %1141 = vmatpush.bf16.msra.mxu0 %v1126
        %1142 = vmatpush.bf16.msra.mxu0 %v1125
        %1143 = vmatpush.bf16.msra.mxu0 %v1124
        %1144 = vmatpush.bf16.msra.mxu0 %v1123
        %1145 = vmatpush.bf16.msra.mxu0 %v1122
        %1146 = vmatmul.bf16.gmra.mxu0 %v1081
        %v1147 = vpop.f32.mrf.mxu0
        %v1148 = vadd.f32 %v1089, %v1147
        %v1149 = vpop.f32.mrf.mxu0
        %v1150 = vadd.f32 %v1089, %v1149
        %1151 = vmatmul.bf16.gmra.mxu0 %v1082
        %v1152 = vpop.f32.mrf.mxu0
        %v1153 = vadd.f32 %v1089, %v1152
        %v1154 = vpop.f32.mrf.mxu0
        %v1155 = vadd.f32 %v1089, %v1154
        %1156 = vmatmul.bf16.gmra.mxu0 %v1083
        %v1157 = vpop.f32.mrf.mxu0
        %v1158 = vadd.f32 %v1089, %v1157
        %v1159 = vpop.f32.mrf.mxu0
        %v1160 = vadd.f32 %v1089, %v1159
        %1161 = vmatmul.bf16.gmra.mxu0 %v1084
        %v1162 = vpop.f32.mrf.mxu0
        %v1163 = vadd.f32 %v1089, %v1162
        %v1164 = vpop.f32.mrf.mxu0
        %v1165 = vadd.f32 %v1089, %v1164
        %1166 = vmatmul.bf16.gmra.mxu0 %v1085
        %v1167 = vpop.f32.mrf.mxu0
        %v1168 = vadd.f32 %v1089, %v1167
        %v1169 = vpop.f32.mrf.mxu0
        %v1170 = vadd.f32 %v1089, %v1169
        %1171 = vmatmul.bf16.gmra.mxu0 %v1086
        %v1172 = vpop.f32.mrf.mxu0
        %v1173 = vadd.f32 %v1089, %v1172
        %v1174 = vpop.f32.mrf.mxu0
        %v1175 = vadd.f32 %v1089, %v1174
        %1176 = vmatmul.bf16.gmra.mxu0 %v1087
        %v1177 = vpop.f32.mrf.mxu0
        %v1178 = vadd.f32 %v1089, %v1177
        %v1179 = vpop.f32.mrf.mxu0
        %v1180 = vadd.f32 %v1089, %v1179
        %1181 = vmatmul.bf16.gmra.mxu0 %v1088
        %v1182 = vpop.f32.mrf.mxu0
        %v1183 = vadd.f32 %v1089, %v1182
        %v1184 = vpop.f32.mrf.mxu0
        %v1185 = vadd.f32 %v1089, %v1184
        %1186 = vdwg.mxu0
        %v1187 = vmax.f32 %v1148, 0.0
        %v1188 = vmax.f32 %v1150, 0.0
        %v1189 = vmax.f32 %v1153, 0.0
        %v1190 = vmax.f32 %v1155, 0.0
        %v1191 = vmax.f32 %v1158, 0.0
        %v1192 = vmax.f32 %v1160, 0.0
        %v1193 = vmax.f32 %v1163, 0.0
        %v1194 = vmax.f32 %v1165, 0.0
        %v1195 = vmax.f32 %v1168, 0.0
        %v1196 = vmax.f32 %v1170, 0.0
        %v1197 = vmax.f32 %v1173, 0.0
        %v1198 = vmax.f32 %v1175, 0.0
        %v1199 = vmax.f32 %v1178, 0.0
        %v1200 = vmax.f32 %v1180, 0.0
        %v1201 = vmax.f32 %v1183, 0.0
        %v1202 = vmax.f32 %v1185, 0.0
        %v1203 = vpack.c.bf16 %v1048, %v1047
        %v1204 = vpack.c.bf16 %v1050, %v1049
        %v1205 = vpack.c.bf16 %v1052, %v1051
        %v1206 = vpack.c.bf16 %v1054, %v1053
        %v1207 = vpack.c.bf16 %v1056, %v1055
        %v1208 = vpack.c.bf16 %v1058, %v1057
        %v1209 = vpack.c.bf16 %v1060, %v1059
        %v1210 = vpack.c.bf16 %v1062, %v1061
        %1211 = vmatpush.bf16.msra.mxu0 %v1129
        %1212 = vmatpush.bf16.msra.mxu0 %v1128
        %1213 = vmatpush.bf16.msra.mxu0 %v1127
        %1214 = vmatpush.bf16.msra.mxu0 %v1126
        %1215 = vmatpush.bf16.msra.mxu0 %v1125
        %1216 = vmatpush.bf16.msra.mxu0 %v1124
        %1217 = vmatpush.bf16.msra.mxu0 %v1123
        %1218 = vmatpush.bf16.msra.mxu0 %v1122
        %1219 = vmatmul.bf16.gmra.mxu0 %v1203
        %v1220 = vpop.f32.mrf.mxu0
        %v1221 = vadd.f32 %v1089, %v1220
        %v1222 = vpop.f32.mrf.mxu0
        %v1223 = vadd.f32 %v1089, %v1222
        %1224 = vmatmul.bf16.gmra.mxu0 %v1204
        %v1225 = vpop.f32.mrf.mxu0
        %v1226 = vadd.f32 %v1089, %v1225
        %v1227 = vpop.f32.mrf.mxu0
        %v1228 = vadd.f32 %v1089, %v1227
        %1229 = vmatmul.bf16.gmra.mxu0 %v1205
        %v1230 = vpop.f32.mrf.mxu0
        %v1231 = vadd.f32 %v1089, %v1230
        %v1232 = vpop.f32.mrf.mxu0
        %v1233 = vadd.f32 %v1089, %v1232
        %1234 = vmatmul.bf16.gmra.mxu0 %v1206
        %v1235 = vpop.f32.mrf.mxu0
        %v1236 = vadd.f32 %v1089, %v1235
        %v1237 = vpop.f32.mrf.mxu0
        %v1238 = vadd.f32 %v1089, %v1237
        %1239 = vmatmul.bf16.gmra.mxu0 %v1207
        %v1240 = vpop.f32.mrf.mxu0
        %v1241 = vadd.f32 %v1089, %v1240
        %v1242 = vpop.f32.mrf.mxu0
        %v1243 = vadd.f32 %v1089, %v1242
        %1244 = vmatmul.bf16.gmra.mxu0 %v1208
        %v1245 = vpop.f32.mrf.mxu0
        %v1246 = vadd.f32 %v1089, %v1245
        %v1247 = vpop.f32.mrf.mxu0
        %v1248 = vadd.f32 %v1089, %v1247
        %1249 = vmatmul.bf16.gmra.mxu0 %v1209
        %v1250 = vpop.f32.mrf.mxu0
        %v1251 = vadd.f32 %v1089, %v1250
        %v1252 = vpop.f32.mrf.mxu0
        %v1253 = vadd.f32 %v1089, %v1252
        %1254 = vmatmul.bf16.gmra.mxu0 %v1210
        %v1255 = vpop.f32.mrf.mxu0
        %v1256 = vadd.f32 %v1089, %v1255
        %v1257 = vpop.f32.mrf.mxu0
        %v1258 = vadd.f32 %v1089, %v1257
        %1259 = vdwg.mxu0
        %v1260 = vmax.f32 %v1221, 0.0
        %v1261 = vmax.f32 %v1223, 0.0
        %v1262 = vmax.f32 %v1226, 0.0
        %v1263 = vmax.f32 %v1228, 0.0
        %v1264 = vmax.f32 %v1231, 0.0
        %v1265 = vmax.f32 %v1233, 0.0
        %v1266 = vmax.f32 %v1236, 0.0
        %v1267 = vmax.f32 %v1238, 0.0
        %v1268 = vmax.f32 %v1241, 0.0
        %v1269 = vmax.f32 %v1243, 0.0
        %v1270 = vmax.f32 %v1246, 0.0
        %v1271 = vmax.f32 %v1248, 0.0
        %v1272 = vmax.f32 %v1251, 0.0
        %v1273 = vmax.f32 %v1253, 0.0
        %v1274 = vmax.f32 %v1256, 0.0
        %v1275 = vmax.f32 %v1258, 0.0
        %v1276 = vld [vmem:[%s3] sm:$0xf]
        %v1277 = vld [vmem:[%s3 + $0x4] sm:$0xf]
        %v1278 = vld [vmem:[%s3 + $0x8] sm:$0xf]
        %v1279 = vld [vmem:[%s3 + $0xc] sm:$0xf]
        %v1280 = vld [vmem:[%s3 + $0x10] sm:$0xf]
        %v1281 = vld [vmem:[%s3 + $0x14] sm:$0xf]
        %v1282 = vld [vmem:[%s3 + $0x18] sm:$0xf]
        %v1283 = vld [vmem:[%s3 + $0x1c] sm:$0xf]
        %v1284 = vld [vmem:[%s3 + $0x20] sm:$0xf]
        %v1285 = vld [vmem:[%s3 + $0x24] sm:$0xf]
        %v1286 = vld [vmem:[%s3 + $0x28] sm:$0xf]
        %v1287 = vld [vmem:[%s3 + $0x2c] sm:$0xf]
        %v1288 = vld [vmem:[%s3 + $0x30] sm:$0xf]
        %v1289 = vld [vmem:[%s3 + $0x34] sm:$0xf]
        %v1290 = vld [vmem:[%s3 + $0x38] sm:$0xf]
        %v1291 = vld [vmem:[%s3 + $0x3c] sm:$0xf]
        %v1292 = vld [vmem:[%s15] sm:$0x1]
        %v1293 = vunpack.c.l.bf16 %v1292
        %v1294 = vpack.c.bf16 %v1188, %v1187
        %v1295 = vpack.c.bf16 %v1190, %v1189
        %v1296 = vpack.c.bf16 %v1192, %v1191
        %v1297 = vpack.c.bf16 %v1194, %v1193
        %v1298 = vpack.c.bf16 %v1196, %v1195
        %v1299 = vpack.c.bf16 %v1198, %v1197
        %v1300 = vpack.c.bf16 %v1200, %v1199
        %v1301 = vpack.c.bf16 %v1202, %v1201
        %v1302 = vperm.slane %v1293, 0
        %v1319 = vunpack.c.l.b16 %v1276
        %v1320 = vunpack.c.l.b16 %v1277
        %v1321 = vunpack.c.l.b16 %v1278
        %v1322 = vunpack.c.l.b16 %v1279
        %v1323 = vunpack.c.l.b16 %v1280
        %v1324 = vunpack.c.l.b16 %v1281
        %v1325 = vunpack.c.l.b16 %v1282
        %v1326 = vunpack.c.l.b16 %v1283
        %v1327 = vunpack.c.l.b16 %v1284
        %v1328 = vunpack.c.l.b16 %v1285
        %v1329 = vunpack.c.l.b16 %v1286
        %v1330 = vunpack.c.l.b16 %v1287
        %v1331 = vunpack.c.l.b16 %v1288
        %v1332 = vunpack.c.l.b16 %v1289
        %v1333 = vunpack.c.l.b16 %v1290
        %v1334 = vunpack.c.l.b16 %v1291
        %v1335 = vpack.c.b16 %v1320, %v1319
        %v1336 = vpack.c.b16 %v1322, %v1321
        %v1337 = vpack.c.b16 %v1324, %v1323
        %v1338 = vpack.c.b16 %v1326, %v1325
        %v1339 = vpack.c.b16 %v1328, %v1327
        %v1340 = vpack.c.b16 %v1330, %v1329
        %v1341 = vpack.c.b16 %v1332, %v1331
        %v1342 = vpack.c.b16 %v1334, %v1333
        %1351 = vmatpush.bf16.msra.mxu0 %v1342
        %1352 = vmatpush.bf16.msra.mxu0 %v1341
        %1353 = vmatpush.bf16.msra.mxu0 %v1340
        %1354 = vmatpush.bf16.msra.mxu0 %v1339
        %1355 = vmatpush.bf16.msra.mxu0 %v1338
        %1356 = vmatpush.bf16.msra.mxu0 %v1337
        %1357 = vmatpush.bf16.msra.mxu0 %v1336
        %1358 = vmatpush.bf16.msra.mxu0 %v1335
        %1359 = vmatmul.bf16.gmra.mxu0 %v1294
        %v1360 = vpop.f32.mrf.mxu0
        %v1361 = vadd.f32 %v1302, %v1360
        %v1362 = vpop.f32.mrf.mxu0
        %v1363 = vadd.f32 %v1302, %v1362
        %1364 = vmatmul.bf16.gmra.mxu0 %v1295
        %v1365 = vpop.f32.mrf.mxu0
        %v1366 = vadd.f32 %v1302, %v1365
        %v1367 = vpop.f32.mrf.mxu0
        %v1368 = vadd.f32 %v1302, %v1367
        %1369 = vmatmul.bf16.gmra.mxu0 %v1296
        %v1370 = vpop.f32.mrf.mxu0
        %v1371 = vadd.f32 %v1302, %v1370
        %v1372 = vpop.f32.mrf.mxu0
        %v1373 = vadd.f32 %v1302, %v1372
        %1374 = vmatmul.bf16.gmra.mxu0 %v1297
        %v1375 = vpop.f32.mrf.mxu0
        %v1376 = vadd.f32 %v1302, %v1375
        %v1377 = vpop.f32.mrf.mxu0
        %v1378 = vadd.f32 %v1302, %v1377
        %1379 = vmatmul.bf16.gmra.mxu0 %v1298
        %v1380 = vpop.f32.mrf.mxu0
        %v1381 = vadd.f32 %v1302, %v1380
        %v1382 = vpop.f32.mrf.mxu0
        %v1383 = vadd.f32 %v1302, %v1382
        %1384 = vmatmul.bf16.gmra.mxu0 %v1299
        %v1385 = vpop.f32.mrf.mxu0
        %v1386 = vadd.f32 %v1302, %v1385
        %v1387 = vpop.f32.mrf.mxu0
        %v1388 = vadd.f32 %v1302, %v1387
        %1389 = vmatmul.bf16.gmra.mxu0 %v1300
        %v1390 = vpop.f32.mrf.mxu0
        %v1391 = vadd.f32 %v1302, %v1390
        %v1392 = vpop.f32.mrf.mxu0
        %v1393 = vadd.f32 %v1302, %v1392
        %1394 = vmatmul.bf16.gmra.mxu0 %v1301
        %v1395 = vpop.f32.mrf.mxu0
        %v1396 = vadd.f32 %v1302, %v1395
        %v1397 = vpop.f32.mrf.mxu0
        %v1398 = vadd.f32 %v1302, %v1397
        %1399 = vdwg.mxu0
        %v1400 = vmax.f32 %v1361, 0.0
        %v1401 = vmax.f32 %v1363, 0.0
        %v1402 = vmax.f32 %v1366, 0.0
        %v1403 = vmax.f32 %v1368, 0.0
        %v1404 = vmax.f32 %v1371, 0.0
        %v1405 = vmax.f32 %v1373, 0.0
        %v1406 = vmax.f32 %v1376, 0.0
        %v1407 = vmax.f32 %v1378, 0.0
        %v1408 = vmax.f32 %v1381, 0.0
        %v1409 = vmax.f32 %v1383, 0.0
        %v1410 = vmax.f32 %v1386, 0.0
        %v1411 = vmax.f32 %v1388, 0.0
        %v1412 = vmax.f32 %v1391, 0.0
        %v1413 = vmax.f32 %v1393, 0.0
        %v1414 = vmax.f32 %v1396, 0.0
        %v1415 = vmax.f32 %v1398, 0.0
        %v1416 = vpack.c.bf16 %v1261, %v1260
        %v1417 = vpack.c.bf16 %v1263, %v1262
        %v1418 = vpack.c.bf16 %v1265, %v1264
        %v1419 = vpack.c.bf16 %v1267, %v1266
        %v1420 = vpack.c.bf16 %v1269, %v1268
        %v1421 = vpack.c.bf16 %v1271, %v1270
        %v1422 = vpack.c.bf16 %v1273, %v1272
        %v1423 = vpack.c.bf16 %v1275, %v1274
        %1424 = vmatpush.bf16.msra.mxu0 %v1342
        %1425 = vmatpush.bf16.msra.mxu0 %v1341
        %1426 = vmatpush.bf16.msra.mxu0 %v1340
        %1427 = vmatpush.bf16.msra.mxu0 %v1339
        %1428 = vmatpush.bf16.msra.mxu0 %v1338
        %1429 = vmatpush.bf16.msra.mxu0 %v1337
        %1430 = vmatpush.bf16.msra.mxu0 %v1336
        %1431 = vmatpush.bf16.msra.mxu0 %v1335
        %1432 = vmatmul.bf16.gmra.mxu0 %v1416
        %v1433 = vpop.f32.mrf.mxu0
        %v1434 = vadd.f32 %v1302, %v1433
        %v1435 = vpop.f32.mrf.mxu0
        %v1436 = vadd.f32 %v1302, %v1435
        %1437 = vmatmul.bf16.gmra.mxu0 %v1417
        %v1438 = vpop.f32.mrf.mxu0
        %v1439 = vadd.f32 %v1302, %v1438
        %v1440 = vpop.f32.mrf.mxu0
        %v1441 = vadd.f32 %v1302, %v1440
        %1442 = vmatmul.bf16.gmra.mxu0 %v1418
        %v1443 = vpop.f32.mrf.mxu0
        %v1444 = vadd.f32 %v1302, %v1443
        %v1445 = vpop.f32.mrf.mxu0
        %v1446 = vadd.f32 %v1302, %v1445
        %1447 = vmatmul.bf16.gmra.mxu0 %v1419
        %v1448 = vpop.f32.mrf.mxu0
        %v1449 = vadd.f32 %v1302, %v1448
        %v1450 = vpop.f32.mrf.mxu0
        %v1451 = vadd.f32 %v1302, %v1450
        %1452 = vmatmul.bf16.gmra.mxu0 %v1420
        %v1453 = vpop.f32.mrf.mxu0
        %v1454 = vadd.f32 %v1302, %v1453
        %v1455 = vpop.f32.mrf.mxu0
        %v1456 = vadd.f32 %v1302, %v1455
        %1457 = vmatmul.bf16.gmra.mxu0 %v1421
        %v1458 = vpop.f32.mrf.mxu0
        %v1459 = vadd.f32 %v1302, %v1458
        %v1460 = vpop.f32.mrf.mxu0
        %v1461 = vadd.f32 %v1302, %v1460
        %1462 = vmatmul.bf16.gmra.mxu0 %v1422
        %v1463 = vpop.f32.mrf.mxu0
        %v1464 = vadd.f32 %v1302, %v1463
        %v1465 = vpop.f32.mrf.mxu0
        %v1466 = vadd.f32 %v1302, %v1465
        %1467 = vmatmul.bf16.gmra.mxu0 %v1423
        %v1468 = vpop.f32.mrf.mxu0
        %v1469 = vadd.f32 %v1302, %v1468
        %v1470 = vpop.f32.mrf.mxu0
        %v1471 = vadd.f32 %v1302, %v1470
        %1472 = vdwg.mxu0
        %v1473 = vmax.f32 %v1434, 0.0
        %v1474 = vmax.f32 %v1436, 0.0
        %v1475 = vmax.f32 %v1439, 0.0
        %v1476 = vmax.f32 %v1441, 0.0
        %v1477 = vmax.f32 %v1444, 0.0
        %v1478 = vmax.f32 %v1446, 0.0
        %v1479 = vmax.f32 %v1449, 0.0
        %v1480 = vmax.f32 %v1451, 0.0
        %v1481 = vmax.f32 %v1454, 0.0
        %v1482 = vmax.f32 %v1456, 0.0
        %v1483 = vmax.f32 %v1459, 0.0
        %v1484 = vmax.f32 %v1461, 0.0
        %v1485 = vmax.f32 %v1464, 0.0
        %v1486 = vmax.f32 %v1466, 0.0
        %v1487 = vmax.f32 %v1469, 0.0
        %v1488 = vmax.f32 %v1471, 0.0
        %v1489 = vld [vmem:[%s4] sm:$0xf]
        %v1490 = vld [vmem:[%s4 + $0x4] sm:$0xf]
        %v1491 = vld [vmem:[%s4 + $0x8] sm:$0xf]
        %v1492 = vld [vmem:[%s4 + $0xc] sm:$0xf]
        %v1493 = vld [vmem:[%s4 + $0x10] sm:$0xf]
        %v1494 = vld [vmem:[%s4 + $0x14] sm:$0xf]
        %v1495 = vld [vmem:[%s4 + $0x18] sm:$0xf]
        %v1496 = vld [vmem:[%s4 + $0x1c] sm:$0xf]
        %v1497 = vld [vmem:[%s4 + $0x20] sm:$0xf]
        %v1498 = vld [vmem:[%s4 + $0x24] sm:$0xf]
        %v1499 = vld [vmem:[%s4 + $0x28] sm:$0xf]
        %v1500 = vld [vmem:[%s4 + $0x2c] sm:$0xf]
        %v1501 = vld [vmem:[%s4 + $0x30] sm:$0xf]
        %v1502 = vld [vmem:[%s4 + $0x34] sm:$0xf]
        %v1503 = vld [vmem:[%s4 + $0x38] sm:$0xf]
        %v1504 = vld [vmem:[%s4 + $0x3c] sm:$0xf]
        %v1505 = vld [vmem:[%s16] sm:$0x1]
        %v1506 = vunpack.c.l.bf16 %v1505
        %v1507 = vpack.c.bf16 %v1401, %v1400
        %v1508 = vpack.c.bf16 %v1403, %v1402
        %v1509 = vpack.c.bf16 %v1405, %v1404
        %v1510 = vpack.c.bf16 %v1407, %v1406
        %v1511 = vpack.c.bf16 %v1409, %v1408
        %v1512 = vpack.c.bf16 %v1411, %v1410
        %v1513 = vpack.c.bf16 %v1413, %v1412
        %v1514 = vpack.c.bf16 %v1415, %v1414
        %v1515 = vperm.slane %v1506, 0
        %v1532 = vunpack.c.l.b16 %v1489
        %v1533 = vunpack.c.l.b16 %v1490
        %v1534 = vunpack.c.l.b16 %v1491
        %v1535 = vunpack.c.l.b16 %v1492
        %v1536 = vunpack.c.l.b16 %v1493
        %v1537 = vunpack.c.l.b16 %v1494
        %v1538 = vunpack.c.l.b16 %v1495
        %v1539 = vunpack.c.l.b16 %v1496
        %v1540 = vunpack.c.l.b16 %v1497
        %v1541 = vunpack.c.l.b16 %v1498
        %v1542 = vunpack.c.l.b16 %v1499
        %v1543 = vunpack.c.l.b16 %v1500
        %v1544 = vunpack.c.l.b16 %v1501
        %v1545 = vunpack.c.l.b16 %v1502
        %v1546 = vunpack.c.l.b16 %v1503
        %v1547 = vunpack.c.l.b16 %v1504
        %v1548 = vpack.c.b16 %v1533, %v1532
        %v1549 = vpack.c.b16 %v1535, %v1534
        %v1550 = vpack.c.b16 %v1537, %v1536
        %v1551 = vpack.c.b16 %v1539, %v1538
        %v1552 = vpack.c.b16 %v1541, %v1540
        %v1553 = vpack.c.b16 %v1543, %v1542
        %v1554 = vpack.c.b16 %v1545, %v1544
        %v1555 = vpack.c.b16 %v1547, %v1546
        %1564 = vmatpush.bf16.msra.mxu0 %v1555
        %1565 = vmatpush.bf16.msra.mxu0 %v1554
        %1566 = vmatpush.bf16.msra.mxu0 %v1553
        %1567 = vmatpush.bf16.msra.mxu0 %v1552
        %1568 = vmatpush.bf16.msra.mxu0 %v1551
        %1569 = vmatpush.bf16.msra.mxu0 %v1550
        %1570 = vmatpush.bf16.msra.mxu0 %v1549
        %1571 = vmatpush.bf16.msra.mxu0 %v1548
        %1572 = vmatmul.bf16.gmra.mxu0 %v1507
        %v1573 = vpop.f32.mrf.mxu0
        %v1574 = vadd.f32 %v1515, %v1573
        %v1575 = vpop.f32.mrf.mxu0
        %v1576 = vadd.f32 %v1515, %v1575
        %1577 = vmatmul.bf16.gmra.mxu0 %v1508
        %v1578 = vpop.f32.mrf.mxu0
        %v1579 = vadd.f32 %v1515, %v1578
        %v1580 = vpop.f32.mrf.mxu0
        %v1581 = vadd.f32 %v1515, %v1580
        %1582 = vmatmul.bf16.gmra.mxu0 %v1509
        %v1583 = vpop.f32.mrf.mxu0
        %v1584 = vadd.f32 %v1515, %v1583
        %v1585 = vpop.f32.mrf.mxu0
        %v1586 = vadd.f32 %v1515, %v1585
        %1587 = vmatmul.bf16.gmra.mxu0 %v1510
        %v1588 = vpop.f32.mrf.mxu0
        %v1589 = vadd.f32 %v1515, %v1588
        %v1590 = vpop.f32.mrf.mxu0
        %v1591 = vadd.f32 %v1515, %v1590
        %1592 = vmatmul.bf16.gmra.mxu0 %v1511
        %v1593 = vpop.f32.mrf.mxu0
        %v1594 = vadd.f32 %v1515, %v1593
        %v1595 = vpop.f32.mrf.mxu0
        %v1596 = vadd.f32 %v1515, %v1595
        %1597 = vmatmul.bf16.gmra.mxu0 %v1512
        %v1598 = vpop.f32.mrf.mxu0
        %v1599 = vadd.f32 %v1515, %v1598
        %v1600 = vpop.f32.mrf.mxu0
        %v1601 = vadd.f32 %v1515, %v1600
        %1602 = vmatmul.bf16.gmra.mxu0 %v1513
        %v1603 = vpop.f32.mrf.mxu0
        %v1604 = vadd.f32 %v1515, %v1603
        %v1605 = vpop.f32.mrf.mxu0
        %v1606 = vadd.f32 %v1515, %v1605
        %1607 = vmatmul.bf16.gmra.mxu0 %v1514
        %v1608 = vpop.f32.mrf.mxu0
        %v1609 = vadd.f32 %v1515, %v1608
        %v1610 = vpop.f32.mrf.mxu0
        %v1611 = vadd.f32 %v1515, %v1610
        %1612 = vdwg.mxu0
        %v1613 = vmax.f32 %v1574, 0.0
        %v1614 = vmax.f32 %v1576, 0.0
        %v1615 = vmax.f32 %v1579, 0.0
        %v1616 = vmax.f32 %v1581, 0.0
        %v1617 = vmax.f32 %v1584, 0.0
        %v1618 = vmax.f32 %v1586, 0.0
        %v1619 = vmax.f32 %v1589, 0.0
        %v1620 = vmax.f32 %v1591, 0.0
        %v1621 = vmax.f32 %v1594, 0.0
        %v1622 = vmax.f32 %v1596, 0.0
        %v1623 = vmax.f32 %v1599, 0.0
        %v1624 = vmax.f32 %v1601, 0.0
        %v1625 = vmax.f32 %v1604, 0.0
        %v1626 = vmax.f32 %v1606, 0.0
        %v1627 = vmax.f32 %v1609, 0.0
        %v1628 = vmax.f32 %v1611, 0.0
        %v1629 = vpack.c.bf16 %v1474, %v1473
        %v1630 = vpack.c.bf16 %v1476, %v1475
        %v1631 = vpack.c.bf16 %v1478, %v1477
        %v1632 = vpack.c.bf16 %v1480, %v1479
        %v1633 = vpack.c.bf16 %v1482, %v1481
        %v1634 = vpack.c.bf16 %v1484, %v1483
        %v1635 = vpack.c.bf16 %v1486, %v1485
        %v1636 = vpack.c.bf16 %v1488, %v1487
        %1637 = vmatpush.bf16.msra.mxu0 %v1555
        %1638 = vmatpush.bf16.msra.mxu0 %v1554
        %1639 = vmatpush.bf16.msra.mxu0 %v1553
        %1640 = vmatpush.bf16.msra.mxu0 %v1552
        %1641 = vmatpush.bf16.msra.mxu0 %v1551
        %1642 = vmatpush.bf16.msra.mxu0 %v1550
        %1643 = vmatpush.bf16.msra.mxu0 %v1549
        %1644 = vmatpush.bf16.msra.mxu0 %v1548
        %1645 = vmatmul.bf16.gmra.mxu0 %v1629
        %v1646 = vpop.f32.mrf.mxu0
        %v1647 = vadd.f32 %v1515, %v1646
        %v1648 = vpop.f32.mrf.mxu0
        %v1649 = vadd.f32 %v1515, %v1648
        %1650 = vmatmul.bf16.gmra.mxu0 %v1630
        %v1651 = vpop.f32.mrf.mxu0
        %v1652 = vadd.f32 %v1515, %v1651
        %v1653 = vpop.f32.mrf.mxu0
        %v1654 = vadd.f32 %v1515, %v1653
        %1655 = vmatmul.bf16.gmra.mxu0 %v1631
        %v1656 = vpop.f32.mrf.mxu0
        %v1657 = vadd.f32 %v1515, %v1656
        %v1658 = vpop.f32.mrf.mxu0
        %v1659 = vadd.f32 %v1515, %v1658
        %1660 = vmatmul.bf16.gmra.mxu0 %v1632
        %v1661 = vpop.f32.mrf.mxu0
        %v1662 = vadd.f32 %v1515, %v1661
        %v1663 = vpop.f32.mrf.mxu0
        %v1664 = vadd.f32 %v1515, %v1663
        %1665 = vmatmul.bf16.gmra.mxu0 %v1633
        %v1666 = vpop.f32.mrf.mxu0
        %v1667 = vadd.f32 %v1515, %v1666
        %v1668 = vpop.f32.mrf.mxu0
        %v1669 = vadd.f32 %v1515, %v1668
        %1670 = vmatmul.bf16.gmra.mxu0 %v1634
        %v1671 = vpop.f32.mrf.mxu0
        %v1672 = vadd.f32 %v1515, %v1671
        %v1673 = vpop.f32.mrf.mxu0
        %v1674 = vadd.f32 %v1515, %v1673
        %1675 = vmatmul.bf16.gmra.mxu0 %v1635
        %v1676 = vpop.f32.mrf.mxu0
        %v1677 = vadd.f32 %v1515, %v1676
        %v1678 = vpop.f32.mrf.mxu0
        %v1679 = vadd.f32 %v1515, %v1678
        %1680 = vmatmul.bf16.gmra.mxu0 %v1636
        %v1681 = vpop.f32.mrf.mxu0
        %v1682 = vadd.f32 %v1515, %v1681
        %v1683 = vpop.f32.mrf.mxu0
        %v1684 = vadd.f32 %v1515, %v1683
        %1685 = vdwg.mxu0
        %v1686 = vmax.f32 %v1647, 0.0
        %v1687 = vmax.f32 %v1649, 0.0
        %v1688 = vmax.f32 %v1652, 0.0
        %v1689 = vmax.f32 %v1654, 0.0
        %v1690 = vmax.f32 %v1657, 0.0
        %v1691 = vmax.f32 %v1659, 0.0
        %v1692 = vmax.f32 %v1662, 0.0
        %v1693 = vmax.f32 %v1664, 0.0
        %v1694 = vmax.f32 %v1667, 0.0
        %v1695 = vmax.f32 %v1669, 0.0
        %v1696 = vmax.f32 %v1672, 0.0
        %v1697 = vmax.f32 %v1674, 0.0
        %v1698 = vmax.f32 %v1677, 0.0
        %v1699 = vmax.f32 %v1679, 0.0
        %v1700 = vmax.f32 %v1682, 0.0
        %v1701 = vmax.f32 %v1684, 0.0
        %v1702 = vld [vmem:[%s5] sm:$0xf]
        %v1703 = vld [vmem:[%s5 + $0x4] sm:$0xf]
        %v1704 = vld [vmem:[%s5 + $0x8] sm:$0xf]
        %v1705 = vld [vmem:[%s5 + $0xc] sm:$0xf]
        %v1706 = vld [vmem:[%s5 + $0x10] sm:$0xf]
        %v1707 = vld [vmem:[%s5 + $0x14] sm:$0xf]
        %v1708 = vld [vmem:[%s5 + $0x18] sm:$0xf]
        %v1709 = vld [vmem:[%s5 + $0x1c] sm:$0xf]
        %v1710 = vld [vmem:[%s5 + $0x20] sm:$0xf]
        %v1711 = vld [vmem:[%s5 + $0x24] sm:$0xf]
        %v1712 = vld [vmem:[%s5 + $0x28] sm:$0xf]
        %v1713 = vld [vmem:[%s5 + $0x2c] sm:$0xf]
        %v1714 = vld [vmem:[%s5 + $0x30] sm:$0xf]
        %v1715 = vld [vmem:[%s5 + $0x34] sm:$0xf]
        %v1716 = vld [vmem:[%s5 + $0x38] sm:$0xf]
        %v1717 = vld [vmem:[%s5 + $0x3c] sm:$0xf]
        %v1718 = vld [vmem:[%s17] sm:$0x1]
        %v1719 = vunpack.c.l.bf16 %v1718
        %v1720 = vpack.c.bf16 %v1614, %v1613
        %v1721 = vpack.c.bf16 %v1616, %v1615
        %v1722 = vpack.c.bf16 %v1618, %v1617
        %v1723 = vpack.c.bf16 %v1620, %v1619
        %v1724 = vpack.c.bf16 %v1622, %v1621
        %v1725 = vpack.c.bf16 %v1624, %v1623
        %v1726 = vpack.c.bf16 %v1626, %v1625
        %v1727 = vpack.c.bf16 %v1628, %v1627
        %v1728 = vperm.slane %v1719, 0
        %v1745 = vunpack.c.l.b16 %v1702
        %v1746 = vunpack.c.l.b16 %v1703
        %v1747 = vunpack.c.l.b16 %v1704
        %v1748 = vunpack.c.l.b16 %v1705
        %v1749 = vunpack.c.l.b16 %v1706
        %v1750 = vunpack.c.l.b16 %v1707
        %v1751 = vunpack.c.l.b16 %v1708
        %v1752 = vunpack.c.l.b16 %v1709
        %v1753 = vunpack.c.l.b16 %v1710
        %v1754 = vunpack.c.l.b16 %v1711
        %v1755 = vunpack.c.l.b16 %v1712
        %v1756 = vunpack.c.l.b16 %v1713
        %v1757 = vunpack.c.l.b16 %v1714
        %v1758 = vunpack.c.l.b16 %v1715
        %v1759 = vunpack.c.l.b16 %v1716
        %v1760 = vunpack.c.l.b16 %v1717
        %v1761 = vpack.c.b16 %v1746, %v1745
        %v1762 = vpack.c.b16 %v1748, %v1747
        %v1763 = vpack.c.b16 %v1750, %v1749
        %v1764 = vpack.c.b16 %v1752, %v1751
        %v1765 = vpack.c.b16 %v1754, %v1753
        %v1766 = vpack.c.b16 %v1756, %v1755
        %v1767 = vpack.c.b16 %v1758, %v1757
        %v1768 = vpack.c.b16 %v1760, %v1759
        %1777 = vmatpush.bf16.msra.mxu0 %v1768
        %1778 = vmatpush.bf16.msra.mxu0 %v1767
        %1779 = vmatpush.bf16.msra.mxu0 %v1766
        %1780 = vmatpush.bf16.msra.mxu0 %v1765
        %1781 = vmatpush.bf16.msra.mxu0 %v1764
        %1782 = vmatpush.bf16.msra.mxu0 %v1763
        %1783 = vmatpush.bf16.msra.mxu0 %v1762
        %1784 = vmatpush.bf16.msra.mxu0 %v1761
        %1785 = vmatmul.bf16.gmra.mxu0 %v1720
        %v1786 = vpop.f32.mrf.mxu0
        %v1787 = vadd.f32 %v1728, %v1786
        %v1788 = vpop.f32.mrf.mxu0
        %v1789 = vadd.f32 %v1728, %v1788
        %1790 = vmatmul.bf16.gmra.mxu0 %v1721
        %v1791 = vpop.f32.mrf.mxu0
        %v1792 = vadd.f32 %v1728, %v1791
        %v1793 = vpop.f32.mrf.mxu0
        %v1794 = vadd.f32 %v1728, %v1793
        %1795 = vmatmul.bf16.gmra.mxu0 %v1722
        %v1796 = vpop.f32.mrf.mxu0
        %v1797 = vadd.f32 %v1728, %v1796
        %v1798 = vpop.f32.mrf.mxu0
        %v1799 = vadd.f32 %v1728, %v1798
        %1800 = vmatmul.bf16.gmra.mxu0 %v1723
        %v1801 = vpop.f32.mrf.mxu0
        %v1802 = vadd.f32 %v1728, %v1801
        %v1803 = vpop.f32.mrf.mxu0
        %v1804 = vadd.f32 %v1728, %v1803
        %1805 = vmatmul.bf16.gmra.mxu0 %v1724
        %v1806 = vpop.f32.mrf.mxu0
        %v1807 = vadd.f32 %v1728, %v1806
        %v1808 = vpop.f32.mrf.mxu0
        %v1809 = vadd.f32 %v1728, %v1808
        %1810 = vmatmul.bf16.gmra.mxu0 %v1725
        %v1811 = vpop.f32.mrf.mxu0
        %v1812 = vadd.f32 %v1728, %v1811
        %v1813 = vpop.f32.mrf.mxu0
        %v1814 = vadd.f32 %v1728, %v1813
        %1815 = vmatmul.bf16.gmra.mxu0 %v1726
        %v1816 = vpop.f32.mrf.mxu0
        %v1817 = vadd.f32 %v1728, %v1816
        %v1818 = vpop.f32.mrf.mxu0
        %v1819 = vadd.f32 %v1728, %v1818
        %1820 = vmatmul.bf16.gmra.mxu0 %v1727
        %v1821 = vpop.f32.mrf.mxu0
        %v1822 = vadd.f32 %v1728, %v1821
        %v1823 = vpop.f32.mrf.mxu0
        %v1824 = vadd.f32 %v1728, %v1823
        %1825 = vdwg.mxu0
        %v1826 = vmax.f32 %v1787, 0.0
        %v1827 = vmax.f32 %v1789, 0.0
        %v1828 = vmax.f32 %v1792, 0.0
        %v1829 = vmax.f32 %v1794, 0.0
        %v1830 = vmax.f32 %v1797, 0.0
        %v1831 = vmax.f32 %v1799, 0.0
        %v1832 = vmax.f32 %v1802, 0.0
        %v1833 = vmax.f32 %v1804, 0.0
        %v1834 = vmax.f32 %v1807, 0.0
        %v1835 = vmax.f32 %v1809, 0.0
        %v1836 = vmax.f32 %v1812, 0.0
        %v1837 = vmax.f32 %v1814, 0.0
        %v1838 = vmax.f32 %v1817, 0.0
        %v1839 = vmax.f32 %v1819, 0.0
        %v1840 = vmax.f32 %v1822, 0.0
        %v1841 = vmax.f32 %v1824, 0.0
        %v1842 = vpack.c.bf16 %v1687, %v1686
        %v1843 = vpack.c.bf16 %v1689, %v1688
        %v1844 = vpack.c.bf16 %v1691, %v1690
        %v1845 = vpack.c.bf16 %v1693, %v1692
        %v1846 = vpack.c.bf16 %v1695, %v1694
        %v1847 = vpack.c.bf16 %v1697, %v1696
        %v1848 = vpack.c.bf16 %v1699, %v1698
        %v1849 = vpack.c.bf16 %v1701, %v1700
        %1850 = vmatpush.bf16.msra.mxu0 %v1768
        %1851 = vmatpush.bf16.msra.mxu0 %v1767
        %1852 = vmatpush.bf16.msra.mxu0 %v1766
        %1853 = vmatpush.bf16.msra.mxu0 %v1765
        %1854 = vmatpush.bf16.msra.mxu0 %v1764
        %1855 = vmatpush.bf16.msra.mxu0 %v1763
        %1856 = vmatpush.bf16.msra.mxu0 %v1762
        %1857 = vmatpush.bf16.msra.mxu0 %v1761
        %1858 = vmatmul.bf16.gmra.mxu0 %v1842
        %v1859 = vpop.f32.mrf.mxu0
        %v1860 = vadd.f32 %v1728, %v1859
        %v1861 = vpop.f32.mrf.mxu0
        %v1862 = vadd.f32 %v1728, %v1861
        %1863 = vmatmul.bf16.gmra.mxu0 %v1843
        %v1864 = vpop.f32.mrf.mxu0
        %v1865 = vadd.f32 %v1728, %v1864
        %v1866 = vpop.f32.mrf.mxu0
        %v1867 = vadd.f32 %v1728, %v1866
        %1868 = vmatmul.bf16.gmra.mxu0 %v1844
        %v1869 = vpop.f32.mrf.mxu0
        %v1870 = vadd.f32 %v1728, %v1869
        %v1871 = vpop.f32.mrf.mxu0
        %v1872 = vadd.f32 %v1728, %v1871
        %1873 = vmatmul.bf16.gmra.mxu0 %v1845
        %v1874 = vpop.f32.mrf.mxu0
        %v1875 = vadd.f32 %v1728, %v1874
        %v1876 = vpop.f32.mrf.mxu0
        %v1877 = vadd.f32 %v1728, %v1876
        %1878 = vmatmul.bf16.gmra.mxu0 %v1846
        %v1879 = vpop.f32.mrf.mxu0
        %v1880 = vadd.f32 %v1728, %v1879
        %v1881 = vpop.f32.mrf.mxu0
        %v1882 = vadd.f32 %v1728, %v1881
        %1883 = vmatmul.bf16.gmra.mxu0 %v1847
        %v1884 = vpop.f32.mrf.mxu0
        %v1885 = vadd.f32 %v1728, %v1884
        %v1886 = vpop.f32.mrf.mxu0
        %v1887 = vadd.f32 %v1728, %v1886
        %1888 = vmatmul.bf16.gmra.mxu0 %v1848
        %v1889 = vpop.f32.mrf.mxu0
        %v1890 = vadd.f32 %v1728, %v1889
        %v1891 = vpop.f32.mrf.mxu0
        %v1892 = vadd.f32 %v1728, %v1891
        %1893 = vmatmul.bf16.gmra.mxu0 %v1849
        %v1894 = vpop.f32.mrf.mxu0
        %v1895 = vadd.f32 %v1728, %v1894
        %v1896 = vpop.f32.mrf.mxu0
        %v1897 = vadd.f32 %v1728, %v1896
        %1898 = vdwg.mxu0
        %v1899 = vmax.f32 %v1860, 0.0
        %v1900 = vmax.f32 %v1862, 0.0
        %v1901 = vmax.f32 %v1865, 0.0
        %v1902 = vmax.f32 %v1867, 0.0
        %v1903 = vmax.f32 %v1870, 0.0
        %v1904 = vmax.f32 %v1872, 0.0
        %v1905 = vmax.f32 %v1875, 0.0
        %v1906 = vmax.f32 %v1877, 0.0
        %v1907 = vmax.f32 %v1880, 0.0
        %v1908 = vmax.f32 %v1882, 0.0
        %v1909 = vmax.f32 %v1885, 0.0
        %v1910 = vmax.f32 %v1887, 0.0
        %v1911 = vmax.f32 %v1890, 0.0
        %v1912 = vmax.f32 %v1892, 0.0
        %v1913 = vmax.f32 %v1895, 0.0
        %v1914 = vmax.f32 %v1897, 0.0
        %v1915 = vld [vmem:[%s6] sm:$0xf]
        %v1916 = vld [vmem:[%s6 + $0x4] sm:$0xf]
        %v1917 = vld [vmem:[%s6 + $0x8] sm:$0xf]
        %v1918 = vld [vmem:[%s6 + $0xc] sm:$0xf]
        %v1919 = vld [vmem:[%s6 + $0x10] sm:$0xf]
        %v1920 = vld [vmem:[%s6 + $0x14] sm:$0xf]
        %v1921 = vld [vmem:[%s6 + $0x18] sm:$0xf]
        %v1922 = vld [vmem:[%s6 + $0x1c] sm:$0xf]
        %v1923 = vld [vmem:[%s6 + $0x20] sm:$0xf]
        %v1924 = vld [vmem:[%s6 + $0x24] sm:$0xf]
        %v1925 = vld [vmem:[%s6 + $0x28] sm:$0xf]
        %v1926 = vld [vmem:[%s6 + $0x2c] sm:$0xf]
        %v1927 = vld [vmem:[%s6 + $0x30] sm:$0xf]
        %v1928 = vld [vmem:[%s6 + $0x34] sm:$0xf]
        %v1929 = vld [vmem:[%s6 + $0x38] sm:$0xf]
        %v1930 = vld [vmem:[%s6 + $0x3c] sm:$0xf]
        %v1931 = vld [vmem:[%s18] sm:$0x1]
        %v1932 = vunpack.c.l.bf16 %v1931
        %v1933 = vpack.c.bf16 %v1827, %v1826
        %v1934 = vpack.c.bf16 %v1829, %v1828
        %v1935 = vpack.c.bf16 %v1831, %v1830
        %v1936 = vpack.c.bf16 %v1833, %v1832
        %v1937 = vpack.c.bf16 %v1835, %v1834
        %v1938 = vpack.c.bf16 %v1837, %v1836
        %v1939 = vpack.c.bf16 %v1839, %v1838
        %v1940 = vpack.c.bf16 %v1841, %v1840
        %v1941 = vperm.slane %v1932, 0
        %v1958 = vunpack.c.l.b16 %v1915
        %v1959 = vunpack.c.l.b16 %v1916
        %v1960 = vunpack.c.l.b16 %v1917
        %v1961 = vunpack.c.l.b16 %v1918
        %v1962 = vunpack.c.l.b16 %v1919
        %v1963 = vunpack.c.l.b16 %v1920
        %v1964 = vunpack.c.l.b16 %v1921
        %v1965 = vunpack.c.l.b16 %v1922
        %v1966 = vunpack.c.l.b16 %v1923
        %v1967 = vunpack.c.l.b16 %v1924
        %v1968 = vunpack.c.l.b16 %v1925
        %v1969 = vunpack.c.l.b16 %v1926
        %v1970 = vunpack.c.l.b16 %v1927
        %v1971 = vunpack.c.l.b16 %v1928
        %v1972 = vunpack.c.l.b16 %v1929
        %v1973 = vunpack.c.l.b16 %v1930
        %v1974 = vpack.c.b16 %v1959, %v1958
        %v1975 = vpack.c.b16 %v1961, %v1960
        %v1976 = vpack.c.b16 %v1963, %v1962
        %v1977 = vpack.c.b16 %v1965, %v1964
        %v1978 = vpack.c.b16 %v1967, %v1966
        %v1979 = vpack.c.b16 %v1969, %v1968
        %v1980 = vpack.c.b16 %v1971, %v1970
        %v1981 = vpack.c.b16 %v1973, %v1972
        %1990 = vmatpush.bf16.msra.mxu0 %v1981
        %1991 = vmatpush.bf16.msra.mxu0 %v1980
        %1992 = vmatpush.bf16.msra.mxu0 %v1979
        %1993 = vmatpush.bf16.msra.mxu0 %v1978
        %1994 = vmatpush.bf16.msra.mxu0 %v1977
        %1995 = vmatpush.bf16.msra.mxu0 %v1976
        %1996 = vmatpush.bf16.msra.mxu0 %v1975
        %1997 = vmatpush.bf16.msra.mxu0 %v1974
        %1998 = vmatmul.bf16.gmra.mxu0 %v1933
        %v1999 = vpop.f32.mrf.mxu0
        %v2000 = vadd.f32 %v1941, %v1999
        %v2001 = vpop.f32.mrf.mxu0
        %v2002 = vadd.f32 %v1941, %v2001
        %2003 = vmatmul.bf16.gmra.mxu0 %v1934
        %v2004 = vpop.f32.mrf.mxu0
        %v2005 = vadd.f32 %v1941, %v2004
        %v2006 = vpop.f32.mrf.mxu0
        %v2007 = vadd.f32 %v1941, %v2006
        %2008 = vmatmul.bf16.gmra.mxu0 %v1935
        %v2009 = vpop.f32.mrf.mxu0
        %v2010 = vadd.f32 %v1941, %v2009
        %v2011 = vpop.f32.mrf.mxu0
        %v2012 = vadd.f32 %v1941, %v2011
        %2013 = vmatmul.bf16.gmra.mxu0 %v1936
        %v2014 = vpop.f32.mrf.mxu0
        %v2015 = vadd.f32 %v1941, %v2014
        %v2016 = vpop.f32.mrf.mxu0
        %v2017 = vadd.f32 %v1941, %v2016
        %2018 = vmatmul.bf16.gmra.mxu0 %v1937
        %v2019 = vpop.f32.mrf.mxu0
        %v2020 = vadd.f32 %v1941, %v2019
        %v2021 = vpop.f32.mrf.mxu0
        %v2022 = vadd.f32 %v1941, %v2021
        %2023 = vmatmul.bf16.gmra.mxu0 %v1938
        %v2024 = vpop.f32.mrf.mxu0
        %v2025 = vadd.f32 %v1941, %v2024
        %v2026 = vpop.f32.mrf.mxu0
        %v2027 = vadd.f32 %v1941, %v2026
        %2028 = vmatmul.bf16.gmra.mxu0 %v1939
        %v2029 = vpop.f32.mrf.mxu0
        %v2030 = vadd.f32 %v1941, %v2029
        %v2031 = vpop.f32.mrf.mxu0
        %v2032 = vadd.f32 %v1941, %v2031
        %2033 = vmatmul.bf16.gmra.mxu0 %v1940
        %v2034 = vpop.f32.mrf.mxu0
        %v2035 = vadd.f32 %v1941, %v2034
        %v2036 = vpop.f32.mrf.mxu0
        %v2037 = vadd.f32 %v1941, %v2036
        %2038 = vdwg.mxu0
        %v2039 = vmax.f32 %v2000, 0.0
        %v2040 = vmax.f32 %v2002, 0.0
        %v2041 = vmax.f32 %v2005, 0.0
        %v2042 = vmax.f32 %v2007, 0.0
        %v2043 = vmax.f32 %v2010, 0.0
        %v2044 = vmax.f32 %v2012, 0.0
        %v2045 = vmax.f32 %v2015, 0.0
        %v2046 = vmax.f32 %v2017, 0.0
        %v2047 = vmax.f32 %v2020, 0.0
        %v2048 = vmax.f32 %v2022, 0.0
        %v2049 = vmax.f32 %v2025, 0.0
        %v2050 = vmax.f32 %v2027, 0.0
        %v2051 = vmax.f32 %v2030, 0.0
        %v2052 = vmax.f32 %v2032, 0.0
        %v2053 = vmax.f32 %v2035, 0.0
        %v2054 = vmax.f32 %v2037, 0.0
        %v2055 = vpack.c.bf16 %v1900, %v1899
        %v2056 = vpack.c.bf16 %v1902, %v1901
        %v2057 = vpack.c.bf16 %v1904, %v1903
        %v2058 = vpack.c.bf16 %v1906, %v1905
        %v2059 = vpack.c.bf16 %v1908, %v1907
        %v2060 = vpack.c.bf16 %v1910, %v1909
        %v2061 = vpack.c.bf16 %v1912, %v1911
        %v2062 = vpack.c.bf16 %v1914, %v1913
        %2063 = vmatpush.bf16.msra.mxu0 %v1981
        %2064 = vmatpush.bf16.msra.mxu0 %v1980
        %2065 = vmatpush.bf16.msra.mxu0 %v1979
        %2066 = vmatpush.bf16.msra.mxu0 %v1978
        %2067 = vmatpush.bf16.msra.mxu0 %v1977
        %2068 = vmatpush.bf16.msra.mxu0 %v1976
        %2069 = vmatpush.bf16.msra.mxu0 %v1975
        %2070 = vmatpush.bf16.msra.mxu0 %v1974
        %2071 = vmatmul.bf16.gmra.mxu0 %v2055
        %v2072 = vpop.f32.mrf.mxu0
        %v2073 = vadd.f32 %v1941, %v2072
        %v2074 = vpop.f32.mrf.mxu0
        %v2075 = vadd.f32 %v1941, %v2074
        %2076 = vmatmul.bf16.gmra.mxu0 %v2056
        %v2077 = vpop.f32.mrf.mxu0
        %v2078 = vadd.f32 %v1941, %v2077
        %v2079 = vpop.f32.mrf.mxu0
        %v2080 = vadd.f32 %v1941, %v2079
        %2081 = vmatmul.bf16.gmra.mxu0 %v2057
        %v2082 = vpop.f32.mrf.mxu0
        %v2083 = vadd.f32 %v1941, %v2082
        %v2084 = vpop.f32.mrf.mxu0
        %v2085 = vadd.f32 %v1941, %v2084
        %2086 = vmatmul.bf16.gmra.mxu0 %v2058
        %v2087 = vpop.f32.mrf.mxu0
        %v2088 = vadd.f32 %v1941, %v2087
        %v2089 = vpop.f32.mrf.mxu0
        %v2090 = vadd.f32 %v1941, %v2089
        %2091 = vmatmul.bf16.gmra.mxu0 %v2059
        %v2092 = vpop.f32.mrf.mxu0
        %v2093 = vadd.f32 %v1941, %v2092
        %v2094 = vpop.f32.mrf.mxu0
        %v2095 = vadd.f32 %v1941, %v2094
        %2096 = vmatmul.bf16.gmra.mxu0 %v2060
        %v2097 = vpop.f32.mrf.mxu0
        %v2098 = vadd.f32 %v1941, %v2097
        %v2099 = vpop.f32.mrf.mxu0
        %v2100 = vadd.f32 %v1941, %v2099
        %2101 = vmatmul.bf16.gmra.mxu0 %v2061
        %v2102 = vpop.f32.mrf.mxu0
        %v2103 = vadd.f32 %v1941, %v2102
        %v2104 = vpop.f32.mrf.mxu0
        %v2105 = vadd.f32 %v1941, %v2104
        %2106 = vmatmul.bf16.gmra.mxu0 %v2062
        %v2107 = vpop.f32.mrf.mxu0
        %v2108 = vadd.f32 %v1941, %v2107
        %v2109 = vpop.f32.mrf.mxu0
        %v2110 = vadd.f32 %v1941, %v2109
        %2111 = vdwg.mxu0
        %v2112 = vmax.f32 %v2073, 0.0
        %v2113 = vmax.f32 %v2075, 0.0
        %v2114 = vmax.f32 %v2078, 0.0
        %v2115 = vmax.f32 %v2080, 0.0
        %v2116 = vmax.f32 %v2083, 0.0
        %v2117 = vmax.f32 %v2085, 0.0
        %v2118 = vmax.f32 %v2088, 0.0
        %v2119 = vmax.f32 %v2090, 0.0
        %v2120 = vmax.f32 %v2093, 0.0
        %v2121 = vmax.f32 %v2095, 0.0
        %v2122 = vmax.f32 %v2098, 0.0
        %v2123 = vmax.f32 %v2100, 0.0
        %v2124 = vmax.f32 %v2103, 0.0
        %v2125 = vmax.f32 %v2105, 0.0
        %v2126 = vmax.f32 %v2108, 0.0
        %v2127 = vmax.f32 %v2110, 0.0
        %v2128 = vld [vmem:[%s7] sm:$0xf]
        %v2129 = vld [vmem:[%s7 + $0x4] sm:$0xf]
        %v2130 = vld [vmem:[%s7 + $0x8] sm:$0xf]
        %v2131 = vld [vmem:[%s7 + $0xc] sm:$0xf]
        %v2132 = vld [vmem:[%s7 + $0x10] sm:$0xf]
        %v2133 = vld [vmem:[%s7 + $0x14] sm:$0xf]
        %v2134 = vld [vmem:[%s7 + $0x18] sm:$0xf]
        %v2135 = vld [vmem:[%s7 + $0x1c] sm:$0xf]
        %v2136 = vld [vmem:[%s7 + $0x20] sm:$0xf]
        %v2137 = vld [vmem:[%s7 + $0x24] sm:$0xf]
        %v2138 = vld [vmem:[%s7 + $0x28] sm:$0xf]
        %v2139 = vld [vmem:[%s7 + $0x2c] sm:$0xf]
        %v2140 = vld [vmem:[%s7 + $0x30] sm:$0xf]
        %v2141 = vld [vmem:[%s7 + $0x34] sm:$0xf]
        %v2142 = vld [vmem:[%s7 + $0x38] sm:$0xf]
        %v2143 = vld [vmem:[%s7 + $0x3c] sm:$0xf]
        %v2144 = vld [vmem:[%s19] sm:$0x1]
        %v2145 = vunpack.c.l.bf16 %v2144
        %v2146 = vpack.c.bf16 %v2040, %v2039
        %v2147 = vpack.c.bf16 %v2042, %v2041
        %v2148 = vpack.c.bf16 %v2044, %v2043
        %v2149 = vpack.c.bf16 %v2046, %v2045
        %v2150 = vpack.c.bf16 %v2048, %v2047
        %v2151 = vpack.c.bf16 %v2050, %v2049
        %v2152 = vpack.c.bf16 %v2052, %v2051
        %v2153 = vpack.c.bf16 %v2054, %v2053
        %v2154 = vperm.slane %v2145, 0
        %v2171 = vunpack.c.l.b16 %v2128
        %v2172 = vunpack.c.l.b16 %v2129
        %v2173 = vunpack.c.l.b16 %v2130
        %v2174 = vunpack.c.l.b16 %v2131
        %v2175 = vunpack.c.l.b16 %v2132
        %v2176 = vunpack.c.l.b16 %v2133
        %v2177 = vunpack.c.l.b16 %v2134
        %v2178 = vunpack.c.l.b16 %v2135
        %v2179 = vunpack.c.l.b16 %v2136
        %v2180 = vunpack.c.l.b16 %v2137
        %v2181 = vunpack.c.l.b16 %v2138
        %v2182 = vunpack.c.l.b16 %v2139
        %v2183 = vunpack.c.l.b16 %v2140
        %v2184 = vunpack.c.l.b16 %v2141
        %v2185 = vunpack.c.l.b16 %v2142
        %v2186 = vunpack.c.l.b16 %v2143
        %v2187 = vpack.c.b16 %v2172, %v2171
        %v2188 = vpack.c.b16 %v2174, %v2173
        %v2189 = vpack.c.b16 %v2176, %v2175
        %v2190 = vpack.c.b16 %v2178, %v2177
        %v2191 = vpack.c.b16 %v2180, %v2179
        %v2192 = vpack.c.b16 %v2182, %v2181
        %v2193 = vpack.c.b16 %v2184, %v2183
        %v2194 = vpack.c.b16 %v2186, %v2185
        %2203 = vmatpush.bf16.msra.mxu0 %v2194
        %2204 = vmatpush.bf16.msra.mxu0 %v2193
        %2205 = vmatpush.bf16.msra.mxu0 %v2192
        %2206 = vmatpush.bf16.msra.mxu0 %v2191
        %2207 = vmatpush.bf16.msra.mxu0 %v2190
        %2208 = vmatpush.bf16.msra.mxu0 %v2189
        %2209 = vmatpush.bf16.msra.mxu0 %v2188
        %2210 = vmatpush.bf16.msra.mxu0 %v2187
        %2211 = vmatmul.bf16.gmra.mxu0 %v2146
        %v2212 = vpop.f32.mrf.mxu0
        %v2213 = vadd.f32 %v2154, %v2212
        %v2214 = vpop.f32.mrf.mxu0
        %v2215 = vadd.f32 %v2154, %v2214
        %2216 = vmatmul.bf16.gmra.mxu0 %v2147
        %v2217 = vpop.f32.mrf.mxu0
        %v2218 = vadd.f32 %v2154, %v2217
        %v2219 = vpop.f32.mrf.mxu0
        %v2220 = vadd.f32 %v2154, %v2219
        %2221 = vmatmul.bf16.gmra.mxu0 %v2148
        %v2222 = vpop.f32.mrf.mxu0
        %v2223 = vadd.f32 %v2154, %v2222
        %v2224 = vpop.f32.mrf.mxu0
        %v2225 = vadd.f32 %v2154, %v2224
        %2226 = vmatmul.bf16.gmra.mxu0 %v2149
        %v2227 = vpop.f32.mrf.mxu0
        %v2228 = vadd.f32 %v2154, %v2227
        %v2229 = vpop.f32.mrf.mxu0
        %v2230 = vadd.f32 %v2154, %v2229
        %2231 = vmatmul.bf16.gmra.mxu0 %v2150
        %v2232 = vpop.f32.mrf.mxu0
        %v2233 = vadd.f32 %v2154, %v2232
        %v2234 = vpop.f32.mrf.mxu0
        %v2235 = vadd.f32 %v2154, %v2234
        %2236 = vmatmul.bf16.gmra.mxu0 %v2151
        %v2237 = vpop.f32.mrf.mxu0
        %v2238 = vadd.f32 %v2154, %v2237
        %v2239 = vpop.f32.mrf.mxu0
        %v2240 = vadd.f32 %v2154, %v2239
        %2241 = vmatmul.bf16.gmra.mxu0 %v2152
        %v2242 = vpop.f32.mrf.mxu0
        %v2243 = vadd.f32 %v2154, %v2242
        %v2244 = vpop.f32.mrf.mxu0
        %v2245 = vadd.f32 %v2154, %v2244
        %2246 = vmatmul.bf16.gmra.mxu0 %v2153
        %v2247 = vpop.f32.mrf.mxu0
        %v2248 = vadd.f32 %v2154, %v2247
        %v2249 = vpop.f32.mrf.mxu0
        %v2250 = vadd.f32 %v2154, %v2249
        %2251 = vdwg.mxu0
        %v2252 = vmax.f32 %v2213, 0.0
        %v2253 = vmax.f32 %v2215, 0.0
        %v2254 = vmax.f32 %v2218, 0.0
        %v2255 = vmax.f32 %v2220, 0.0
        %v2256 = vmax.f32 %v2223, 0.0
        %v2257 = vmax.f32 %v2225, 0.0
        %v2258 = vmax.f32 %v2228, 0.0
        %v2259 = vmax.f32 %v2230, 0.0
        %v2260 = vmax.f32 %v2233, 0.0
        %v2261 = vmax.f32 %v2235, 0.0
        %v2262 = vmax.f32 %v2238, 0.0
        %v2263 = vmax.f32 %v2240, 0.0
        %v2264 = vmax.f32 %v2243, 0.0
        %v2265 = vmax.f32 %v2245, 0.0
        %v2266 = vmax.f32 %v2248, 0.0
        %v2267 = vmax.f32 %v2250, 0.0
        %v2268 = vpack.c.bf16 %v2113, %v2112
        %v2269 = vpack.c.bf16 %v2115, %v2114
        %v2270 = vpack.c.bf16 %v2117, %v2116
        %v2271 = vpack.c.bf16 %v2119, %v2118
        %v2272 = vpack.c.bf16 %v2121, %v2120
        %v2273 = vpack.c.bf16 %v2123, %v2122
        %v2274 = vpack.c.bf16 %v2125, %v2124
        %v2275 = vpack.c.bf16 %v2127, %v2126
        %2276 = vmatpush.bf16.msra.mxu0 %v2194
        %2277 = vmatpush.bf16.msra.mxu0 %v2193
        %2278 = vmatpush.bf16.msra.mxu0 %v2192
        %2279 = vmatpush.bf16.msra.mxu0 %v2191
        %2280 = vmatpush.bf16.msra.mxu0 %v2190
        %2281 = vmatpush.bf16.msra.mxu0 %v2189
        %2282 = vmatpush.bf16.msra.mxu0 %v2188
        %2283 = vmatpush.bf16.msra.mxu0 %v2187
        %2284 = vmatmul.bf16.gmra.mxu0 %v2268
        %v2285 = vpop.f32.mrf.mxu0
        %v2286 = vadd.f32 %v2154, %v2285
        %v2287 = vpop.f32.mrf.mxu0
        %v2288 = vadd.f32 %v2154, %v2287
        %2289 = vmatmul.bf16.gmra.mxu0 %v2269
        %v2290 = vpop.f32.mrf.mxu0
        %v2291 = vadd.f32 %v2154, %v2290
        %v2292 = vpop.f32.mrf.mxu0
        %v2293 = vadd.f32 %v2154, %v2292
        %2294 = vmatmul.bf16.gmra.mxu0 %v2270
        %v2295 = vpop.f32.mrf.mxu0
        %v2296 = vadd.f32 %v2154, %v2295
        %v2297 = vpop.f32.mrf.mxu0
        %v2298 = vadd.f32 %v2154, %v2297
        %2299 = vmatmul.bf16.gmra.mxu0 %v2271
        %v2300 = vpop.f32.mrf.mxu0
        %v2301 = vadd.f32 %v2154, %v2300
        %v2302 = vpop.f32.mrf.mxu0
        %v2303 = vadd.f32 %v2154, %v2302
        %2304 = vmatmul.bf16.gmra.mxu0 %v2272
        %v2305 = vpop.f32.mrf.mxu0
        %v2306 = vadd.f32 %v2154, %v2305
        %v2307 = vpop.f32.mrf.mxu0
        %v2308 = vadd.f32 %v2154, %v2307
        %2309 = vmatmul.bf16.gmra.mxu0 %v2273
        %v2310 = vpop.f32.mrf.mxu0
        %v2311 = vadd.f32 %v2154, %v2310
        %v2312 = vpop.f32.mrf.mxu0
        %v2313 = vadd.f32 %v2154, %v2312
        %2314 = vmatmul.bf16.gmra.mxu0 %v2274
        %v2315 = vpop.f32.mrf.mxu0
        %v2316 = vadd.f32 %v2154, %v2315
        %v2317 = vpop.f32.mrf.mxu0
        %v2318 = vadd.f32 %v2154, %v2317
        %2319 = vmatmul.bf16.gmra.mxu0 %v2275
        %v2320 = vpop.f32.mrf.mxu0
        %v2321 = vadd.f32 %v2154, %v2320
        %v2322 = vpop.f32.mrf.mxu0
        %v2323 = vadd.f32 %v2154, %v2322
        %2324 = vdwg.mxu0
        %v2325 = vmax.f32 %v2286, 0.0
        %v2326 = vmax.f32 %v2288, 0.0
        %v2327 = vmax.f32 %v2291, 0.0
        %v2328 = vmax.f32 %v2293, 0.0
        %v2329 = vmax.f32 %v2296, 0.0
        %v2330 = vmax.f32 %v2298, 0.0
        %v2331 = vmax.f32 %v2301, 0.0
        %v2332 = vmax.f32 %v2303, 0.0
        %v2333 = vmax.f32 %v2306, 0.0
        %v2334 = vmax.f32 %v2308, 0.0
        %v2335 = vmax.f32 %v2311, 0.0
        %v2336 = vmax.f32 %v2313, 0.0
        %v2337 = vmax.f32 %v2316, 0.0
        %v2338 = vmax.f32 %v2318, 0.0
        %v2339 = vmax.f32 %v2321, 0.0
        %v2340 = vmax.f32 %v2323, 0.0
        %v2341 = vld [vmem:[%s8] sm:$0xf]
        %v2342 = vld [vmem:[%s8 + $0x4] sm:$0xf]
        %v2343 = vld [vmem:[%s8 + $0x8] sm:$0xf]
        %v2344 = vld [vmem:[%s8 + $0xc] sm:$0xf]
        %v2345 = vld [vmem:[%s8 + $0x10] sm:$0xf]
        %v2346 = vld [vmem:[%s8 + $0x14] sm:$0xf]
        %v2347 = vld [vmem:[%s8 + $0x18] sm:$0xf]
        %v2348 = vld [vmem:[%s8 + $0x1c] sm:$0xf]
        %v2349 = vld [vmem:[%s8 + $0x20] sm:$0xf]
        %v2350 = vld [vmem:[%s8 + $0x24] sm:$0xf]
        %v2351 = vld [vmem:[%s8 + $0x28] sm:$0xf]
        %v2352 = vld [vmem:[%s8 + $0x2c] sm:$0xf]
        %v2353 = vld [vmem:[%s8 + $0x30] sm:$0xf]
        %v2354 = vld [vmem:[%s8 + $0x34] sm:$0xf]
        %v2355 = vld [vmem:[%s8 + $0x38] sm:$0xf]
        %v2356 = vld [vmem:[%s8 + $0x3c] sm:$0xf]
        %v2357 = vld [vmem:[%s20] sm:$0x1]
        %v2358 = vunpack.c.l.bf16 %v2357
        %v2359 = vpack.c.bf16 %v2253, %v2252
        %v2360 = vpack.c.bf16 %v2255, %v2254
        %v2361 = vpack.c.bf16 %v2257, %v2256
        %v2362 = vpack.c.bf16 %v2259, %v2258
        %v2363 = vpack.c.bf16 %v2261, %v2260
        %v2364 = vpack.c.bf16 %v2263, %v2262
        %v2365 = vpack.c.bf16 %v2265, %v2264
        %v2366 = vpack.c.bf16 %v2267, %v2266
        %v2367 = vperm.slane %v2358, 0
        %v2384 = vunpack.c.l.b16 %v2341
        %v2385 = vunpack.c.l.b16 %v2342
        %v2386 = vunpack.c.l.b16 %v2343
        %v2387 = vunpack.c.l.b16 %v2344
        %v2388 = vunpack.c.l.b16 %v2345
        %v2389 = vunpack.c.l.b16 %v2346
        %v2390 = vunpack.c.l.b16 %v2347
        %v2391 = vunpack.c.l.b16 %v2348
        %v2392 = vunpack.c.l.b16 %v2349
        %v2393 = vunpack.c.l.b16 %v2350
        %v2394 = vunpack.c.l.b16 %v2351
        %v2395 = vunpack.c.l.b16 %v2352
        %v2396 = vunpack.c.l.b16 %v2353
        %v2397 = vunpack.c.l.b16 %v2354
        %v2398 = vunpack.c.l.b16 %v2355
        %v2399 = vunpack.c.l.b16 %v2356
        %v2400 = vpack.c.b16 %v2385, %v2384
        %v2401 = vpack.c.b16 %v2387, %v2386
        %v2402 = vpack.c.b16 %v2389, %v2388
        %v2403 = vpack.c.b16 %v2391, %v2390
        %v2404 = vpack.c.b16 %v2393, %v2392
        %v2405 = vpack.c.b16 %v2395, %v2394
        %v2406 = vpack.c.b16 %v2397, %v2396
        %v2407 = vpack.c.b16 %v2399, %v2398
        %2416 = vmatpush.bf16.msra.mxu0 %v2407
        %2417 = vmatpush.bf16.msra.mxu0 %v2406
        %2418 = vmatpush.bf16.msra.mxu0 %v2405
        %2419 = vmatpush.bf16.msra.mxu0 %v2404
        %2420 = vmatpush.bf16.msra.mxu0 %v2403
        %2421 = vmatpush.bf16.msra.mxu0 %v2402
        %2422 = vmatpush.bf16.msra.mxu0 %v2401
        %2423 = vmatpush.bf16.msra.mxu0 %v2400
        %2424 = vmatmul.bf16.gmra.mxu0 %v2359
        %v2425 = vpop.f32.mrf.mxu0
        %v2426 = vadd.f32 %v2367, %v2425
        %v2427 = vpop.f32.mrf.mxu0
        %v2428 = vadd.f32 %v2367, %v2427
        %2429 = vmatmul.bf16.gmra.mxu0 %v2360
        %v2430 = vpop.f32.mrf.mxu0
        %v2431 = vadd.f32 %v2367, %v2430
        %v2432 = vpop.f32.mrf.mxu0
        %v2433 = vadd.f32 %v2367, %v2432
        %2434 = vmatmul.bf16.gmra.mxu0 %v2361
        %v2435 = vpop.f32.mrf.mxu0
        %v2436 = vadd.f32 %v2367, %v2435
        %v2437 = vpop.f32.mrf.mxu0
        %v2438 = vadd.f32 %v2367, %v2437
        %2439 = vmatmul.bf16.gmra.mxu0 %v2362
        %v2440 = vpop.f32.mrf.mxu0
        %v2441 = vadd.f32 %v2367, %v2440
        %v2442 = vpop.f32.mrf.mxu0
        %v2443 = vadd.f32 %v2367, %v2442
        %2444 = vmatmul.bf16.gmra.mxu0 %v2363
        %v2445 = vpop.f32.mrf.mxu0
        %v2446 = vadd.f32 %v2367, %v2445
        %v2447 = vpop.f32.mrf.mxu0
        %v2448 = vadd.f32 %v2367, %v2447
        %2449 = vmatmul.bf16.gmra.mxu0 %v2364
        %v2450 = vpop.f32.mrf.mxu0
        %v2451 = vadd.f32 %v2367, %v2450
        %v2452 = vpop.f32.mrf.mxu0
        %v2453 = vadd.f32 %v2367, %v2452
        %2454 = vmatmul.bf16.gmra.mxu0 %v2365
        %v2455 = vpop.f32.mrf.mxu0
        %v2456 = vadd.f32 %v2367, %v2455
        %v2457 = vpop.f32.mrf.mxu0
        %v2458 = vadd.f32 %v2367, %v2457
        %2459 = vmatmul.bf16.gmra.mxu0 %v2366
        %v2460 = vpop.f32.mrf.mxu0
        %v2461 = vadd.f32 %v2367, %v2460
        %v2462 = vpop.f32.mrf.mxu0
        %v2463 = vadd.f32 %v2367, %v2462
        %2464 = vdwg.mxu0
        %v2465 = vmax.f32 %v2426, 0.0
        %v2466 = vmax.f32 %v2428, 0.0
        %v2467 = vmax.f32 %v2431, 0.0
        %v2468 = vmax.f32 %v2433, 0.0
        %v2469 = vmax.f32 %v2436, 0.0
        %v2470 = vmax.f32 %v2438, 0.0
        %v2471 = vmax.f32 %v2441, 0.0
        %v2472 = vmax.f32 %v2443, 0.0
        %v2473 = vmax.f32 %v2446, 0.0
        %v2474 = vmax.f32 %v2448, 0.0
        %v2475 = vmax.f32 %v2451, 0.0
        %v2476 = vmax.f32 %v2453, 0.0
        %v2477 = vmax.f32 %v2456, 0.0
        %v2478 = vmax.f32 %v2458, 0.0
        %v2479 = vmax.f32 %v2461, 0.0
        %v2480 = vmax.f32 %v2463, 0.0
        %v2481 = vpack.c.bf16 %v2326, %v2325
        %v2482 = vpack.c.bf16 %v2328, %v2327
        %v2483 = vpack.c.bf16 %v2330, %v2329
        %v2484 = vpack.c.bf16 %v2332, %v2331
        %v2485 = vpack.c.bf16 %v2334, %v2333
        %v2486 = vpack.c.bf16 %v2336, %v2335
        %v2487 = vpack.c.bf16 %v2338, %v2337
        %v2488 = vpack.c.bf16 %v2340, %v2339
        %2489 = vmatpush.bf16.msra.mxu0 %v2407
        %2490 = vmatpush.bf16.msra.mxu0 %v2406
        %2491 = vmatpush.bf16.msra.mxu0 %v2405
        %2492 = vmatpush.bf16.msra.mxu0 %v2404
        %2493 = vmatpush.bf16.msra.mxu0 %v2403
        %2494 = vmatpush.bf16.msra.mxu0 %v2402
        %2495 = vmatpush.bf16.msra.mxu0 %v2401
        %2496 = vmatpush.bf16.msra.mxu0 %v2400
        %2497 = vmatmul.bf16.gmra.mxu0 %v2481
        %v2498 = vpop.f32.mrf.mxu0
        %v2499 = vadd.f32 %v2367, %v2498
        %v2500 = vpop.f32.mrf.mxu0
        %v2501 = vadd.f32 %v2367, %v2500
        %2502 = vmatmul.bf16.gmra.mxu0 %v2482
        %v2503 = vpop.f32.mrf.mxu0
        %v2504 = vadd.f32 %v2367, %v2503
        %v2505 = vpop.f32.mrf.mxu0
        %v2506 = vadd.f32 %v2367, %v2505
        %2507 = vmatmul.bf16.gmra.mxu0 %v2483
        %v2508 = vpop.f32.mrf.mxu0
        %v2509 = vadd.f32 %v2367, %v2508
        %v2510 = vpop.f32.mrf.mxu0
        %v2511 = vadd.f32 %v2367, %v2510
        %2512 = vmatmul.bf16.gmra.mxu0 %v2484
        %v2513 = vpop.f32.mrf.mxu0
        %v2514 = vadd.f32 %v2367, %v2513
        %v2515 = vpop.f32.mrf.mxu0
        %v2516 = vadd.f32 %v2367, %v2515
        %2517 = vmatmul.bf16.gmra.mxu0 %v2485
        %v2518 = vpop.f32.mrf.mxu0
        %v2519 = vadd.f32 %v2367, %v2518
        %v2520 = vpop.f32.mrf.mxu0
        %v2521 = vadd.f32 %v2367, %v2520
        %2522 = vmatmul.bf16.gmra.mxu0 %v2486
        %v2523 = vpop.f32.mrf.mxu0
        %v2524 = vadd.f32 %v2367, %v2523
        %v2525 = vpop.f32.mrf.mxu0
        %v2526 = vadd.f32 %v2367, %v2525
        %2527 = vmatmul.bf16.gmra.mxu0 %v2487
        %v2528 = vpop.f32.mrf.mxu0
        %v2529 = vadd.f32 %v2367, %v2528
        %v2530 = vpop.f32.mrf.mxu0
        %v2531 = vadd.f32 %v2367, %v2530
        %2532 = vmatmul.bf16.gmra.mxu0 %v2488
        %v2533 = vpop.f32.mrf.mxu0
        %v2534 = vadd.f32 %v2367, %v2533
        %v2535 = vpop.f32.mrf.mxu0
        %v2536 = vadd.f32 %v2367, %v2535
        %2537 = vdwg.mxu0
        %v2538 = vmax.f32 %v2499, 0.0
        %v2539 = vmax.f32 %v2501, 0.0
        %v2540 = vmax.f32 %v2504, 0.0
        %v2541 = vmax.f32 %v2506, 0.0
        %v2542 = vmax.f32 %v2509, 0.0
        %v2543 = vmax.f32 %v2511, 0.0
        %v2544 = vmax.f32 %v2514, 0.0
        %v2545 = vmax.f32 %v2516, 0.0
        %v2546 = vmax.f32 %v2519, 0.0
        %v2547 = vmax.f32 %v2521, 0.0
        %v2548 = vmax.f32 %v2524, 0.0
        %v2549 = vmax.f32 %v2526, 0.0
        %v2550 = vmax.f32 %v2529, 0.0
        %v2551 = vmax.f32 %v2531, 0.0
        %v2552 = vmax.f32 %v2534, 0.0
        %v2553 = vmax.f32 %v2536, 0.0
        %v2554 = vld [vmem:[%s9] sm:$0xf]
        %v2555 = vld [vmem:[%s9 + $0x4] sm:$0xf]
        %v2556 = vld [vmem:[%s9 + $0x8] sm:$0xf]
        %v2557 = vld [vmem:[%s9 + $0xc] sm:$0xf]
        %v2558 = vld [vmem:[%s9 + $0x10] sm:$0xf]
        %v2559 = vld [vmem:[%s9 + $0x14] sm:$0xf]
        %v2560 = vld [vmem:[%s9 + $0x18] sm:$0xf]
        %v2561 = vld [vmem:[%s9 + $0x1c] sm:$0xf]
        %v2562 = vld [vmem:[%s9 + $0x20] sm:$0xf]
        %v2563 = vld [vmem:[%s9 + $0x24] sm:$0xf]
        %v2564 = vld [vmem:[%s9 + $0x28] sm:$0xf]
        %v2565 = vld [vmem:[%s9 + $0x2c] sm:$0xf]
        %v2566 = vld [vmem:[%s9 + $0x30] sm:$0xf]
        %v2567 = vld [vmem:[%s9 + $0x34] sm:$0xf]
        %v2568 = vld [vmem:[%s9 + $0x38] sm:$0xf]
        %v2569 = vld [vmem:[%s9 + $0x3c] sm:$0xf]
        %v2570 = vld [vmem:[%s21] sm:$0x1]
        %v2571 = vunpack.c.l.bf16 %v2570
        %v2572 = vpack.c.bf16 %v2466, %v2465
        %v2573 = vpack.c.bf16 %v2468, %v2467
        %v2574 = vpack.c.bf16 %v2470, %v2469
        %v2575 = vpack.c.bf16 %v2472, %v2471
        %v2576 = vpack.c.bf16 %v2474, %v2473
        %v2577 = vpack.c.bf16 %v2476, %v2475
        %v2578 = vpack.c.bf16 %v2478, %v2477
        %v2579 = vpack.c.bf16 %v2480, %v2479
        %v2580 = vperm.slane %v2571, 0
        %v2597 = vunpack.c.l.b16 %v2554
        %v2598 = vunpack.c.l.b16 %v2555
        %v2599 = vunpack.c.l.b16 %v2556
        %v2600 = vunpack.c.l.b16 %v2557
        %v2601 = vunpack.c.l.b16 %v2558
        %v2602 = vunpack.c.l.b16 %v2559
        %v2603 = vunpack.c.l.b16 %v2560
        %v2604 = vunpack.c.l.b16 %v2561
        %v2605 = vunpack.c.l.b16 %v2562
        %v2606 = vunpack.c.l.b16 %v2563
        %v2607 = vunpack.c.l.b16 %v2564
        %v2608 = vunpack.c.l.b16 %v2565
        %v2609 = vunpack.c.l.b16 %v2566
        %v2610 = vunpack.c.l.b16 %v2567
        %v2611 = vunpack.c.l.b16 %v2568
        %v2612 = vunpack.c.l.b16 %v2569
        %v2613 = vpack.c.b16 %v2598, %v2597
        %v2614 = vpack.c.b16 %v2600, %v2599
        %v2615 = vpack.c.b16 %v2602, %v2601
        %v2616 = vpack.c.b16 %v2604, %v2603
        %v2617 = vpack.c.b16 %v2606, %v2605
        %v2618 = vpack.c.b16 %v2608, %v2607
        %v2619 = vpack.c.b16 %v2610, %v2609
        %v2620 = vpack.c.b16 %v2612, %v2611
        %2629 = vmatpush.bf16.msra.mxu0 %v2620
        %2630 = vmatpush.bf16.msra.mxu0 %v2619
        %2631 = vmatpush.bf16.msra.mxu0 %v2618
        %2632 = vmatpush.bf16.msra.mxu0 %v2617
        %2633 = vmatpush.bf16.msra.mxu0 %v2616
        %2634 = vmatpush.bf16.msra.mxu0 %v2615
        %2635 = vmatpush.bf16.msra.mxu0 %v2614
        %2636 = vmatpush.bf16.msra.mxu0 %v2613
        %2637 = vmatmul.bf16.gmra.mxu0 %v2572
        %v2638 = vpop.f32.mrf.mxu0
        %v2639 = vadd.f32 %v2580, %v2638
        %v2640 = vpop.f32.mrf.mxu0
        %v2641 = vadd.f32 %v2580, %v2640
        %2642 = vmatmul.bf16.gmra.mxu0 %v2573
        %v2643 = vpop.f32.mrf.mxu0
        %v2644 = vadd.f32 %v2580, %v2643
        %v2645 = vpop.f32.mrf.mxu0
        %v2646 = vadd.f32 %v2580, %v2645
        %2647 = vmatmul.bf16.gmra.mxu0 %v2574
        %v2648 = vpop.f32.mrf.mxu0
        %v2649 = vadd.f32 %v2580, %v2648
        %v2650 = vpop.f32.mrf.mxu0
        %v2651 = vadd.f32 %v2580, %v2650
        %2652 = vmatmul.bf16.gmra.mxu0 %v2575
        %v2653 = vpop.f32.mrf.mxu0
        %v2654 = vadd.f32 %v2580, %v2653
        %v2655 = vpop.f32.mrf.mxu0
        %v2656 = vadd.f32 %v2580, %v2655
        %2657 = vmatmul.bf16.gmra.mxu0 %v2576
        %v2658 = vpop.f32.mrf.mxu0
        %v2659 = vadd.f32 %v2580, %v2658
        %v2660 = vpop.f32.mrf.mxu0
        %v2661 = vadd.f32 %v2580, %v2660
        %2662 = vmatmul.bf16.gmra.mxu0 %v2577
        %v2663 = vpop.f32.mrf.mxu0
        %v2664 = vadd.f32 %v2580, %v2663
        %v2665 = vpop.f32.mrf.mxu0
        %v2666 = vadd.f32 %v2580, %v2665
        %2667 = vmatmul.bf16.gmra.mxu0 %v2578
        %v2668 = vpop.f32.mrf.mxu0
        %v2669 = vadd.f32 %v2580, %v2668
        %v2670 = vpop.f32.mrf.mxu0
        %v2671 = vadd.f32 %v2580, %v2670
        %2672 = vmatmul.bf16.gmra.mxu0 %v2579
        %v2673 = vpop.f32.mrf.mxu0
        %v2674 = vadd.f32 %v2580, %v2673
        %v2675 = vpop.f32.mrf.mxu0
        %v2676 = vadd.f32 %v2580, %v2675
        %2677 = vdwg.mxu0
        %v2678 = vmax.f32 %v2639, 0.0
        %v2679 = vmax.f32 %v2641, 0.0
        %v2680 = vmax.f32 %v2644, 0.0
        %v2681 = vmax.f32 %v2646, 0.0
        %v2682 = vmax.f32 %v2649, 0.0
        %v2683 = vmax.f32 %v2651, 0.0
        %v2684 = vmax.f32 %v2654, 0.0
        %v2685 = vmax.f32 %v2656, 0.0
        %v2686 = vmax.f32 %v2659, 0.0
        %v2687 = vmax.f32 %v2661, 0.0
        %v2688 = vmax.f32 %v2664, 0.0
        %v2689 = vmax.f32 %v2666, 0.0
        %v2690 = vmax.f32 %v2669, 0.0
        %v2691 = vmax.f32 %v2671, 0.0
        %v2692 = vmax.f32 %v2674, 0.0
        %v2693 = vmax.f32 %v2676, 0.0
        %v2694 = vpack.c.bf16 %v2539, %v2538
        %v2695 = vpack.c.bf16 %v2541, %v2540
        %v2696 = vpack.c.bf16 %v2543, %v2542
        %v2697 = vpack.c.bf16 %v2545, %v2544
        %v2698 = vpack.c.bf16 %v2547, %v2546
        %v2699 = vpack.c.bf16 %v2549, %v2548
        %v2700 = vpack.c.bf16 %v2551, %v2550
        %v2701 = vpack.c.bf16 %v2553, %v2552
        %2702 = vmatpush.bf16.msra.mxu0 %v2620
        %2703 = vmatpush.bf16.msra.mxu0 %v2619
        %2704 = vmatpush.bf16.msra.mxu0 %v2618
        %2705 = vmatpush.bf16.msra.mxu0 %v2617
        %2706 = vmatpush.bf16.msra.mxu0 %v2616
        %2707 = vmatpush.bf16.msra.mxu0 %v2615
        %2708 = vmatpush.bf16.msra.mxu0 %v2614
        %2709 = vmatpush.bf16.msra.mxu0 %v2613
        %2710 = vmatmul.bf16.gmra.mxu0 %v2694
        %v2711 = vpop.f32.mrf.mxu0
        %v2712 = vadd.f32 %v2580, %v2711
        %v2713 = vpop.f32.mrf.mxu0
        %v2714 = vadd.f32 %v2580, %v2713
        %2715 = vmatmul.bf16.gmra.mxu0 %v2695
        %v2716 = vpop.f32.mrf.mxu0
        %v2717 = vadd.f32 %v2580, %v2716
        %v2718 = vpop.f32.mrf.mxu0
        %v2719 = vadd.f32 %v2580, %v2718
        %2720 = vmatmul.bf16.gmra.mxu0 %v2696
        %v2721 = vpop.f32.mrf.mxu0
        %v2722 = vadd.f32 %v2580, %v2721
        %v2723 = vpop.f32.mrf.mxu0
        %v2724 = vadd.f32 %v2580, %v2723
        %2725 = vmatmul.bf16.gmra.mxu0 %v2697
        %v2726 = vpop.f32.mrf.mxu0
        %v2727 = vadd.f32 %v2580, %v2726
        %v2728 = vpop.f32.mrf.mxu0
        %v2729 = vadd.f32 %v2580, %v2728
        %2730 = vmatmul.bf16.gmra.mxu0 %v2698
        %v2731 = vpop.f32.mrf.mxu0
        %v2732 = vadd.f32 %v2580, %v2731
        %v2733 = vpop.f32.mrf.mxu0
        %v2734 = vadd.f32 %v2580, %v2733
        %2735 = vmatmul.bf16.gmra.mxu0 %v2699
        %v2736 = vpop.f32.mrf.mxu0
        %v2737 = vadd.f32 %v2580, %v2736
        %v2738 = vpop.f32.mrf.mxu0
        %v2739 = vadd.f32 %v2580, %v2738
        %2740 = vmatmul.bf16.gmra.mxu0 %v2700
        %v2741 = vpop.f32.mrf.mxu0
        %v2742 = vadd.f32 %v2580, %v2741
        %v2743 = vpop.f32.mrf.mxu0
        %v2744 = vadd.f32 %v2580, %v2743
        %2745 = vmatmul.bf16.gmra.mxu0 %v2701
        %v2746 = vpop.f32.mrf.mxu0
        %v2747 = vadd.f32 %v2580, %v2746
        %v2748 = vpop.f32.mrf.mxu0
        %v2749 = vadd.f32 %v2580, %v2748
        %2750 = vdwg.mxu0
        %v2751 = vmax.f32 %v2712, 0.0
        %v2752 = vmax.f32 %v2714, 0.0
        %v2753 = vmax.f32 %v2717, 0.0
        %v2754 = vmax.f32 %v2719, 0.0
        %v2755 = vmax.f32 %v2722, 0.0
        %v2756 = vmax.f32 %v2724, 0.0
        %v2757 = vmax.f32 %v2727, 0.0
        %v2758 = vmax.f32 %v2729, 0.0
        %v2759 = vmax.f32 %v2732, 0.0
        %v2760 = vmax.f32 %v2734, 0.0
        %v2761 = vmax.f32 %v2737, 0.0
        %v2762 = vmax.f32 %v2739, 0.0
        %v2763 = vmax.f32 %v2742, 0.0
        %v2764 = vmax.f32 %v2744, 0.0
        %v2765 = vmax.f32 %v2747, 0.0
        %v2766 = vmax.f32 %v2749, 0.0
        %v2767 = vld [vmem:[%s10] sm:$0xf]
        %v2768 = vld [vmem:[%s10 + $0x4] sm:$0xf]
        %v2769 = vld [vmem:[%s10 + $0x8] sm:$0xf]
        %v2770 = vld [vmem:[%s10 + $0xc] sm:$0xf]
        %v2771 = vld [vmem:[%s10 + $0x10] sm:$0xf]
        %v2772 = vld [vmem:[%s10 + $0x14] sm:$0xf]
        %v2773 = vld [vmem:[%s10 + $0x18] sm:$0xf]
        %v2774 = vld [vmem:[%s10 + $0x1c] sm:$0xf]
        %v2775 = vld [vmem:[%s10 + $0x20] sm:$0xf]
        %v2776 = vld [vmem:[%s10 + $0x24] sm:$0xf]
        %v2777 = vld [vmem:[%s10 + $0x28] sm:$0xf]
        %v2778 = vld [vmem:[%s10 + $0x2c] sm:$0xf]
        %v2779 = vld [vmem:[%s10 + $0x30] sm:$0xf]
        %v2780 = vld [vmem:[%s10 + $0x34] sm:$0xf]
        %v2781 = vld [vmem:[%s10 + $0x38] sm:$0xf]
        %v2782 = vld [vmem:[%s10 + $0x3c] sm:$0xf]
        %v2783 = vld [vmem:[%s22] sm:$0x1]
        %v2784 = vunpack.c.l.bf16 %v2783
        %v2785 = vpack.c.bf16 %v2679, %v2678
        %v2786 = vpack.c.bf16 %v2681, %v2680
        %v2787 = vpack.c.bf16 %v2683, %v2682
        %v2788 = vpack.c.bf16 %v2685, %v2684
        %v2789 = vpack.c.bf16 %v2687, %v2686
        %v2790 = vpack.c.bf16 %v2689, %v2688
        %v2791 = vpack.c.bf16 %v2691, %v2690
        %v2792 = vpack.c.bf16 %v2693, %v2692
        %v2793 = vperm.slane %v2784, 0
        %v2810 = vunpack.c.l.b16 %v2767
        %v2811 = vunpack.c.l.b16 %v2768
        %v2812 = vunpack.c.l.b16 %v2769
        %v2813 = vunpack.c.l.b16 %v2770
        %v2814 = vunpack.c.l.b16 %v2771
        %v2815 = vunpack.c.l.b16 %v2772
        %v2816 = vunpack.c.l.b16 %v2773
        %v2817 = vunpack.c.l.b16 %v2774
        %v2818 = vunpack.c.l.b16 %v2775
        %v2819 = vunpack.c.l.b16 %v2776
        %v2820 = vunpack.c.l.b16 %v2777
        %v2821 = vunpack.c.l.b16 %v2778
        %v2822 = vunpack.c.l.b16 %v2779
        %v2823 = vunpack.c.l.b16 %v2780
        %v2824 = vunpack.c.l.b16 %v2781
        %v2825 = vunpack.c.l.b16 %v2782
        %v2826 = vpack.c.b16 %v2811, %v2810
        %v2827 = vpack.c.b16 %v2813, %v2812
        %v2828 = vpack.c.b16 %v2815, %v2814
        %v2829 = vpack.c.b16 %v2817, %v2816
        %v2830 = vpack.c.b16 %v2819, %v2818
        %v2831 = vpack.c.b16 %v2821, %v2820
        %v2832 = vpack.c.b16 %v2823, %v2822
        %v2833 = vpack.c.b16 %v2825, %v2824
        %2842 = vmatpush.bf16.msra.mxu0 %v2833
        %2843 = vmatpush.bf16.msra.mxu0 %v2832
        %2844 = vmatpush.bf16.msra.mxu0 %v2831
        %2845 = vmatpush.bf16.msra.mxu0 %v2830
        %2846 = vmatpush.bf16.msra.mxu0 %v2829
        %2847 = vmatpush.bf16.msra.mxu0 %v2828
        %2848 = vmatpush.bf16.msra.mxu0 %v2827
        %2849 = vmatpush.bf16.msra.mxu0 %v2826
        %2850 = vmatmul.bf16.gmra.mxu0 %v2785
        %v2851 = vpop.f32.mrf.mxu0
        %v2852 = vadd.f32 %v2793, %v2851
        %v2853 = vpop.f32.mrf.mxu0
        %v2854 = vadd.f32 %v2793, %v2853
        %2855 = vmatmul.bf16.gmra.mxu0 %v2786
        %v2856 = vpop.f32.mrf.mxu0
        %v2857 = vadd.f32 %v2793, %v2856
        %v2858 = vpop.f32.mrf.mxu0
        %v2859 = vadd.f32 %v2793, %v2858
        %2860 = vmatmul.bf16.gmra.mxu0 %v2787
        %v2861 = vpop.f32.mrf.mxu0
        %v2862 = vadd.f32 %v2793, %v2861
        %v2863 = vpop.f32.mrf.mxu0
        %v2864 = vadd.f32 %v2793, %v2863
        %2865 = vmatmul.bf16.gmra.mxu0 %v2788
        %v2866 = vpop.f32.mrf.mxu0
        %v2867 = vadd.f32 %v2793, %v2866
        %v2868 = vpop.f32.mrf.mxu0
        %v2869 = vadd.f32 %v2793, %v2868
        %2870 = vmatmul.bf16.gmra.mxu0 %v2789
        %v2871 = vpop.f32.mrf.mxu0
        %v2872 = vadd.f32 %v2793, %v2871
        %v2873 = vpop.f32.mrf.mxu0
        %v2874 = vadd.f32 %v2793, %v2873
        %2875 = vmatmul.bf16.gmra.mxu0 %v2790
        %v2876 = vpop.f32.mrf.mxu0
        %v2877 = vadd.f32 %v2793, %v2876
        %v2878 = vpop.f32.mrf.mxu0
        %v2879 = vadd.f32 %v2793, %v2878
        %2880 = vmatmul.bf16.gmra.mxu0 %v2791
        %v2881 = vpop.f32.mrf.mxu0
        %v2882 = vadd.f32 %v2793, %v2881
        %v2883 = vpop.f32.mrf.mxu0
        %v2884 = vadd.f32 %v2793, %v2883
        %2885 = vmatmul.bf16.gmra.mxu0 %v2792
        %v2886 = vpop.f32.mrf.mxu0
        %v2887 = vadd.f32 %v2793, %v2886
        %v2888 = vpop.f32.mrf.mxu0
        %v2889 = vadd.f32 %v2793, %v2888
        %2890 = vdwg.mxu0
        %v2891 = vmax.f32 %v2852, 0.0
        %v2892 = vmax.f32 %v2854, 0.0
        %v2893 = vmax.f32 %v2857, 0.0
        %v2894 = vmax.f32 %v2859, 0.0
        %v2895 = vmax.f32 %v2862, 0.0
        %v2896 = vmax.f32 %v2864, 0.0
        %v2897 = vmax.f32 %v2867, 0.0
        %v2898 = vmax.f32 %v2869, 0.0
        %v2899 = vmax.f32 %v2872, 0.0
        %v2900 = vmax.f32 %v2874, 0.0
        %v2901 = vmax.f32 %v2877, 0.0
        %v2902 = vmax.f32 %v2879, 0.0
        %v2903 = vmax.f32 %v2882, 0.0
        %v2904 = vmax.f32 %v2884, 0.0
        %v2905 = vmax.f32 %v2887, 0.0
        %v2906 = vmax.f32 %v2889, 0.0
        %v2907 = vpack.c.bf16 %v2752, %v2751
        %v2908 = vpack.c.bf16 %v2754, %v2753
        %v2909 = vpack.c.bf16 %v2756, %v2755
        %v2910 = vpack.c.bf16 %v2758, %v2757
        %v2911 = vpack.c.bf16 %v2760, %v2759
        %v2912 = vpack.c.bf16 %v2762, %v2761
        %v2913 = vpack.c.bf16 %v2764, %v2763
        %v2914 = vpack.c.bf16 %v2766, %v2765
        %2915 = vmatpush.bf16.msra.mxu0 %v2833
        %2916 = vmatpush.bf16.msra.mxu0 %v2832
        %2917 = vmatpush.bf16.msra.mxu0 %v2831
        %2918 = vmatpush.bf16.msra.mxu0 %v2830
        %2919 = vmatpush.bf16.msra.mxu0 %v2829
        %2920 = vmatpush.bf16.msra.mxu0 %v2828
        %2921 = vmatpush.bf16.msra.mxu0 %v2827
        %2922 = vmatpush.bf16.msra.mxu0 %v2826
        %2923 = vmatmul.bf16.gmra.mxu0 %v2907
        %v2924 = vpop.f32.mrf.mxu0
        %v2925 = vadd.f32 %v2793, %v2924
        %v2926 = vpop.f32.mrf.mxu0
        %v2927 = vadd.f32 %v2793, %v2926
        %2928 = vmatmul.bf16.gmra.mxu0 %v2908
        %v2929 = vpop.f32.mrf.mxu0
        %v2930 = vadd.f32 %v2793, %v2929
        %v2931 = vpop.f32.mrf.mxu0
        %v2932 = vadd.f32 %v2793, %v2931
        %2933 = vmatmul.bf16.gmra.mxu0 %v2909
        %v2934 = vpop.f32.mrf.mxu0
        %v2935 = vadd.f32 %v2793, %v2934
        %v2936 = vpop.f32.mrf.mxu0
        %v2937 = vadd.f32 %v2793, %v2936
        %2938 = vmatmul.bf16.gmra.mxu0 %v2910
        %v2939 = vpop.f32.mrf.mxu0
        %v2940 = vadd.f32 %v2793, %v2939
        %v2941 = vpop.f32.mrf.mxu0
        %v2942 = vadd.f32 %v2793, %v2941
        %2943 = vmatmul.bf16.gmra.mxu0 %v2911
        %v2944 = vpop.f32.mrf.mxu0
        %v2945 = vadd.f32 %v2793, %v2944
        %v2946 = vpop.f32.mrf.mxu0
        %v2947 = vadd.f32 %v2793, %v2946
        %2948 = vmatmul.bf16.gmra.mxu0 %v2912
        %v2949 = vpop.f32.mrf.mxu0
        %v2950 = vadd.f32 %v2793, %v2949
        %v2951 = vpop.f32.mrf.mxu0
        %v2952 = vadd.f32 %v2793, %v2951
        %2953 = vmatmul.bf16.gmra.mxu0 %v2913
        %v2954 = vpop.f32.mrf.mxu0
        %v2955 = vadd.f32 %v2793, %v2954
        %v2956 = vpop.f32.mrf.mxu0
        %v2957 = vadd.f32 %v2793, %v2956
        %2958 = vmatmul.bf16.gmra.mxu0 %v2914
        %v2959 = vpop.f32.mrf.mxu0
        %v2960 = vadd.f32 %v2793, %v2959
        %v2961 = vpop.f32.mrf.mxu0
        %v2962 = vadd.f32 %v2793, %v2961
        %2963 = vdwg.mxu0
        %v2964 = vmax.f32 %v2925, 0.0
        %v2965 = vmax.f32 %v2927, 0.0
        %v2966 = vmax.f32 %v2930, 0.0
        %v2967 = vmax.f32 %v2932, 0.0
        %v2968 = vmax.f32 %v2935, 0.0
        %v2969 = vmax.f32 %v2937, 0.0
        %v2970 = vmax.f32 %v2940, 0.0
        %v2971 = vmax.f32 %v2942, 0.0
        %v2972 = vmax.f32 %v2945, 0.0
        %v2973 = vmax.f32 %v2947, 0.0
        %v2974 = vmax.f32 %v2950, 0.0
        %v2975 = vmax.f32 %v2952, 0.0
        %v2976 = vmax.f32 %v2955, 0.0
        %v2977 = vmax.f32 %v2957, 0.0
        %v2978 = vmax.f32 %v2960, 0.0
        %v2979 = vmax.f32 %v2962, 0.0
        %v2980 = vld [vmem:[%s11] sm:$0xf]
        %v2981 = vld [vmem:[%s11 + $0x4] sm:$0xf]
        %v2982 = vld [vmem:[%s11 + $0x8] sm:$0xf]
        %v2983 = vld [vmem:[%s11 + $0xc] sm:$0xf]
        %v2984 = vld [vmem:[%s11 + $0x10] sm:$0xf]
        %v2985 = vld [vmem:[%s11 + $0x14] sm:$0xf]
        %v2986 = vld [vmem:[%s11 + $0x18] sm:$0xf]
        %v2987 = vld [vmem:[%s11 + $0x1c] sm:$0xf]
        %v2988 = vld [vmem:[%s11 + $0x20] sm:$0xf]
        %v2989 = vld [vmem:[%s11 + $0x24] sm:$0xf]
        %v2990 = vld [vmem:[%s11 + $0x28] sm:$0xf]
        %v2991 = vld [vmem:[%s11 + $0x2c] sm:$0xf]
        %v2992 = vld [vmem:[%s11 + $0x30] sm:$0xf]
        %v2993 = vld [vmem:[%s11 + $0x34] sm:$0xf]
        %v2994 = vld [vmem:[%s11 + $0x38] sm:$0xf]
        %v2995 = vld [vmem:[%s11 + $0x3c] sm:$0xf]
        %v2996 = vld [vmem:[%s23] sm:$0x1]
        %v2997 = vunpack.c.l.bf16 %v2996
        %v2998 = vpack.c.bf16 %v2892, %v2891
        %v2999 = vpack.c.bf16 %v2894, %v2893
        %v3000 = vpack.c.bf16 %v2896, %v2895
        %v3001 = vpack.c.bf16 %v2898, %v2897
        %v3002 = vpack.c.bf16 %v2900, %v2899
        %v3003 = vpack.c.bf16 %v2902, %v2901
        %v3004 = vpack.c.bf16 %v2904, %v2903
        %v3005 = vpack.c.bf16 %v2906, %v2905
        %v3006 = vperm.slane %v2997, 0
        %v3023 = vunpack.c.l.b16 %v2980
        %v3024 = vunpack.c.l.b16 %v2981
        %v3025 = vunpack.c.l.b16 %v2982
        %v3026 = vunpack.c.l.b16 %v2983
        %v3027 = vunpack.c.l.b16 %v2984
        %v3028 = vunpack.c.l.b16 %v2985
        %v3029 = vunpack.c.l.b16 %v2986
        %v3030 = vunpack.c.l.b16 %v2987
        %v3031 = vunpack.c.l.b16 %v2988
        %v3032 = vunpack.c.l.b16 %v2989
        %v3033 = vunpack.c.l.b16 %v2990
        %v3034 = vunpack.c.l.b16 %v2991
        %v3035 = vunpack.c.l.b16 %v2992
        %v3036 = vunpack.c.l.b16 %v2993
        %v3037 = vunpack.c.l.b16 %v2994
        %v3038 = vunpack.c.l.b16 %v2995
        %v3039 = vpack.c.b16 %v3024, %v3023
        %v3040 = vpack.c.b16 %v3026, %v3025
        %v3041 = vpack.c.b16 %v3028, %v3027
        %v3042 = vpack.c.b16 %v3030, %v3029
        %v3043 = vpack.c.b16 %v3032, %v3031
        %v3044 = vpack.c.b16 %v3034, %v3033
        %v3045 = vpack.c.b16 %v3036, %v3035
        %v3046 = vpack.c.b16 %v3038, %v3037
        %3055 = vmatpush.bf16.msra.mxu0 %v3046
        %3056 = vmatpush.bf16.msra.mxu0 %v3045
        %3057 = vmatpush.bf16.msra.mxu0 %v3044
        %3058 = vmatpush.bf16.msra.mxu0 %v3043
        %3059 = vmatpush.bf16.msra.mxu0 %v3042
        %3060 = vmatpush.bf16.msra.mxu0 %v3041
        %3061 = vmatpush.bf16.msra.mxu0 %v3040
        %3062 = vmatpush.bf16.msra.mxu0 %v3039
        %3063 = vmatmul.bf16.gmra.mxu0 %v2998
        %v3064 = vpop.f32.mrf.mxu0
        %v3065 = vadd.f32 %v3006, %v3064
        %v3066 = vpop.f32.mrf.mxu0
        %v3067 = vadd.f32 %v3006, %v3066
        %3068 = vmatmul.bf16.gmra.mxu0 %v2999
        %v3069 = vpop.f32.mrf.mxu0
        %v3070 = vadd.f32 %v3006, %v3069
        %v3071 = vpop.f32.mrf.mxu0
        %v3072 = vadd.f32 %v3006, %v3071
        %3073 = vmatmul.bf16.gmra.mxu0 %v3000
        %v3074 = vpop.f32.mrf.mxu0
        %v3075 = vadd.f32 %v3006, %v3074
        %v3076 = vpop.f32.mrf.mxu0
        %v3077 = vadd.f32 %v3006, %v3076
        %3078 = vmatmul.bf16.gmra.mxu0 %v3001
        %v3079 = vpop.f32.mrf.mxu0
        %v3080 = vadd.f32 %v3006, %v3079
        %v3081 = vpop.f32.mrf.mxu0
        %v3082 = vadd.f32 %v3006, %v3081
        %3083 = vmatmul.bf16.gmra.mxu0 %v3002
        %v3084 = vpop.f32.mrf.mxu0
        %v3085 = vadd.f32 %v3006, %v3084
        %v3086 = vpop.f32.mrf.mxu0
        %v3087 = vadd.f32 %v3006, %v3086
        %3088 = vmatmul.bf16.gmra.mxu0 %v3003
        %v3089 = vpop.f32.mrf.mxu0
        %v3090 = vadd.f32 %v3006, %v3089
        %v3091 = vpop.f32.mrf.mxu0
        %v3092 = vadd.f32 %v3006, %v3091
        %3093 = vmatmul.bf16.gmra.mxu0 %v3004
        %v3094 = vpop.f32.mrf.mxu0
        %v3095 = vadd.f32 %v3006, %v3094
        %v3096 = vpop.f32.mrf.mxu0
        %v3097 = vadd.f32 %v3006, %v3096
        %3098 = vmatmul.bf16.gmra.mxu0 %v3005
        %v3099 = vpop.f32.mrf.mxu0
        %v3100 = vadd.f32 %v3006, %v3099
        %v3101 = vpop.f32.mrf.mxu0
        %v3102 = vadd.f32 %v3006, %v3101
        %3103 = vdwg.mxu0
        %v3104 = vmax.f32 %v3065, 0.0
        %v3105 = vmax.f32 %v3067, 0.0
        %v3106 = vmax.f32 %v3070, 0.0
        %v3107 = vmax.f32 %v3072, 0.0
        %v3108 = vmax.f32 %v3075, 0.0
        %v3109 = vmax.f32 %v3077, 0.0
        %v3110 = vmax.f32 %v3080, 0.0
        %v3111 = vmax.f32 %v3082, 0.0
        %v3112 = vmax.f32 %v3085, 0.0
        %v3113 = vmax.f32 %v3087, 0.0
        %v3114 = vmax.f32 %v3090, 0.0
        %v3115 = vmax.f32 %v3092, 0.0
        %v3116 = vmax.f32 %v3095, 0.0
        %v3117 = vmax.f32 %v3097, 0.0
        %v3118 = vmax.f32 %v3100, 0.0
        %v3119 = vmax.f32 %v3102, 0.0
        %v3120 = vpack.c.bf16 %v2965, %v2964
        %v3121 = vpack.c.bf16 %v2967, %v2966
        %v3122 = vpack.c.bf16 %v2969, %v2968
        %v3123 = vpack.c.bf16 %v2971, %v2970
        %v3124 = vpack.c.bf16 %v2973, %v2972
        %v3125 = vpack.c.bf16 %v2975, %v2974
        %v3126 = vpack.c.bf16 %v2977, %v2976
        %v3127 = vpack.c.bf16 %v2979, %v2978
        %3128 = vmatpush.bf16.msra.mxu0 %v3046
        %3129 = vmatpush.bf16.msra.mxu0 %v3045
        %3130 = vmatpush.bf16.msra.mxu0 %v3044
        %3131 = vmatpush.bf16.msra.mxu0 %v3043
        %3132 = vmatpush.bf16.msra.mxu0 %v3042
        %3133 = vmatpush.bf16.msra.mxu0 %v3041
        %3134 = vmatpush.bf16.msra.mxu0 %v3040
        %3135 = vmatpush.bf16.msra.mxu0 %v3039
        %3136 = vmatmul.bf16.gmra.mxu0 %v3120
        %v3137 = vpop.f32.mrf.mxu0
        %v3138 = vadd.f32 %v3006, %v3137
        %v3139 = vpop.f32.mrf.mxu0
        %v3140 = vadd.f32 %v3006, %v3139
        %3141 = vmatmul.bf16.gmra.mxu0 %v3121
        %v3142 = vpop.f32.mrf.mxu0
        %v3143 = vadd.f32 %v3006, %v3142
        %v3144 = vpop.f32.mrf.mxu0
        %v3145 = vadd.f32 %v3006, %v3144
        %3146 = vmatmul.bf16.gmra.mxu0 %v3122
        %v3147 = vpop.f32.mrf.mxu0
        %v3148 = vadd.f32 %v3006, %v3147
        %v3149 = vpop.f32.mrf.mxu0
        %v3150 = vadd.f32 %v3006, %v3149
        %3151 = vmatmul.bf16.gmra.mxu0 %v3123
        %v3152 = vpop.f32.mrf.mxu0
        %v3153 = vadd.f32 %v3006, %v3152
        %v3154 = vpop.f32.mrf.mxu0
        %v3155 = vadd.f32 %v3006, %v3154
        %3156 = vmatmul.bf16.gmra.mxu0 %v3124
        %v3157 = vpop.f32.mrf.mxu0
        %v3158 = vadd.f32 %v3006, %v3157
        %v3159 = vpop.f32.mrf.mxu0
        %v3160 = vadd.f32 %v3006, %v3159
        %3161 = vmatmul.bf16.gmra.mxu0 %v3125
        %v3162 = vpop.f32.mrf.mxu0
        %v3163 = vadd.f32 %v3006, %v3162
        %v3164 = vpop.f32.mrf.mxu0
        %v3165 = vadd.f32 %v3006, %v3164
        %3166 = vmatmul.bf16.gmra.mxu0 %v3126
        %v3167 = vpop.f32.mrf.mxu0
        %v3168 = vadd.f32 %v3006, %v3167
        %v3169 = vpop.f32.mrf.mxu0
        %v3170 = vadd.f32 %v3006, %v3169
        %3171 = vmatmul.bf16.gmra.mxu0 %v3127
        %v3172 = vpop.f32.mrf.mxu0
        %v3173 = vadd.f32 %v3006, %v3172
        %v3174 = vpop.f32.mrf.mxu0
        %v3175 = vadd.f32 %v3006, %v3174
        %3176 = vdwg.mxu0
        %v3177 = vmax.f32 %v3138, 0.0
        %v3178 = vmax.f32 %v3140, 0.0
        %v3179 = vmax.f32 %v3143, 0.0
        %v3180 = vmax.f32 %v3145, 0.0
        %v3181 = vmax.f32 %v3148, 0.0
        %v3182 = vmax.f32 %v3150, 0.0
        %v3183 = vmax.f32 %v3153, 0.0
        %v3184 = vmax.f32 %v3155, 0.0
        %v3185 = vmax.f32 %v3158, 0.0
        %v3186 = vmax.f32 %v3160, 0.0
        %v3187 = vmax.f32 %v3163, 0.0
        %v3188 = vmax.f32 %v3165, 0.0
        %v3189 = vmax.f32 %v3168, 0.0
        %v3190 = vmax.f32 %v3170, 0.0
        %v3191 = vmax.f32 %v3173, 0.0
        %v3192 = vmax.f32 %v3175, 0.0
        %v3193 = vld [vmem:[%s12] sm:$0xf]
        %v3194 = vld [vmem:[%s12 + $0x4] sm:$0xf]
        %v3195 = vld [vmem:[%s12 + $0x8] sm:$0xf]
        %v3196 = vld [vmem:[%s12 + $0xc] sm:$0xf]
        %v3197 = vld [vmem:[%s12 + $0x10] sm:$0xf]
        %v3198 = vld [vmem:[%s12 + $0x14] sm:$0xf]
        %v3199 = vld [vmem:[%s12 + $0x18] sm:$0xf]
        %v3200 = vld [vmem:[%s12 + $0x1c] sm:$0xf]
        %v3201 = vld [vmem:[%s12 + $0x20] sm:$0xf]
        %v3202 = vld [vmem:[%s12 + $0x24] sm:$0xf]
        %v3203 = vld [vmem:[%s12 + $0x28] sm:$0xf]
        %v3204 = vld [vmem:[%s12 + $0x2c] sm:$0xf]
        %v3205 = vld [vmem:[%s12 + $0x30] sm:$0xf]
        %v3206 = vld [vmem:[%s12 + $0x34] sm:$0xf]
        %v3207 = vld [vmem:[%s12 + $0x38] sm:$0xf]
        %v3208 = vld [vmem:[%s12 + $0x3c] sm:$0xf]
        %v3209 = vld [vmem:[%s24] sm:$0x1]
        %v3210 = vunpack.c.l.bf16 %v3209
        %v3211 = vpack.c.bf16 %v3105, %v3104
        %v3212 = vpack.c.bf16 %v3107, %v3106
        %v3213 = vpack.c.bf16 %v3109, %v3108
        %v3214 = vpack.c.bf16 %v3111, %v3110
        %v3215 = vpack.c.bf16 %v3113, %v3112
        %v3216 = vpack.c.bf16 %v3115, %v3114
        %v3217 = vpack.c.bf16 %v3117, %v3116
        %v3218 = vpack.c.bf16 %v3119, %v3118
        %v3219 = vperm.slane %v3210, 0
        %v3236 = vunpack.c.l.b16 %v3193
        %v3237 = vunpack.c.l.b16 %v3194
        %v3238 = vunpack.c.l.b16 %v3195
        %v3239 = vunpack.c.l.b16 %v3196
        %v3240 = vunpack.c.l.b16 %v3197
        %v3241 = vunpack.c.l.b16 %v3198
        %v3242 = vunpack.c.l.b16 %v3199
        %v3243 = vunpack.c.l.b16 %v3200
        %v3244 = vunpack.c.l.b16 %v3201
        %v3245 = vunpack.c.l.b16 %v3202
        %v3246 = vunpack.c.l.b16 %v3203
        %v3247 = vunpack.c.l.b16 %v3204
        %v3248 = vunpack.c.l.b16 %v3205
        %v3249 = vunpack.c.l.b16 %v3206
        %v3250 = vunpack.c.l.b16 %v3207
        %v3251 = vunpack.c.l.b16 %v3208
        %v3252 = vpack.c.b16 %v3237, %v3236
        %v3253 = vpack.c.b16 %v3239, %v3238
        %v3254 = vpack.c.b16 %v3241, %v3240
        %v3255 = vpack.c.b16 %v3243, %v3242
        %v3256 = vpack.c.b16 %v3245, %v3244
        %v3257 = vpack.c.b16 %v3247, %v3246
        %v3258 = vpack.c.b16 %v3249, %v3248
        %v3259 = vpack.c.b16 %v3251, %v3250
        %3268 = vmatpush.bf16.msra.mxu0 %v3259
        %3269 = vmatpush.bf16.msra.mxu0 %v3258
        %3270 = vmatpush.bf16.msra.mxu0 %v3257
        %3271 = vmatpush.bf16.msra.mxu0 %v3256
        %3272 = vmatpush.bf16.msra.mxu0 %v3255
        %3273 = vmatpush.bf16.msra.mxu0 %v3254
        %3274 = vmatpush.bf16.msra.mxu0 %v3253
        %3275 = vmatpush.bf16.msra.mxu0 %v3252
        %3276 = vmatmul.bf16.gmra.mxu0 %v3211
        %v3277 = vpop.f32.mrf.mxu0
        %v3278 = vadd.f32 %v3219, %v3277
        %v3279 = vpop.f32.mrf.mxu0
        %v3280 = vadd.f32 %v3219, %v3279
        %3281 = vmatmul.bf16.gmra.mxu0 %v3212
        %v3282 = vpop.f32.mrf.mxu0
        %v3283 = vadd.f32 %v3219, %v3282
        %v3284 = vpop.f32.mrf.mxu0
        %v3285 = vadd.f32 %v3219, %v3284
        %3286 = vmatmul.bf16.gmra.mxu0 %v3213
        %v3287 = vpop.f32.mrf.mxu0
        %v3288 = vadd.f32 %v3219, %v3287
        %v3289 = vpop.f32.mrf.mxu0
        %v3290 = vadd.f32 %v3219, %v3289
        %3291 = vmatmul.bf16.gmra.mxu0 %v3214
        %v3292 = vpop.f32.mrf.mxu0
        %v3293 = vadd.f32 %v3219, %v3292
        %v3294 = vpop.f32.mrf.mxu0
        %v3295 = vadd.f32 %v3219, %v3294
        %3296 = vmatmul.bf16.gmra.mxu0 %v3215
        %v3297 = vpop.f32.mrf.mxu0
        %v3298 = vadd.f32 %v3219, %v3297
        %v3299 = vpop.f32.mrf.mxu0
        %v3300 = vadd.f32 %v3219, %v3299
        %3301 = vmatmul.bf16.gmra.mxu0 %v3216
        %v3302 = vpop.f32.mrf.mxu0
        %v3303 = vadd.f32 %v3219, %v3302
        %v3304 = vpop.f32.mrf.mxu0
        %v3305 = vadd.f32 %v3219, %v3304
        %3306 = vmatmul.bf16.gmra.mxu0 %v3217
        %v3307 = vpop.f32.mrf.mxu0
        %v3308 = vadd.f32 %v3219, %v3307
        %v3309 = vpop.f32.mrf.mxu0
        %v3310 = vadd.f32 %v3219, %v3309
        %3311 = vmatmul.bf16.gmra.mxu0 %v3218
        %v3312 = vpop.f32.mrf.mxu0
        %v3313 = vadd.f32 %v3219, %v3312
        %v3314 = vpop.f32.mrf.mxu0
        %v3315 = vadd.f32 %v3219, %v3314
        %3316 = vdwg.mxu0
        %v3317 = vpack.c.bf16 %v3178, %v3177
        %v3318 = vpack.c.bf16 %v3180, %v3179
        %v3319 = vpack.c.bf16 %v3182, %v3181
        %v3320 = vpack.c.bf16 %v3184, %v3183
        %v3321 = vpack.c.bf16 %v3186, %v3185
        %v3322 = vpack.c.bf16 %v3188, %v3187
        %v3323 = vpack.c.bf16 %v3190, %v3189
        %v3324 = vpack.c.bf16 %v3192, %v3191
        %3325 = vmatpush.bf16.msra.mxu0 %v3259
        %3326 = vmatpush.bf16.msra.mxu0 %v3258
        %3327 = vmatpush.bf16.msra.mxu0 %v3257
        %3328 = vmatpush.bf16.msra.mxu0 %v3256
        %3329 = vmatpush.bf16.msra.mxu0 %v3255
        %3330 = vmatpush.bf16.msra.mxu0 %v3254
        %3331 = vmatpush.bf16.msra.mxu0 %v3253
        %3332 = vmatpush.bf16.msra.mxu0 %v3252
        %3333 = vmatmul.bf16.gmra.mxu0 %v3317
        %v3334 = vpop.f32.mrf.mxu0
        %v3335 = vadd.f32 %v3219, %v3334
        %v3336 = vpop.f32.mrf.mxu0
        %v3337 = vadd.f32 %v3219, %v3336
        %3338 = vmatmul.bf16.gmra.mxu0 %v3318
        %v3339 = vpop.f32.mrf.mxu0
        %v3340 = vadd.f32 %v3219, %v3339
        %v3341 = vpop.f32.mrf.mxu0
        %v3342 = vadd.f32 %v3219, %v3341
        %3343 = vmatmul.bf16.gmra.mxu0 %v3319
        %v3344 = vpop.f32.mrf.mxu0
        %v3345 = vadd.f32 %v3219, %v3344
        %v3346 = vpop.f32.mrf.mxu0
        %v3347 = vadd.f32 %v3219, %v3346
        %3348 = vmatmul.bf16.gmra.mxu0 %v3320
        %v3349 = vpop.f32.mrf.mxu0
        %v3350 = vadd.f32 %v3219, %v3349
        %v3351 = vpop.f32.mrf.mxu0
        %v3352 = vadd.f32 %v3219, %v3351
        %3353 = vmatmul.bf16.gmra.mxu0 %v3321
        %v3354 = vpop.f32.mrf.mxu0
        %v3355 = vadd.f32 %v3219, %v3354
        %v3356 = vpop.f32.mrf.mxu0
        %v3357 = vadd.f32 %v3219, %v3356
        %3358 = vmatmul.bf16.gmra.mxu0 %v3322
        %v3359 = vpop.f32.mrf.mxu0
        %v3360 = vadd.f32 %v3219, %v3359
        %v3361 = vpop.f32.mrf.mxu0
        %v3362 = vadd.f32 %v3219, %v3361
        %3363 = vmatmul.bf16.gmra.mxu0 %v3323
        %v3364 = vpop.f32.mrf.mxu0
        %v3365 = vadd.f32 %v3219, %v3364
        %v3366 = vpop.f32.mrf.mxu0
        %v3367 = vadd.f32 %v3219, %v3366
        %3368 = vmatmul.bf16.gmra.mxu0 %v3324
        %v3369 = vpop.f32.mrf.mxu0
        %v3370 = vadd.f32 %v3219, %v3369
        %v3371 = vpop.f32.mrf.mxu0
        %v3372 = vadd.f32 %v3219, %v3371
        %3373 = vdwg.mxu0
        %3374 = vst [vmem:[%s814] sm:$0xff] %v3278
        %3375 = vst [vmem:[%s814 + $0x8] sm:$0xff] %v3280
        %3376 = vst [vmem:[%s814 + $0x10] sm:$0xff] %v3283
        %3377 = vst [vmem:[%s814 + $0x18] sm:$0xff] %v3285
        %3378 = vst [vmem:[%s814 + $0x20] sm:$0xff] %v3288
        %3379 = vst [vmem:[%s814 + $0x28] sm:$0xff] %v3290
        %3380 = vst [vmem:[%s814 + $0x30] sm:$0xff] %v3293
        %3381 = vst [vmem:[%s814 + $0x38] sm:$0xff] %v3295
        %3382 = vst [vmem:[%s814 + $0x40] sm:$0xff] %v3298
        %3383 = vst [vmem:[%s814 + $0x48] sm:$0xff] %v3300
        %3384 = vst [vmem:[%s814 + $0x50] sm:$0xff] %v3303
        %3385 = vst [vmem:[%s814 + $0x58] sm:$0xff] %v3305
        %3386 = vst [vmem:[%s814 + $0x60] sm:$0xff] %v3308
        %3387 = vst [vmem:[%s814 + $0x68] sm:$0xff] %v3310
        %3388 = vst [vmem:[%s814 + $0x70] sm:$0xff] %v3313
        %3389 = vst [vmem:[%s814 + $0x78] sm:$0xff] %v3315
        %3390 = vst [vmem:[%s814 + $0x80] sm:$0xff] %v3335
        %3391 = vst [vmem:[%s814 + $0x88] sm:$0xff] %v3337
        %3392 = vst [vmem:[%s814 + $0x90] sm:$0xff] %v3340
        %3393 = vst [vmem:[%s814 + $0x98] sm:$0xff] %v3342
        %3394 = vst [vmem:[%s814 + $0xa0] sm:$0xff] %v3345
        %3395 = vst [vmem:[%s814 + $0xa8] sm:$0xff] %v3347
        %3396 = vst [vmem:[%s814 + $0xb0] sm:$0xff] %v3350
        %3397 = vst [vmem:[%s814 + $0xb8] sm:$0xff] %v3352
        %3398 = vst [vmem:[%s814 + $0xc0] sm:$0xff] %v3355
        %3399 = vst [vmem:[%s814 + $0xc8] sm:$0xff] %v3357
        %3400 = vst [vmem:[%s814 + $0xd0] sm:$0xff] %v3360
        %3401 = vst [vmem:[%s814 + $0xd8] sm:$0xff] %v3362
        %3402 = vst [vmem:[%s814 + $0xe0] sm:$0xff] %v3365
        %3403 = vst [vmem:[%s814 + $0xe8] sm:$0xff] %v3367
        %3404 = vst [vmem:[%s814 + $0xf0] sm:$0xff] %v3370
        %3405 = vst [vmem:[%s814 + $0xf8] sm:$0xff] %v3372
        %s3406 = smul.u32 32, %s38
        %p3407 = scmp.lt.s32.totalorder %s3406, 63
        %s3408 = scalar_select %p3407, %s3406, 63
        %s3409 = smul.addr %s3408, 8
        %s3410 = scalar_lea.vmem %s25, %s3409
        // Predicated region
        $region133: #{_lambda_.1} parent=119 // pred_check
          %p3411 = pneg %p586
        $region134: #{_lambda_.1} parent=119 // pred_check_branch
          %3413 = sbr.rel (%p3411) target = $region136
        $region135: #{_lambda_.1} parent=119 // pred_region
          %s3414 = smul.u32 32, %s38
        $region136: #{_lambda_.1} parent=119 // pred_fallthru
          _
      $region120: #{_lambda_.1} parent=5 // pred_fallthru
        _
      %p3415 = scmp.le.s32.totalorder 2, %s33
      // Predicated region
      $region137: #{_lambda_.1} parent=5 // pred_check
        %p3416 = pneg %p3415
      $region138: #{_lambda_.1} parent=5 // pred_check_branch
        %3418 = sbr.rel (%p3416) target = $region140
      $region139: #{_lambda_.1} parent=5 // pred_region
        %s3419 = ssub.s32 %s33, 2
        // Predicated region
        $region141: #{_lambda_.1} parent=139 // pred_check
          %p3420 = pneg %p592
        $region142: #{_lambda_.1} parent=139 // pred_check_branch
          %3422 = sbr.rel (%p3420) target = $region144
        $region143: #{_lambda_.1} parent=139 // pred_region
          %s3423 = smul.u32 32, %s39
          %p3424 = scmp.lt.s32.totalorder %s3423, 63
          %s3425 = scalar_select %p3424, %s3423, 63
          %s3426 = smul.addr %s3425, 8
          %s3427 = scalar_lea.vmem %s25, %s3426
        $region144: #{_lambda_.1} parent=139 // pred_fallthru
          _
      $region140: #{_lambda_.1} parent=5 // pred_fallthru
        _
    $region6: #{_lambda_.1} parent=1 // loop_footer
      %s37 = sadd.s32 1, %s33
    $region7: #{_lambda_.1} parent=1 // loop_footer_branch
      %32 = sbr.rel target = $region3
    $region8: #{_lambda_.1} parent=1 // loop_exit
      _
    %3428 = vsyncpa [#allocation3], 1
    %s3429 = scalar_lea.sflag [#allocation3], 1
    %3430 = vsyncpa %s3429, 1
    %3431 = vsyncpa [#allocation5], 1

</llo_original>
